<compile_context>
chip_gen: v7x
topology: tpu7x:2x2x1
jax: 0.10.0
libtpu: 0.0.40
codegen_flags: <defaults>
</compile_context>

<pallas_src>
import math

import jax
import jax.numpy as jnp
import numpy as np
from jax.experimental import pallas as pl
from jax.experimental.pallas import tpu as pltpu

# ------------------------- small, module-consistent shapes ----------------------
B, S, D = 2, 8, 32          # batch, seq_len, dim_model
NUM_HEADS = 4
DK = max(D // NUM_HEADS, 1)  # dim_q = dim_k per head
DFF = 64                     # dim_feedforward
NUM_LAYERS = 2
LN_EPS = 1e-5

PARAM_ORDER = ["wq", "bq", "wk", "bk", "wv", "bv", "wo", "bo",
               "g1", "be1", "w1", "bf1", "w2", "bf2", "g2", "be2"]


# ----------------------------------- kernel --------------------------------------
def _layernorm(y, gamma, beta):
    mu = jnp.mean(y, axis=-1, keepdims=True)
    var = jnp.mean((y - mu) ** 2, axis=-1, keepdims=True)
    return (y - mu) * jax.lax.rsqrt(var + LN_EPS) * gamma + beta


def fused_encoder_kernel(x_ref, pe_ref,
                         wq_ref, bq_ref, wk_ref, bk_ref, wv_ref, bv_ref,
                         wo_ref, bo_ref, g1_ref, be1_ref,
                         w1_ref, bf1_ref, w2_ref, bf2_ref, g2_ref, be2_ref,
                         o_ref):
    # Position-encoding add folded into the fused kernel (no standalone pallas_call).
    x = x_ref[0] + pe_ref[...]                                   # (S, D)
    scale = 1.0 / math.sqrt(DK)

    for l in range(NUM_LAYERS):                                  # static unroll over layers
        # ---------------- multi-head attention, heads batched on a leading axis --------
        # xb: (H, S, D); weights are head-major (H, D, DK) so everything below is a
        # leading-batch dot_general — no lane-dim slicing / reshape / concatenate.
        xb = jnp.broadcast_to(x, (NUM_HEADS, S, D))
        q = jnp.einsum('hsd,hdk->hsk', xb, wq_ref[l],
                       preferred_element_type=jnp.float32) + bq_ref[l]   # (H, S, DK)
        k = jnp.einsum('hsd,hdk->hsk', xb, wk_ref[l],
                       preferred_element_type=jnp.float32) + bk_ref[l]
        v = jnp.einsum('hsd,hdk->hsk', xb, wv_ref[l],
                       preferred_element_type=jnp.float32) + bv_ref[l]

        s = jnp.einsum('hqd,hkd->hqk', q, k,
                       preferred_element_type=jnp.float32) * scale       # (H, S, S)
        s = s - jnp.max(s, axis=-1, keepdims=True)
        p = jnp.exp(s)
        p = p * pl.reciprocal(jnp.sum(p, axis=-1, keepdims=True), approx=True)
        ctx = jnp.einsum('hqk,hkd->hqd', p, v,
                         preferred_element_type=jnp.float32)             # (H, S, DK)

        # Output projection: concat-over-heads @ Wo  ==  sum_h ctx_h @ Wo_h
        attn = jnp.sum(
            jnp.einsum('hsd,hde->hse', ctx, wo_ref[l],
                       preferred_element_type=jnp.float32),
            axis=0) + bo_ref[l]                                          # (S, D)

        # Residual wrapper #1: LayerNorm(x + dropout(attn)); dropout = identity
        y = _layernorm(x + attn, g1_ref[l], be1_ref[l])

        # Feed-forward: Linear -> ReLU -> Linear
        h1 = jnp.maximum(
            jnp.dot(y, w1_ref[l], preferred_element_type=jnp.float32) + bf1_ref[l], 0.0)
        ff = jnp.dot(h1, w2_ref[l], preferred_element_type=jnp.float32) + bf2_ref[l]

        # Residual wrapper #2
        x = _layernorm(y + ff, g2_ref[l], be2_ref[l])

    o_ref[0] = x


# ----------------------------------- wrappers -------------------------------------
def position_encoding(seq_len, dim_model):
    pos = jnp.arange(seq_len, dtype=jnp.float32).reshape(-1, 1)
    dim = jnp.arange(dim_model, dtype=jnp.float32).reshape(1, -1)
    phase = pos / (1e4 ** (dim / dim_model))
    even = (jnp.arange(dim_model).reshape(1, -1) % 2) == 0
    return jnp.where(even, jnp.sin(phase), jnp.cos(phase))  # (S, D)


def _full_spec(shape):
    n = len(shape)
    return pl.BlockSpec(shape, lambda b, _n=n: (0,) * _n)   # grid-invariant weight tile


def _stack_head_major(all_params):
    """Host-side layout plumbing: head-major per-head weights + leading layer axis."""
    def per_layer(p):
        return {
            "wq": p["wq"].reshape(D, NUM_HEADS, DK).transpose(1, 0, 2),   # (H, D, DK)
            "wk": p["wk"].reshape(D, NUM_HEADS, DK).transpose(1, 0, 2),
            "wv": p["wv"].reshape(D, NUM_HEADS, DK).transpose(1, 0, 2),
            "bq": p["bq"].reshape(NUM_HEADS, 1, DK),                      # (H, 1, DK)
            "bk": p["bk"].reshape(NUM_HEADS, 1, DK),
            "bv": p["bv"].reshape(NUM_HEADS, 1, DK),
            "wo": p["wo"].reshape(NUM_HEADS, DK, D),                      # (H, DK, D)
            "bo": p["bo"], "g1": p["g1"], "be1": p["be1"],
            "w1": p["w1"], "bf1": p["bf1"], "w2": p["w2"], "bf2": p["bf2"],
            "g2": p["g2"], "be2": p["be2"],
        }
    per = [per_layer(p) for p in all_params]
    return {k: jnp.stack([lp[k] for lp in per], axis=0) for k in PARAM_ORDER}


@jax.jit
def transformer_encoder(x, all_params):
    pe = position_encoding(S, D)
    stacked = _stack_head_major(all_params)
    plist = [stacked[k] for k in PARAM_ORDER]

    in_specs = ([pl.BlockSpec((1, S, D), lambda b: (b, 0, 0)),
                 pl.BlockSpec((S, D), lambda b: (0, 0))] +
                [_full_spec(p.shape) for p in plist])

    return pl.pallas_call(
        fused_encoder_kernel,
        out_shape=jax.ShapeDtypeStruct((B, S, D), jnp.float32),
        grid_spec=pltpu.PrefetchScalarGridSpec(
            num_scalar_prefetch=0, grid=(B,),
            in_specs=in_specs,
            out_specs=pl.BlockSpec((1, S, D), lambda b: (b, 0, 0))),
        compiler_params=pltpu.CompilerParams(
            dimension_semantics=("parallel",)),   # B=2 -> both TCs on v7x
    )(x, pe, *plist)


# ------------------------------- params / reference --------------------------------
def init_params(key):
    def w(k, shape, scale=0.05):
        return (scale * jax.random.normal(k, shape)).astype(jnp.float32)

    layers = []
    for l in range(NUM_LAYERS):
        ks = jax.random.split(jax.random.fold_in(key, l), 12)
        layers.append({
            "wq": w(ks[0], (D, NUM_HEADS * DK)), "bq": w(ks[1], (1, NUM_HEADS * DK)),
            "wk": w(ks[2], (D, NUM_HEADS * DK)), "bk": w(ks[3], (1, NUM_HEADS * DK)),
            "wv": w(ks[4], (D, NUM_HEADS * DK)), "bv": w(ks[5], (1, NUM_HEADS * DK)),
            "wo": w(ks[6], (NUM_HEADS * DK, D)), "bo": w(ks[7], (1, D)),
            "g1": jnp.ones((1, D), jnp.float32), "be1": jnp.zeros((1, D), jnp.float32),
            "w1": w(ks[8], (D, DFF)), "bf1": w(ks[9], (1, DFF)),
            "w2": w(ks[10], (DFF, D)), "bf2": w(ks[11], (1, D)),
            "g2": jnp.ones((1, D), jnp.float32), "be2": jnp.zeros((1, D), jnp.float32),
        })
    return layers


def reference(x, all_params):
    def ln(y, g, b):
        mu = jnp.mean(y, axis=-1, keepdims=True)
        var = jnp.mean((y - mu) ** 2, axis=-1, keepdims=True)
        return (y - mu) / jnp.sqrt(var + LN_EPS) * g + b

    x = x + position_encoding(S, D)[None]
    for p in all_params:
        q = jnp.einsum("bsd,de->bse", x, p["wq"]) + p["bq"]
        k = jnp.einsum("bsd,de->bse", x, p["wk"]) + p["bk"]
        v = jnp.einsum("bsd,de->bse", x, p["wv"]) + p["bv"]
        outs = []
        for h in range(NUM_HEADS):
            sl = slice(h * DK, (h + 1) * DK)
            s = jnp.einsum("bqe,bke->bqk", q[..., sl], k[..., sl]) / math.sqrt(DK)
            a = jax.nn.softmax(s, axis=-1)
            outs.append(jnp.einsum("bqk,bke->bqe", a, v[..., sl]))
        attn = jnp.concatenate(outs, axis=-1) @ p["wo"] + p["bo"]
        y = ln(x + attn, p["g1"], p["be1"])
        ff = jnp.maximum(y @ p["w1"] + p["bf1"], 0.0) @ p["w2"] + p["bf2"]
        x = ln(y + ff, p["g2"], p["be2"])
    return x


# ------------------------------------- main ----------------------------------------
if __name__ == "__main__":
    key = jax.random.PRNGKey(0)
    x = jax.random.normal(jax.random.fold_in(key, 999), (B, S, D), dtype=jnp.float32)
    params = init_params(key)

    out = jax.block_until_ready(transformer_encoder(x, params))
    ref = reference(x, params)

    assert out.shape == (B, S, D) and out.dtype == jnp.float32
    # slightly looser tolerance than before because the softmax denominator now uses
    # the EUP approximate reciprocal (pl.reciprocal(..., approx=True)).
    np.testing.assert_allclose(np.asarray(out), np.asarray(ref), rtol=2e-3, atol=2e-3)
    print("KERNEL_OK")
</pallas_src>

<mosaic_0001>
module attributes {stable_mosaic.version = 11 : i64} {
  func.func @fused_encoder_kernel(%arg0: i32, %arg1: memref<1x8x32xf32, #tpu.memory_space<vmem>>, %arg2: memref<8x32xf32, #tpu.memory_space<vmem>>, %arg3: memref<2x4x32x8xf32, #tpu.memory_space<vmem>>, %arg4: memref<2x4x1x8xf32, #tpu.memory_space<vmem>>, %arg5: memref<2x4x32x8xf32, #tpu.memory_space<vmem>>, %arg6: memref<2x4x1x8xf32, #tpu.memory_space<vmem>>, %arg7: memref<2x4x32x8xf32, #tpu.memory_space<vmem>>, %arg8: memref<2x4x1x8xf32, #tpu.memory_space<vmem>>, %arg9: memref<2x4x8x32xf32, #tpu.memory_space<vmem>>, %arg10: memref<2x1x32xf32, #tpu.memory_space<vmem>>, %arg11: memref<2x1x32xf32, #tpu.memory_space<vmem>>, %arg12: memref<2x1x32xf32, #tpu.memory_space<vmem>>, %arg13: memref<2x32x64xf32, #tpu.memory_space<vmem>>, %arg14: memref<2x1x64xf32, #tpu.memory_space<vmem>>, %arg15: memref<2x64x32xf32, #tpu.memory_space<vmem>>, %arg16: memref<2x1x32xf32, #tpu.memory_space<vmem>>, %arg17: memref<2x1x32xf32, #tpu.memory_space<vmem>>, %arg18: memref<2x1x32xf32, #tpu.memory_space<vmem>>, %arg19: memref<1x8x32xf32, #tpu.memory_space<vmem>>) attributes {dimension_semantics = [#tpu.dimension_semantics<parallel>], iteration_bounds = array<i64: 2>, scalar_prefetch = 0 : i64, scratch_operands = 0 : i64, tpu.core_type = #tpu.core_type<tc>, window_params = [{transform_indices = @transform_0, window_bounds = array<i64: 1, 8, 32>}, {pipeline_mode = #tpu.pipeline_mode<synchronous>, transform_indices = @transform_1, window_bounds = array<i64: 8, 32>}, {pipeline_mode = #tpu.pipeline_mode<synchronous>, transform_indices = @transform_2, window_bounds = array<i64: 2, 4, 32, 8>}, {pipeline_mode = #tpu.pipeline_mode<synchronous>, transform_indices = @transform_3, window_bounds = array<i64: 2, 4, 1, 8>}, {pipeline_mode = #tpu.pipeline_mode<synchronous>, transform_indices = @transform_4, window_bounds = array<i64: 2, 4, 32, 8>}, {pipeline_mode = #tpu.pipeline_mode<synchronous>, transform_indices = @transform_5, window_bounds = array<i64: 2, 4, 1, 8>}, {pipeline_mode = #tpu.pipeline_mode<synchronous>, transform_indices = @transform_6, window_bounds = array<i64: 2, 4, 32, 8>}, {pipeline_mode = #tpu.pipeline_mode<synchronous>, transform_indices = @transform_7, window_bounds = array<i64: 2, 4, 1, 8>}, {pipeline_mode = #tpu.pipeline_mode<synchronous>, transform_indices = @transform_8, window_bounds = array<i64: 2, 4, 8, 32>}, {pipeline_mode = #tpu.pipeline_mode<synchronous>, transform_indices = @transform_9, window_bounds = array<i64: 2, 1, 32>}, {pipeline_mode = #tpu.pipeline_mode<synchronous>, transform_indices = @transform_10, window_bounds = array<i64: 2, 1, 32>}, {pipeline_mode = #tpu.pipeline_mode<synchronous>, transform_indices = @transform_11, window_bounds = array<i64: 2, 1, 32>}, {pipeline_mode = #tpu.pipeline_mode<synchronous>, transform_indices = @transform_12, window_bounds = array<i64: 2, 32, 64>}, {pipeline_mode = #tpu.pipeline_mode<synchronous>, transform_indices = @transform_13, window_bounds = array<i64: 2, 1, 64>}, {pipeline_mode = #tpu.pipeline_mode<synchronous>, transform_indices = @transform_14, window_bounds = array<i64: 2, 64, 32>}, {pipeline_mode = #tpu.pipeline_mode<synchronous>, transform_indices = @transform_15, window_bounds = array<i64: 2, 1, 32>}, {pipeline_mode = #tpu.pipeline_mode<synchronous>, transform_indices = @transform_16, window_bounds = array<i64: 2, 1, 32>}, {pipeline_mode = #tpu.pipeline_mode<synchronous>, transform_indices = @transform_17, window_bounds = array<i64: 2, 1, 32>}, {transform_indices = @transform_18, window_bounds = array<i64: 1, 8, 32>}]} {
    %c0 = arith.constant 0 : index
    %c0_0 = arith.constant 0 : index
    %c0_1 = arith.constant 0 : index
    %0 = vector.load %arg1[%c0, %c0_0, %c0_1] : memref<1x8x32xf32, #tpu.memory_space<vmem>>, vector<1x8x32xf32>
    %1 = vector.shape_cast %0 : vector<1x8x32xf32> to vector<8x32xf32>
    %c0_2 = arith.constant 0 : index
    %c0_3 = arith.constant 0 : index
    %2 = vector.load %arg2[%c0_2, %c0_3] : memref<8x32xf32, #tpu.memory_space<vmem>>, vector<8x32xf32>
    %3 = arith.addf %1, %2 : vector<8x32xf32>
    %4 = vector.shape_cast %3 : vector<8x32xf32> to vector<1x8x32xf32>
    %5 = vector.broadcast %4 : vector<1x8x32xf32> to vector<4x8x32xf32>
    %c0_4 = arith.constant 0 : index
    %c0_5 = arith.constant 0 : index
    %c0_6 = arith.constant 0 : index
    %c0_7 = arith.constant 0 : index
    %6 = vector.load %arg3[%c0_4, %c0_5, %c0_6, %c0_7] : memref<2x4x32x8xf32, #tpu.memory_space<vmem>>, vector<1x4x32x8xf32>
    %7 = vector.shape_cast %6 : vector<1x4x32x8xf32> to vector<4x32x8xf32>
    "tpu.trace_start"() <{level = 10 : i32, message = "hsd,hdk->hsk"}> : () -> ()
    %cst = arith.constant dense<0.000000e+00> : vector<4x8x8xf32>
    %8 = tpu.matmul %5, %7, %cst {dimension_numbers = #tpu.dot_dimension_numbers<[2], [1], [1], [2], [0, 0, 0, 1, 1, 2], [0], [0]>} : vector<4x8x32xf32>, vector<4x32x8xf32>, vector<4x8x8xf32> -> vector<4x8x8xf32>
    "tpu.trace_stop"() : () -> ()
    %c0_8 = arith.constant 0 : index
    %c0_9 = arith.constant 0 : index
    %c0_10 = arith.constant 0 : index
    %c0_11 = arith.constant 0 : index
    %9 = vector.load %arg4[%c0_8, %c0_9, %c0_10, %c0_11] : memref<2x4x1x8xf32, #tpu.memory_space<vmem>>, vector<1x4x1x8xf32>
    %10 = vector.shape_cast %9 : vector<1x4x1x8xf32> to vector<4x1x8xf32>
    %11 = vector.broadcast %10 : vector<4x1x8xf32> to vector<4x8x8xf32>
    %12 = arith.addf %8, %11 : vector<4x8x8xf32>
    %c0_12 = arith.constant 0 : index
    %c0_13 = arith.constant 0 : index
    %c0_14 = arith.constant 0 : index
    %c0_15 = arith.constant 0 : index
    %13 = vector.load %arg5[%c0_12, %c0_13, %c0_14, %c0_15] : memref<2x4x32x8xf32, #tpu.memory_space<vmem>>, vector<1x4x32x8xf32>
    %14 = vector.shape_cast %13 : vector<1x4x32x8xf32> to vector<4x32x8xf32>
    "tpu.trace_start"() <{level = 10 : i32, message = "hsd,hdk->hsk"}> : () -> ()
    %cst_16 = arith.constant dense<0.000000e+00> : vector<4x8x8xf32>
    %15 = tpu.matmul %5, %14, %cst_16 {dimension_numbers = #tpu.dot_dimension_numbers<[2], [1], [1], [2], [0, 0, 0, 1, 1, 2], [0], [0]>} : vector<4x8x32xf32>, vector<4x32x8xf32>, vector<4x8x8xf32> -> vector<4x8x8xf32>
    "tpu.trace_stop"() : () -> ()
    %c0_17 = arith.constant 0 : index
    %c0_18 = arith.constant 0 : index
    %c0_19 = arith.constant 0 : index
    %c0_20 = arith.constant 0 : index
    %16 = vector.load %arg6[%c0_17, %c0_18, %c0_19, %c0_20] : memref<2x4x1x8xf32, #tpu.memory_space<vmem>>, vector<1x4x1x8xf32>
    %17 = vector.shape_cast %16 : vector<1x4x1x8xf32> to vector<4x1x8xf32>
    %18 = vector.broadcast %17 : vector<4x1x8xf32> to vector<4x8x8xf32>
    %19 = arith.addf %15, %18 : vector<4x8x8xf32>
    %c0_21 = arith.constant 0 : index
    %c0_22 = arith.constant 0 : index
    %c0_23 = arith.constant 0 : index
    %c0_24 = arith.constant 0 : index
    %20 = vector.load %arg7[%c0_21, %c0_22, %c0_23, %c0_24] : memref<2x4x32x8xf32, #tpu.memory_space<vmem>>, vector<1x4x32x8xf32>
    %21 = vector.shape_cast %20 : vector<1x4x32x8xf32> to vector<4x32x8xf32>
    "tpu.trace_start"() <{level = 10 : i32, message = "hsd,hdk->hsk"}> : () -> ()
    %cst_25 = arith.constant dense<0.000000e+00> : vector<4x8x8xf32>
    %22 = tpu.matmul %5, %21, %cst_25 {dimension_numbers = #tpu.dot_dimension_numbers<[2], [1], [1], [2], [0, 0, 0, 1, 1, 2], [0], [0]>} : vector<4x8x32xf32>, vector<4x32x8xf32>, vector<4x8x8xf32> -> vector<4x8x8xf32>
    "tpu.trace_stop"() : () -> ()
    %c0_26 = arith.constant 0 : index
    %c0_27 = arith.constant 0 : index
    %c0_28 = arith.constant 0 : index
    %c0_29 = arith.constant 0 : index
    %23 = vector.load %arg8[%c0_26, %c0_27, %c0_28, %c0_29] : memref<2x4x1x8xf32, #tpu.memory_space<vmem>>, vector<1x4x1x8xf32>
    %24 = vector.shape_cast %23 : vector<1x4x1x8xf32> to vector<4x1x8xf32>
    %25 = vector.broadcast %24 : vector<4x1x8xf32> to vector<4x8x8xf32>
    %26 = arith.addf %22, %25 : vector<4x8x8xf32>
    "tpu.trace_start"() <{level = 10 : i32, message = "hqd,hkd->hqk"}> : () -> ()
    %cst_30 = arith.constant dense<0.000000e+00> : vector<4x8x8xf32>
    %27 = tpu.matmul %12, %19, %cst_30 {dimension_numbers = #tpu.dot_dimension_numbers<[2], [2], [1], [1], [0, 0, 0, 1, 1, 1], [0], [0]>} : vector<4x8x8xf32>, vector<4x8x8xf32>, vector<4x8x8xf32> -> vector<4x8x8xf32>
    "tpu.trace_stop"() : () -> ()
    %cst_31 = arith.constant 0.353553385 : f32
    %28 = vector.broadcast %cst_31 : f32 to vector<4x8x8xf32>
    %29 = arith.mulf %27, %28 : vector<4x8x8xf32>
    %cst_32 = arith.constant dense<0xFF800000> : vector<4x8xf32>
    %30 = vector.multi_reduction <maximumf>, %29, %cst_32 [2] : vector<4x8x8xf32> to vector<4x8xf32>
    %31 = vector.shape_cast %30 : vector<4x8xf32> to vector<4x8x1xf32>
    %32 = vector.broadcast %31 : vector<4x8x1xf32> to vector<4x8x8xf32>
    %33 = arith.subf %29, %32 : vector<4x8x8xf32>
    %34 = math.exp %33 : vector<4x8x8xf32>
    %cst_33 = arith.constant dense<0.000000e+00> : vector<4x8xf32>
    %35 = vector.multi_reduction <add>, %34, %cst_33 [2] : vector<4x8x8xf32> to vector<4x8xf32>
    %36 = vector.shape_cast %35 : vector<4x8xf32> to vector<4x8x1xf32>
    %37 = tpu.reciprocal %36 {approx = true} : vector<4x8x1xf32> -> vector<4x8x1xf32>
    %38 = vector.broadcast %37 : vector<4x8x1xf32> to vector<4x8x8xf32>
    %39 = arith.mulf %34, %38 : vector<4x8x8xf32>
    "tpu.trace_start"() <{level = 10 : i32, message = "hqk,hkd->hqd"}> : () -> ()
    %cst_34 = arith.constant dense<0.000000e+00> : vector<4x8x8xf32>
    %40 = tpu.matmul %39, %26, %cst_34 {dimension_numbers = #tpu.dot_dimension_numbers<[2], [1], [1], [2], [0, 0, 0, 1, 1, 2], [0], [0]>} : vector<4x8x8xf32>, vector<4x8x8xf32>, vector<4x8x8xf32> -> vector<4x8x8xf32>
    "tpu.trace_stop"() : () -> ()
    %c0_35 = arith.constant 0 : index
    %c0_36 = arith.constant 0 : index
    %c0_37 = arith.constant 0 : index
    %c0_38 = arith.constant 0 : index
    %41 = vector.load %arg9[%c0_35, %c0_36, %c0_37, %c0_38] : memref<2x4x8x32xf32, #tpu.memory_space<vmem>>, vector<1x4x8x32xf32>
    %42 = vector.shape_cast %41 : vector<1x4x8x32xf32> to vector<4x8x32xf32>
    "tpu.trace_start"() <{level = 10 : i32, message = "hsd,hde->hse"}> : () -> ()
    %cst_39 = arith.constant dense<0.000000e+00> : vector<4x8x32xf32>
    %43 = tpu.matmul %40, %42, %cst_39 {dimension_numbers = #tpu.dot_dimension_numbers<[2], [1], [1], [2], [0, 0, 0, 1, 1, 2], [0], [0]>} : vector<4x8x8xf32>, vector<4x8x32xf32>, vector<4x8x32xf32> -> vector<4x8x32xf32>
    "tpu.trace_stop"() : () -> ()
    %cst_40 = arith.constant dense<0.000000e+00> : vector<8x32xf32>
    %44 = vector.multi_reduction <add>, %43, %cst_40 [0] : vector<4x8x32xf32> to vector<8x32xf32>
    %c0_41 = arith.constant 0 : index
    %c0_42 = arith.constant 0 : index
    %c0_43 = arith.constant 0 : index
    %45 = vector.load %arg10[%c0_41, %c0_42, %c0_43] : memref<2x1x32xf32, #tpu.memory_space<vmem>>, vector<1x1x32xf32>
    %46 = vector.shape_cast %45 : vector<1x1x32xf32> to vector<1x32xf32>
    %47 = vector.broadcast %46 : vector<1x32xf32> to vector<8x32xf32>
    %48 = arith.addf %44, %47 : vector<8x32xf32>
    %49 = arith.addf %3, %48 : vector<8x32xf32>
    %c0_44 = arith.constant 0 : index
    %c0_45 = arith.constant 0 : index
    %c0_46 = arith.constant 0 : index
    %50 = vector.load %arg11[%c0_44, %c0_45, %c0_46] : memref<2x1x32xf32, #tpu.memory_space<vmem>>, vector<1x1x32xf32>
    %51 = vector.shape_cast %50 : vector<1x1x32xf32> to vector<1x32xf32>
    %c0_47 = arith.constant 0 : index
    %c0_48 = arith.constant 0 : index
    %c0_49 = arith.constant 0 : index
    %52 = vector.load %arg12[%c0_47, %c0_48, %c0_49] : memref<2x1x32xf32, #tpu.memory_space<vmem>>, vector<1x1x32xf32>
    %53 = vector.shape_cast %52 : vector<1x1x32xf32> to vector<1x32xf32>
    %cst_50 = arith.constant dense<0.000000e+00> : vector<8xf32>
    %54 = vector.multi_reduction <add>, %49, %cst_50 [1] : vector<8x32xf32> to vector<8xf32>
    %55 = vector.shape_cast %54 : vector<8xf32> to vector<8x1xf32>
    %cst_51 = arith.constant 3.200000e+01 : f32
    %56 = vector.broadcast %cst_51 : f32 to vector<8x1xf32>
    %57 = arith.divf %55, %56 : vector<8x1xf32>
    %58 = vector.broadcast %57 : vector<8x1xf32> to vector<8x32xf32>
    %59 = arith.subf %49, %58 : vector<8x32xf32>
    %60 = arith.mulf %59, %59 : vector<8x32xf32>
    %cst_52 = arith.constant dense<0.000000e+00> : vector<8xf32>
    %61 = vector.multi_reduction <add>, %60, %cst_52 [1] : vector<8x32xf32> to vector<8xf32>
    %62 = vector.shape_cast %61 : vector<8xf32> to vector<8x1xf32>
    %cst_53 = arith.constant 3.200000e+01 : f32
    %63 = vector.broadcast %cst_53 : f32 to vector<8x1xf32>
    %64 = arith.divf %62, %63 : vector<8x1xf32>
    %65 = vector.broadcast %57 : vector<8x1xf32> to vector<8x32xf32>
    %66 = arith.subf %49, %65 : vector<8x32xf32>
    %cst_54 = arith.constant 9.99999974E-6 : f32
    %67 = vector.broadcast %cst_54 : f32 to vector<8x1xf32>
    %68 = arith.addf %64, %67 : vector<8x1xf32>
    %69 = math.rsqrt %68 : vector<8x1xf32>
    %70 = vector.broadcast %69 : vector<8x1xf32> to vector<8x32xf32>
    %71 = arith.mulf %66, %70 : vector<8x32xf32>
    %72 = vector.broadcast %51 : vector<1x32xf32> to vector<8x32xf32>
    %73 = arith.mulf %71, %72 : vector<8x32xf32>
    %74 = vector.broadcast %53 : vector<1x32xf32> to vector<8x32xf32>
    %75 = arith.addf %73, %74 : vector<8x32xf32>
    %c0_55 = arith.constant 0 : index
    %c0_56 = arith.constant 0 : index
    %c0_57 = arith.constant 0 : index
    %76 = vector.load %arg13[%c0_55, %c0_56, %c0_57] : memref<2x32x64xf32, #tpu.memory_space<vmem>>, vector<1x32x64xf32>
    %77 = vector.shape_cast %76 : vector<1x32x64xf32> to vector<32x64xf32>
    %cst_58 = arith.constant dense<0.000000e+00> : vector<8x64xf32>
    %78 = tpu.matmul %75, %77, %cst_58 {dimension_numbers = #tpu.dot_dimension_numbers<[1], [0], [0], [1], [0, 0, 1, 1], [], []>} : vector<8x32xf32>, vector<32x64xf32>, vector<8x64xf32> -> vector<8x64xf32>
    %c0_59 = arith.constant 0 : index
    %c0_60 = arith.constant 0 : index
    %c0_61 = arith.constant 0 : index
    %79 = vector.load %arg14[%c0_59, %c0_60, %c0_61] : memref<2x1x64xf32, #tpu.memory_space<vmem>>, vector<1x1x64xf32>
    %80 = vector.shape_cast %79 : vector<1x1x64xf32> to vector<1x64xf32>
    %81 = vector.broadcast %80 : vector<1x64xf32> to vector<8x64xf32>
    %82 = arith.addf %78, %81 : vector<8x64xf32>
    %cst_62 = arith.constant 0.000000e+00 : f32
    %83 = vector.broadcast %cst_62 : f32 to vector<8x64xf32>
    %84 = arith.maximumf %82, %83 : vector<8x64xf32>
    %c0_63 = arith.constant 0 : index
    %c0_64 = arith.constant 0 : index
    %c0_65 = arith.constant 0 : index
    %85 = vector.load %arg15[%c0_63, %c0_64, %c0_65] : memref<2x64x32xf32, #tpu.memory_space<vmem>>, vector<1x64x32xf32>
    %86 = vector.shape_cast %85 : vector<1x64x32xf32> to vector<64x32xf32>
    %cst_66 = arith.constant dense<0.000000e+00> : vector<8x32xf32>
    %87 = tpu.matmul %84, %86, %cst_66 {dimension_numbers = #tpu.dot_dimension_numbers<[1], [0], [0], [1], [0, 0, 1, 1], [], []>} : vector<8x64xf32>, vector<64x32xf32>, vector<8x32xf32> -> vector<8x32xf32>
    %c0_67 = arith.constant 0 : index
    %c0_68 = arith.constant 0 : index
    %c0_69 = arith.constant 0 : index
    %88 = vector.load %arg16[%c0_67, %c0_68, %c0_69] : memref<2x1x32xf32, #tpu.memory_space<vmem>>, vector<1x1x32xf32>
    %89 = vector.shape_cast %88 : vector<1x1x32xf32> to vector<1x32xf32>
    %90 = vector.broadcast %89 : vector<1x32xf32> to vector<8x32xf32>
    %91 = arith.addf %87, %90 : vector<8x32xf32>
    %92 = arith.addf %75, %91 : vector<8x32xf32>
    %c0_70 = arith.constant 0 : index
    %c0_71 = arith.constant 0 : index
    %c0_72 = arith.constant 0 : index
    %93 = vector.load %arg17[%c0_70, %c0_71, %c0_72] : memref<2x1x32xf32, #tpu.memory_space<vmem>>, vector<1x1x32xf32>
    %94 = vector.shape_cast %93 : vector<1x1x32xf32> to vector<1x32xf32>
    %c0_73 = arith.constant 0 : index
    %c0_74 = arith.constant 0 : index
    %c0_75 = arith.constant 0 : index
    %95 = vector.load %arg18[%c0_73, %c0_74, %c0_75] : memref<2x1x32xf32, #tpu.memory_space<vmem>>, vector<1x1x32xf32>
    %96 = vector.shape_cast %95 : vector<1x1x32xf32> to vector<1x32xf32>
    %cst_76 = arith.constant dense<0.000000e+00> : vector<8xf32>
    %97 = vector.multi_reduction <add>, %92, %cst_76 [1] : vector<8x32xf32> to vector<8xf32>
    %98 = vector.shape_cast %97 : vector<8xf32> to vector<8x1xf32>
    %cst_77 = arith.constant 3.200000e+01 : f32
    %99 = vector.broadcast %cst_77 : f32 to vector<8x1xf32>
    %100 = arith.divf %98, %99 : vector<8x1xf32>
    %101 = vector.broadcast %100 : vector<8x1xf32> to vector<8x32xf32>
    %102 = arith.subf %92, %101 : vector<8x32xf32>
    %103 = arith.mulf %102, %102 : vector<8x32xf32>
    %cst_78 = arith.constant dense<0.000000e+00> : vector<8xf32>
    %104 = vector.multi_reduction <add>, %103, %cst_78 [1] : vector<8x32xf32> to vector<8xf32>
    %105 = vector.shape_cast %104 : vector<8xf32> to vector<8x1xf32>
    %cst_79 = arith.constant 3.200000e+01 : f32
    %106 = vector.broadcast %cst_79 : f32 to vector<8x1xf32>
    %107 = arith.divf %105, %106 : vector<8x1xf32>
    %108 = vector.broadcast %100 : vector<8x1xf32> to vector<8x32xf32>
    %109 = arith.subf %92, %108 : vector<8x32xf32>
    %cst_80 = arith.constant 9.99999974E-6 : f32
    %110 = vector.broadcast %cst_80 : f32 to vector<8x1xf32>
    %111 = arith.addf %107, %110 : vector<8x1xf32>
    %112 = math.rsqrt %111 : vector<8x1xf32>
    %113 = vector.broadcast %112 : vector<8x1xf32> to vector<8x32xf32>
    %114 = arith.mulf %109, %113 : vector<8x32xf32>
    %115 = vector.broadcast %94 : vector<1x32xf32> to vector<8x32xf32>
    %116 = arith.mulf %114, %115 : vector<8x32xf32>
    %117 = vector.broadcast %96 : vector<1x32xf32> to vector<8x32xf32>
    %118 = arith.addf %116, %117 : vector<8x32xf32>
    %119 = vector.shape_cast %118 : vector<8x32xf32> to vector<1x8x32xf32>
    %120 = vector.broadcast %119 : vector<1x8x32xf32> to vector<4x8x32xf32>
    %c1 = arith.constant 1 : index
    %c0_81 = arith.constant 0 : index
    %c0_82 = arith.constant 0 : index
    %c0_83 = arith.constant 0 : index
    %121 = vector.load %arg3[%c1, %c0_81, %c0_82, %c0_83] : memref<2x4x32x8xf32, #tpu.memory_space<vmem>>, vector<1x4x32x8xf32>
    %122 = vector.shape_cast %121 : vector<1x4x32x8xf32> to vector<4x32x8xf32>
    "tpu.trace_start"() <{level = 10 : i32, message = "hsd,hdk->hsk"}> : () -> ()
    %cst_84 = arith.constant dense<0.000000e+00> : vector<4x8x8xf32>
    %123 = tpu.matmul %120, %122, %cst_84 {dimension_numbers = #tpu.dot_dimension_numbers<[2], [1], [1], [2], [0, 0, 0, 1, 1, 2], [0], [0]>} : vector<4x8x32xf32>, vector<4x32x8xf32>, vector<4x8x8xf32> -> vector<4x8x8xf32>
    "tpu.trace_stop"() : () -> ()
    %c1_85 = arith.constant 1 : index
    %c0_86 = arith.constant 0 : index
    %c0_87 = arith.constant 0 : index
    %c0_88 = arith.constant 0 : index
    %124 = vector.load %arg4[%c1_85, %c0_86, %c0_87, %c0_88] : memref<2x4x1x8xf32, #tpu.memory_space<vmem>>, vector<1x4x1x8xf32>
    %125 = vector.shape_cast %124 : vector<1x4x1x8xf32> to vector<4x1x8xf32>
    %126 = vector.broadcast %125 : vector<4x1x8xf32> to vector<4x8x8xf32>
    %127 = arith.addf %123, %126 : vector<4x8x8xf32>
    %c1_89 = arith.constant 1 : index
    %c0_90 = arith.constant 0 : index
    %c0_91 = arith.constant 0 : index
    %c0_92 = arith.constant 0 : index
    %128 = vector.load %arg5[%c1_89, %c0_90, %c0_91, %c0_92] : memref<2x4x32x8xf32, #tpu.memory_space<vmem>>, vector<1x4x32x8xf32>
    %129 = vector.shape_cast %128 : vector<1x4x32x8xf32> to vector<4x32x8xf32>
    "tpu.trace_start"() <{level = 10 : i32, message = "hsd,hdk->hsk"}> : () -> ()
    %cst_93 = arith.constant dense<0.000000e+00> : vector<4x8x8xf32>
    %130 = tpu.matmul %120, %129, %cst_93 {dimension_numbers = #tpu.dot_dimension_numbers<[2], [1], [1], [2], [0, 0, 0, 1, 1, 2], [0], [0]>} : vector<4x8x32xf32>, vector<4x32x8xf32>, vector<4x8x8xf32> -> vector<4x8x8xf32>
    "tpu.trace_stop"() : () -> ()
    %c1_94 = arith.constant 1 : index
    %c0_95 = arith.constant 0 : index
    %c0_96 = arith.constant 0 : index
    %c0_97 = arith.constant 0 : index
    %131 = vector.load %arg6[%c1_94, %c0_95, %c0_96, %c0_97] : memref<2x4x1x8xf32, #tpu.memory_space<vmem>>, vector<1x4x1x8xf32>
    %132 = vector.shape_cast %131 : vector<1x4x1x8xf32> to vector<4x1x8xf32>
    %133 = vector.broadcast %132 : vector<4x1x8xf32> to vector<4x8x8xf32>
    %134 = arith.addf %130, %133 : vector<4x8x8xf32>
    %c1_98 = arith.constant 1 : index
    %c0_99 = arith.constant 0 : index
    %c0_100 = arith.constant 0 : index
    %c0_101 = arith.constant 0 : index
    %135 = vector.load %arg7[%c1_98, %c0_99, %c0_100, %c0_101] : memref<2x4x32x8xf32, #tpu.memory_space<vmem>>, vector<1x4x32x8xf32>
    %136 = vector.shape_cast %135 : vector<1x4x32x8xf32> to vector<4x32x8xf32>
    "tpu.trace_start"() <{level = 10 : i32, message = "hsd,hdk->hsk"}> : () -> ()
    %cst_102 = arith.constant dense<0.000000e+00> : vector<4x8x8xf32>
    %137 = tpu.matmul %120, %136, %cst_102 {dimension_numbers = #tpu.dot_dimension_numbers<[2], [1], [1], [2], [0, 0, 0, 1, 1, 2], [0], [0]>} : vector<4x8x32xf32>, vector<4x32x8xf32>, vector<4x8x8xf32> -> vector<4x8x8xf32>
    "tpu.trace_stop"() : () -> ()
    %c1_103 = arith.constant 1 : index
    %c0_104 = arith.constant 0 : index
    %c0_105 = arith.constant 0 : index
    %c0_106 = arith.constant 0 : index
    %138 = vector.load %arg8[%c1_103, %c0_104, %c0_105, %c0_106] : memref<2x4x1x8xf32, #tpu.memory_space<vmem>>, vector<1x4x1x8xf32>
    %139 = vector.shape_cast %138 : vector<1x4x1x8xf32> to vector<4x1x8xf32>
    %140 = vector.broadcast %139 : vector<4x1x8xf32> to vector<4x8x8xf32>
    %141 = arith.addf %137, %140 : vector<4x8x8xf32>
    "tpu.trace_start"() <{level = 10 : i32, message = "hqd,hkd->hqk"}> : () -> ()
    %cst_107 = arith.constant dense<0.000000e+00> : vector<4x8x8xf32>
    %142 = tpu.matmul %127, %134, %cst_107 {dimension_numbers = #tpu.dot_dimension_numbers<[2], [2], [1], [1], [0, 0, 0, 1, 1, 1], [0], [0]>} : vector<4x8x8xf32>, vector<4x8x8xf32>, vector<4x8x8xf32> -> vector<4x8x8xf32>
    "tpu.trace_stop"() : () -> ()
    %cst_108 = arith.constant 0.353553385 : f32
    %143 = vector.broadcast %cst_108 : f32 to vector<4x8x8xf32>
    %144 = arith.mulf %142, %143 : vector<4x8x8xf32>
    %cst_109 = arith.constant dense<0xFF800000> : vector<4x8xf32>
    %145 = vector.multi_reduction <maximumf>, %144, %cst_109 [2] : vector<4x8x8xf32> to vector<4x8xf32>
    %146 = vector.shape_cast %145 : vector<4x8xf32> to vector<4x8x1xf32>
    %147 = vector.broadcast %146 : vector<4x8x1xf32> to vector<4x8x8xf32>
    %148 = arith.subf %144, %147 : vector<4x8x8xf32>
    %149 = math.exp %148 : vector<4x8x8xf32>
    %cst_110 = arith.constant dense<0.000000e+00> : vector<4x8xf32>
    %150 = vector.multi_reduction <add>, %149, %cst_110 [2] : vector<4x8x8xf32> to vector<4x8xf32>
    %151 = vector.shape_cast %150 : vector<4x8xf32> to vector<4x8x1xf32>
    %152 = tpu.reciprocal %151 {approx = true} : vector<4x8x1xf32> -> vector<4x8x1xf32>
    %153 = vector.broadcast %152 : vector<4x8x1xf32> to vector<4x8x8xf32>
    %154 = arith.mulf %149, %153 : vector<4x8x8xf32>
    "tpu.trace_start"() <{level = 10 : i32, message = "hqk,hkd->hqd"}> : () -> ()
    %cst_111 = arith.constant dense<0.000000e+00> : vector<4x8x8xf32>
    %155 = tpu.matmul %154, %141, %cst_111 {dimension_numbers = #tpu.dot_dimension_numbers<[2], [1], [1], [2], [0, 0, 0, 1, 1, 2], [0], [0]>} : vector<4x8x8xf32>, vector<4x8x8xf32>, vector<4x8x8xf32> -> vector<4x8x8xf32>
    "tpu.trace_stop"() : () -> ()
    %c1_112 = arith.constant 1 : index
    %c0_113 = arith.constant 0 : index
    %c0_114 = arith.constant 0 : index
    %c0_115 = arith.constant 0 : index
    %156 = vector.load %arg9[%c1_112, %c0_113, %c0_114, %c0_115] : memref<2x4x8x32xf32, #tpu.memory_space<vmem>>, vector<1x4x8x32xf32>
    %157 = vector.shape_cast %156 : vector<1x4x8x32xf32> to vector<4x8x32xf32>
    "tpu.trace_start"() <{level = 10 : i32, message = "hsd,hde->hse"}> : () -> ()
    %cst_116 = arith.constant dense<0.000000e+00> : vector<4x8x32xf32>
    %158 = tpu.matmul %155, %157, %cst_116 {dimension_numbers = #tpu.dot_dimension_numbers<[2], [1], [1], [2], [0, 0, 0, 1, 1, 2], [0], [0]>} : vector<4x8x8xf32>, vector<4x8x32xf32>, vector<4x8x32xf32> -> vector<4x8x32xf32>
    "tpu.trace_stop"() : () -> ()
    %cst_117 = arith.constant dense<0.000000e+00> : vector<8x32xf32>
    %159 = vector.multi_reduction <add>, %158, %cst_117 [0] : vector<4x8x32xf32> to vector<8x32xf32>
    %c1_118 = arith.constant 1 : index
    %c0_119 = arith.constant 0 : index
    %c0_120 = arith.constant 0 : index
    %160 = vector.load %arg10[%c1_118, %c0_119, %c0_120] : memref<2x1x32xf32, #tpu.memory_space<vmem>>, vector<1x1x32xf32>
    %161 = vector.shape_cast %160 : vector<1x1x32xf32> to vector<1x32xf32>
    %162 = vector.broadcast %161 : vector<1x32xf32> to vector<8x32xf32>
    %163 = arith.addf %159, %162 : vector<8x32xf32>
    %164 = arith.addf %118, %163 : vector<8x32xf32>
    %c1_121 = arith.constant 1 : index
    %c0_122 = arith.constant 0 : index
    %c0_123 = arith.constant 0 : index
    %165 = vector.load %arg11[%c1_121, %c0_122, %c0_123] : memref<2x1x32xf32, #tpu.memory_space<vmem>>, vector<1x1x32xf32>
    %166 = vector.shape_cast %165 : vector<1x1x32xf32> to vector<1x32xf32>
    %c1_124 = arith.constant 1 : index
    %c0_125 = arith.constant 0 : index
    %c0_126 = arith.constant 0 : index
    %167 = vector.load %arg12[%c1_124, %c0_125, %c0_126] : memref<2x1x32xf32, #tpu.memory_space<vmem>>, vector<1x1x32xf32>
    %168 = vector.shape_cast %167 : vector<1x1x32xf32> to vector<1x32xf32>
    %cst_127 = arith.constant dense<0.000000e+00> : vector<8xf32>
    %169 = vector.multi_reduction <add>, %164, %cst_127 [1] : vector<8x32xf32> to vector<8xf32>
    %170 = vector.shape_cast %169 : vector<8xf32> to vector<8x1xf32>
    %cst_128 = arith.constant 3.200000e+01 : f32
    %171 = vector.broadcast %cst_128 : f32 to vector<8x1xf32>
    %172 = arith.divf %170, %171 : vector<8x1xf32>
    %173 = vector.broadcast %172 : vector<8x1xf32> to vector<8x32xf32>
    %174 = arith.subf %164, %173 : vector<8x32xf32>
    %175 = arith.mulf %174, %174 : vector<8x32xf32>
    %cst_129 = arith.constant dense<0.000000e+00> : vector<8xf32>
    %176 = vector.multi_reduction <add>, %175, %cst_129 [1] : vector<8x32xf32> to vector<8xf32>
    %177 = vector.shape_cast %176 : vector<8xf32> to vector<8x1xf32>
    %cst_130 = arith.constant 3.200000e+01 : f32
    %178 = vector.broadcast %cst_130 : f32 to vector<8x1xf32>
    %179 = arith.divf %177, %178 : vector<8x1xf32>
    %180 = vector.broadcast %172 : vector<8x1xf32> to vector<8x32xf32>
    %181 = arith.subf %164, %180 : vector<8x32xf32>
    %cst_131 = arith.constant 9.99999974E-6 : f32
    %182 = vector.broadcast %cst_131 : f32 to vector<8x1xf32>
    %183 = arith.addf %179, %182 : vector<8x1xf32>
    %184 = math.rsqrt %183 : vector<8x1xf32>
    %185 = vector.broadcast %184 : vector<8x1xf32> to vector<8x32xf32>
    %186 = arith.mulf %181, %185 : vector<8x32xf32>
    %187 = vector.broadcast %166 : vector<1x32xf32> to vector<8x32xf32>
    %188 = arith.mulf %186, %187 : vector<8x32xf32>
    %189 = vector.broadcast %168 : vector<1x32xf32> to vector<8x32xf32>
    %190 = arith.addf %188, %189 : vector<8x32xf32>
    %c1_132 = arith.constant 1 : index
    %c0_133 = arith.constant 0 : index
    %c0_134 = arith.constant 0 : index
    %191 = vector.load %arg13[%c1_132, %c0_133, %c0_134] : memref<2x32x64xf32, #tpu.memory_space<vmem>>, vector<1x32x64xf32>
    %192 = vector.shape_cast %191 : vector<1x32x64xf32> to vector<32x64xf32>
    %cst_135 = arith.constant dense<0.000000e+00> : vector<8x64xf32>
    %193 = tpu.matmul %190, %192, %cst_135 {dimension_numbers = #tpu.dot_dimension_numbers<[1], [0], [0], [1], [0, 0, 1, 1], [], []>} : vector<8x32xf32>, vector<32x64xf32>, vector<8x64xf32> -> vector<8x64xf32>
    %c1_136 = arith.constant 1 : index
    %c0_137 = arith.constant 0 : index
    %c0_138 = arith.constant 0 : index
    %194 = vector.load %arg14[%c1_136, %c0_137, %c0_138] : memref<2x1x64xf32, #tpu.memory_space<vmem>>, vector<1x1x64xf32>
    %195 = vector.shape_cast %194 : vector<1x1x64xf32> to vector<1x64xf32>
    %196 = vector.broadcast %195 : vector<1x64xf32> to vector<8x64xf32>
    %197 = arith.addf %193, %196 : vector<8x64xf32>
    %cst_139 = arith.constant 0.000000e+00 : f32
    %198 = vector.broadcast %cst_139 : f32 to vector<8x64xf32>
    %199 = arith.maximumf %197, %198 : vector<8x64xf32>
    %c1_140 = arith.constant 1 : index
    %c0_141 = arith.constant 0 : index
    %c0_142 = arith.constant 0 : index
    %200 = vector.load %arg15[%c1_140, %c0_141, %c0_142] : memref<2x64x32xf32, #tpu.memory_space<vmem>>, vector<1x64x32xf32>
    %201 = vector.shape_cast %200 : vector<1x64x32xf32> to vector<64x32xf32>
    %cst_143 = arith.constant dense<0.000000e+00> : vector<8x32xf32>
    %202 = tpu.matmul %199, %201, %cst_143 {dimension_numbers = #tpu.dot_dimension_numbers<[1], [0], [0], [1], [0, 0, 1, 1], [], []>} : vector<8x64xf32>, vector<64x32xf32>, vector<8x32xf32> -> vector<8x32xf32>
    %c1_144 = arith.constant 1 : index
    %c0_145 = arith.constant 0 : index
    %c0_146 = arith.constant 0 : index
    %203 = vector.load %arg16[%c1_144, %c0_145, %c0_146] : memref<2x1x32xf32, #tpu.memory_space<vmem>>, vector<1x1x32xf32>
    %204 = vector.shape_cast %203 : vector<1x1x32xf32> to vector<1x32xf32>
    %205 = vector.broadcast %204 : vector<1x32xf32> to vector<8x32xf32>
    %206 = arith.addf %202, %205 : vector<8x32xf32>
    %207 = arith.addf %190, %206 : vector<8x32xf32>
    %c1_147 = arith.constant 1 : index
    %c0_148 = arith.constant 0 : index
    %c0_149 = arith.constant 0 : index
    %208 = vector.load %arg17[%c1_147, %c0_148, %c0_149] : memref<2x1x32xf32, #tpu.memory_space<vmem>>, vector<1x1x32xf32>
    %209 = vector.shape_cast %208 : vector<1x1x32xf32> to vector<1x32xf32>
    %c1_150 = arith.constant 1 : index
    %c0_151 = arith.constant 0 : index
    %c0_152 = arith.constant 0 : index
    %210 = vector.load %arg18[%c1_150, %c0_151, %c0_152] : memref<2x1x32xf32, #tpu.memory_space<vmem>>, vector<1x1x32xf32>
    %211 = vector.shape_cast %210 : vector<1x1x32xf32> to vector<1x32xf32>
    %cst_153 = arith.constant dense<0.000000e+00> : vector<8xf32>
    %212 = vector.multi_reduction <add>, %207, %cst_153 [1] : vector<8x32xf32> to vector<8xf32>
    %213 = vector.shape_cast %212 : vector<8xf32> to vector<8x1xf32>
    %cst_154 = arith.constant 3.200000e+01 : f32
    %214 = vector.broadcast %cst_154 : f32 to vector<8x1xf32>
    %215 = arith.divf %213, %214 : vector<8x1xf32>
    %216 = vector.broadcast %215 : vector<8x1xf32> to vector<8x32xf32>
    %217 = arith.subf %207, %216 : vector<8x32xf32>
    %218 = arith.mulf %217, %217 : vector<8x32xf32>
    %cst_155 = arith.constant dense<0.000000e+00> : vector<8xf32>
    %219 = vector.multi_reduction <add>, %218, %cst_155 [1] : vector<8x32xf32> to vector<8xf32>
    %220 = vector.shape_cast %219 : vector<8xf32> to vector<8x1xf32>
    %cst_156 = arith.constant 3.200000e+01 : f32
    %221 = vector.broadcast %cst_156 : f32 to vector<8x1xf32>
    %222 = arith.divf %220, %221 : vector<8x1xf32>
    %223 = vector.broadcast %215 : vector<8x1xf32> to vector<8x32xf32>
    %224 = arith.subf %207, %223 : vector<8x32xf32>
    %cst_157 = arith.constant 9.99999974E-6 : f32
    %225 = vector.broadcast %cst_157 : f32 to vector<8x1xf32>
    %226 = arith.addf %222, %225 : vector<8x1xf32>
    %227 = math.rsqrt %226 : vector<8x1xf32>
    %228 = vector.broadcast %227 : vector<8x1xf32> to vector<8x32xf32>
    %229 = arith.mulf %224, %228 : vector<8x32xf32>
    %230 = vector.broadcast %209 : vector<1x32xf32> to vector<8x32xf32>
    %231 = arith.mulf %229, %230 : vector<8x32xf32>
    %232 = vector.broadcast %211 : vector<1x32xf32> to vector<8x32xf32>
    %233 = arith.addf %231, %232 : vector<8x32xf32>
    %c0_158 = arith.constant 0 : index
    %c0_159 = arith.constant 0 : index
    %c0_160 = arith.constant 0 : index
    %234 = vector.load %arg19[%c0_158, %c0_159, %c0_160] : memref<1x8x32xf32, #tpu.memory_space<vmem>>, vector<1x8x32xf32>
    %235 = vector.shape_cast %234 : vector<1x8x32xf32> to vector<8x32xf32>
    %236 = vector.shape_cast %233 : vector<8x32xf32> to vector<1x8x32xf32>
    tpu.vector_store %arg19[%c0_158, %c0_159, %c0_160], %236 {strides = array<i32>} : memref<1x8x32xf32, #tpu.memory_space<vmem>>, vector<1x8x32xf32>,
    return
  }
  func.func @transform_0(%arg0: i32) -> (i32, i32, i32) {
    %c0_i32 = arith.constant 0 : i32
    %c0_i32_0 = arith.constant 0 : i32
    %c0_i32_1 = arith.constant 0 : i32
    return %arg0, %c0_i32, %c0_i32_0 : i32, i32, i32
  }
  func.func @transform_1(%arg0: i32) -> (i32, i32) {
    %c0_i32 = arith.constant 0 : i32
    %c0_i32_0 = arith.constant 0 : i32
    %c0_i32_1 = arith.constant 0 : i32
    return %c0_i32, %c0_i32_0 : i32, i32
  }
  func.func @transform_2(%arg0: i32) -> (i32, i32, i32, i32) {
    %c0_i32 = arith.constant 0 : i32
    %c0_i32_0 = arith.constant 0 : i32
    %c0_i32_1 = arith.constant 0 : i32
    %c0_i32_2 = arith.constant 0 : i32
    %c0_i32_3 = arith.constant 0 : i32
    return %c0_i32, %c0_i32_0, %c0_i32_1, %c0_i32_2 : i32, i32, i32, i32
  }
  func.func @transform_3(%arg0: i32) -> (i32, i32, i32, i32) {
    %c0_i32 = arith.constant 0 : i32
    %c0_i32_0 = arith.constant 0 : i32
    %c0_i32_1 = arith.constant 0 : i32
    %c0_i32_2 = arith.constant 0 : i32
    %c0_i32_3 = arith.constant 0 : i32
    return %c0_i32, %c0_i32_0, %c0_i32_1, %c0_i32_2 : i32, i32, i32, i32
  }
  func.func @transform_4(%arg0: i32) -> (i32, i32, i32, i32) {
    %c0_i32 = arith.constant 0 : i32
    %c0_i32_0 = arith.constant 0 : i32
    %c0_i32_1 = arith.constant 0 : i32
    %c0_i32_2 = arith.constant 0 : i32
    %c0_i32_3 = arith.constant 0 : i32
    return %c0_i32, %c0_i32_0, %c0_i32_1, %c0_i32_2 : i32, i32, i32, i32
  }
  func.func @transform_5(%arg0: i32) -> (i32, i32, i32, i32) {
    %c0_i32 = arith.constant 0 : i32
    %c0_i32_0 = arith.constant 0 : i32
    %c0_i32_1 = arith.constant 0 : i32
    %c0_i32_2 = arith.constant 0 : i32
    %c0_i32_3 = arith.constant 0 : i32
    return %c0_i32, %c0_i32_0, %c0_i32_1, %c0_i32_2 : i32, i32, i32, i32
  }
  func.func @transform_6(%arg0: i32) -> (i32, i32, i32, i32) {
    %c0_i32 = arith.constant 0 : i32
    %c0_i32_0 = arith.constant 0 : i32
    %c0_i32_1 = arith.constant 0 : i32
    %c0_i32_2 = arith.constant 0 : i32
    %c0_i32_3 = arith.constant 0 : i32
    return %c0_i32, %c0_i32_0, %c0_i32_1, %c0_i32_2 : i32, i32, i32, i32
  }
  func.func @transform_7(%arg0: i32) -> (i32, i32, i32, i32) {
    %c0_i32 = arith.constant 0 : i32
    %c0_i32_0 = arith.constant 0 : i32
    %c0_i32_1 = arith.constant 0 : i32
    %c0_i32_2 = arith.constant 0 : i32
    %c0_i32_3 = arith.constant 0 : i32
    return %c0_i32, %c0_i32_0, %c0_i32_1, %c0_i32_2 : i32, i32, i32, i32
  }
  func.func @transform_8(%arg0: i32) -> (i32, i32, i32, i32) {
    %c0_i32 = arith.constant 0 : i32
    %c0_i32_0 = arith.constant 0 : i32
    %c0_i32_1 = arith.constant 0 : i32
    %c0_i32_2 = arith.constant 0 : i32
    %c0_i32_3 = arith.constant 0 : i32
    return %c0_i32, %c0_i32_0, %c0_i32_1, %c0_i32_2 : i32, i32, i32, i32
  }
  func.func @transform_9(%arg0: i32) -> (i32, i32, i32) {
    %c0_i32 = arith.constant 0 : i32
    %c0_i32_0 = arith.constant 0 : i32
    %c0_i32_1 = arith.constant 0 : i32
    %c0_i32_2 = arith.constant 0 : i32
    return %c0_i32, %c0_i32_0, %c0_i32_1 : i32, i32, i32
  }
  func.func @transform_10(%arg0: i32) -> (i32, i32, i32) {
    %c0_i32 = arith.constant 0 : i32
    %c0_i32_0 = arith.constant 0 : i32
    %c0_i32_1 = arith.constant 0 : i32
    %c0_i32_2 = arith.constant 0 : i32
    return %c0_i32, %c0_i32_0, %c0_i32_1 : i32, i32, i32
  }
  func.func @transform_11(%arg0: i32) -> (i32, i32, i32) {
    %c0_i32 = arith.constant 0 : i32
    %c0_i32_0 = arith.constant 0 : i32
    %c0_i32_1 = arith.constant 0 : i32
    %c0_i32_2 = arith.constant 0 : i32
    return %c0_i32, %c0_i32_0, %c0_i32_1 : i32, i32, i32
  }
  func.func @transform_12(%arg0: i32) -> (i32, i32, i32) {
    %c0_i32 = arith.constant 0 : i32
    %c0_i32_0 = arith.constant 0 : i32
    %c0_i32_1 = arith.constant 0 : i32
    %c0_i32_2 = arith.constant 0 : i32
    return %c0_i32, %c0_i32_0, %c0_i32_1 : i32, i32, i32
  }
  func.func @transform_13(%arg0: i32) -> (i32, i32, i32) {
    %c0_i32 = arith.constant 0 : i32
    %c0_i32_0 = arith.constant 0 : i32
    %c0_i32_1 = arith.constant 0 : i32
    %c0_i32_2 = arith.constant 0 : i32
    return %c0_i32, %c0_i32_0, %c0_i32_1 : i32, i32, i32
  }
  func.func @transform_14(%arg0: i32) -> (i32, i32, i32) {
    %c0_i32 = arith.constant 0 : i32
    %c0_i32_0 = arith.constant 0 : i32
    %c0_i32_1 = arith.constant 0 : i32
    %c0_i32_2 = arith.constant 0 : i32
    return %c0_i32, %c0_i32_0, %c0_i32_1 : i32, i32, i32
  }
  func.func @transform_15(%arg0: i32) -> (i32, i32, i32) {
    %c0_i32 = arith.constant 0 : i32
    %c0_i32_0 = arith.constant 0 : i32
    %c0_i32_1 = arith.constant 0 : i32
    %c0_i32_2 = arith.constant 0 : i32
    return %c0_i32, %c0_i32_0, %c0_i32_1 : i32, i32, i32
  }
  func.func @transform_16(%arg0: i32) -> (i32, i32, i32) {
    %c0_i32 = arith.constant 0 : i32
    %c0_i32_0 = arith.constant 0 : i32
    %c0_i32_1 = arith.constant 0 : i32
    %c0_i32_2 = arith.constant 0 : i32
    return %c0_i32, %c0_i32_0, %c0_i32_1 : i32, i32, i32
  }
  func.func @transform_17(%arg0: i32) -> (i32, i32, i32) {
    %c0_i32 = arith.constant 0 : i32
    %c0_i32_0 = arith.constant 0 : i32
    %c0_i32_1 = arith.constant 0 : i32
    %c0_i32_2 = arith.constant 0 : i32
    return %c0_i32, %c0_i32_0, %c0_i32_1 : i32, i32, i32
  }
  func.func @transform_18(%arg0: i32) -> (i32, i32, i32) {
    %c0_i32 = arith.constant 0 : i32
    %c0_i32_0 = arith.constant 0 : i32
    %c0_i32_1 = arith.constant 0 : i32
    return %arg0, %c0_i32, %c0_i32_0 : i32, i32, i32
  }
}

</mosaic_0001>

<llo_original>
// kernel: transformer_encoder.1
$region0: #{transformer_encoder.1}
  #allocation0 [shape = 'u32[]', space=smem, size = 0x4, offset = 0x4, fixed_abs, tag = 'smem constant byte address 0x4 - core index']
  #allocation1 [shape = 'u32[144,128]{1,0:T(1,128)}', space=vmem, size = 0x12000, scoped, tag = 'internal scratch']
  %s0 = inlined_call_operand.vmem [shape: f32[2,8,32], index: 0, kind: input, shape index: {}]
  %s1 = inlined_call_operand.vmem [shape: f32[8,32], index: 1, kind: input, shape index: {}]
  %s2 = inlined_call_operand.vmem [shape: f32[2,4,32,8], index: 2, kind: input, shape index: {}]
  %s3 = inlined_call_operand.vmem [shape: f32[2,4,1,8], index: 3, kind: input, shape index: {}]
  %s4 = inlined_call_operand.vmem [shape: f32[2,4,32,8], index: 4, kind: input, shape index: {}]
  %s5 = inlined_call_operand.vmem [shape: f32[2,4,1,8], index: 5, kind: input, shape index: {}]
  %s6 = inlined_call_operand.vmem [shape: f32[2,4,32,8], index: 6, kind: input, shape index: {}]
  %s7 = inlined_call_operand.vmem [shape: f32[2,4,1,8], index: 7, kind: input, shape index: {}]
  %s8 = inlined_call_operand.vmem [shape: f32[2,4,8,32], index: 8, kind: input, shape index: {}]
  %s9 = inlined_call_operand.vmem [shape: f32[2,1,32], index: 9, kind: input, shape index: {}]
  %s10 = inlined_call_operand.vmem [shape: f32[2,1,32], index: 10, kind: input, shape index: {}]
  %s11 = inlined_call_operand.vmem [shape: f32[2,1,32], index: 11, kind: input, shape index: {}]
  %s12 = inlined_call_operand.vmem [shape: f32[2,32,64], index: 12, kind: input, shape index: {}]
  %s13 = inlined_call_operand.vmem [shape: f32[2,1,64], index: 13, kind: input, shape index: {}]
  %s14 = inlined_call_operand.vmem [shape: f32[2,64,32], index: 14, kind: input, shape index: {}]
  %s15 = inlined_call_operand.vmem [shape: f32[2,1,32], index: 15, kind: input, shape index: {}]
  %s16 = inlined_call_operand.vmem [shape: f32[2,1,32], index: 16, kind: input, shape index: {}]
  %s17 = inlined_call_operand.vmem [shape: f32[2,1,32], index: 17, kind: input, shape index: {}]
  %s18 = inlined_call_operand.hbm [shape: f32[2,8,32], index: 18, kind: output, shape index: {}]
  %s19 = sld [smem:[#allocation0]]
  $region105: #{transformer_encoder.1} parent=0
    _
  %s21 = ssub.s32 1, %s19
  %s22 = scalar_select 0, %s21, %s19
  $region1: #{transformer_encoder.1} parent=0
    #allocation2 [shape = 'u8[8192]{0}', space=vmem, size = 0x2000, scoped, tag = 'output window, operand 0']
    #allocation3 [shape = 's32[2]{0}', space=sflag, size = 0x8, scoped, tag = 'scoped memory for transformer_encoder.1']
    %23 = vsyncpa [#allocation3], 0
    %s24 = scalar_lea.sflag [#allocation3], 1
    %25 = vsyncpa %s24, 0
    loop: start=0, step=1, limit=4
    $region2: #{transformer_encoder.1} parent=1 // loop_pre_header
      _
    $region3: #{transformer_encoder.1} parent=1 // loop_header
      %s27 = sphi 0, %s31
      %p28 = scmp.ge.s32.totalorder %s27, 4
      %s37 = sphi 0, %s39
      %s40 = sphi 0, %s37
      %s41 = sphi 0, %s40
      %s57 = sphi 0, %s41
      %s61 = sphi 0, %s61
      %s63 = sphi 0, %s61
      %s64 = sphi 0, %s63
      %s78 = sphi 0, %s64
      %s82 = sphi 0, %s82
      %s84 = sphi 0, %s82
      %s85 = sphi 0, %s84
      %s99 = sphi 0, %s85
      %s103 = sphi 0, %s103
      %s105 = sphi 0, %s103
      %s106 = sphi 0, %s105
      %s120 = sphi 0, %s106
      %s124 = sphi 0, %s124
      %s126 = sphi 0, %s124
      %s127 = sphi 0, %s126
      %s141 = sphi 0, %s127
      %s145 = sphi 0, %s145
      %s147 = sphi 0, %s145
      %s148 = sphi 0, %s147
      %s162 = sphi 0, %s148
      %s166 = sphi 0, %s166
      %s168 = sphi 0, %s166
      %s169 = sphi 0, %s168
      %s183 = sphi 0, %s169
      %s187 = sphi 0, %s187
      %s189 = sphi 0, %s187
      %s190 = sphi 0, %s189
      %s204 = sphi 0, %s190
      %s208 = sphi 0, %s208
      %s210 = sphi 0, %s208
      %s211 = sphi 0, %s210
      %s225 = sphi 0, %s211
      %s229 = sphi 0, %s229
      %s231 = sphi 0, %s229
      %s232 = sphi 0, %s231
      %s246 = sphi 0, %s232
      %s250 = sphi 0, %s250
      %s252 = sphi 0, %s250
      %s253 = sphi 0, %s252
      %s267 = sphi 0, %s253
      %s271 = sphi 0, %s271
      %s273 = sphi 0, %s271
      %s274 = sphi 0, %s273
      %s288 = sphi 0, %s274
      %s292 = sphi 0, %s292
      %s294 = sphi 0, %s292
      %s295 = sphi 0, %s294
      %s309 = sphi 0, %s295
      %s313 = sphi 0, %s313
      %s315 = sphi 0, %s313
      %s316 = sphi 0, %s315
      %s330 = sphi 0, %s316
      %s334 = sphi 0, %s334
      %s336 = sphi 0, %s334
      %s337 = sphi 0, %s336
      %s351 = sphi 0, %s337
      %s355 = sphi 0, %s355
      %s357 = sphi 0, %s355
      %s358 = sphi 0, %s357
      %s372 = sphi 0, %s358
      %s376 = sphi 0, %s376
      %s378 = sphi 0, %s376
      %s379 = sphi 0, %s378
      %s393 = sphi 0, %s379
      %s397 = sphi 0, %s397
      %s399 = sphi 0, %s397
      %s400 = sphi 0, %s399
      %s414 = sphi 0, %s400
      %s420 = sphi 0, %s422
      %s423 = sphi 0, %s420
      %s424 = sphi 0, %s423
      %s440 = sphi 0, %s424
    $region4: #{transformer_encoder.1} parent=1 // loop_header_branch
      %30 = sbr.rel (%p28) target = $region8
    $region5: #{transformer_encoder.1} parent=1 // loop_body
      %s32 = ssub.s32 %s27, 1
      %s33 = ssub.s32 %s27, 2
      %s34 = sadd.s32 %s27, 1
      %s35 = ssub.s32 %s27, %s34
      %p36 = scmp.eq.s32.totalorder %s35, 0
      %s38 = sadd.s32 %s37, 1
      %s39 = scalar_select %p36, %s37, %s38
      %p42 = pneg %p36
      %p43 = scmp.eq.s32.totalorder %s27, 1
      %p44 = por %p42, %p43
      %p45 = scmp.ne.s32.totalorder %s37, %s40
      %p46 = scmp.eq.s32.totalorder %s27, 0
      %p47 = por %p45, %p46
      %p48 = scmp.ne.s32.totalorder %s37, %s40
      %p49 = scmp.eq.s32.totalorder %s32, 1
      %p50 = por %p48, %p49
      %p51 = scmp.ne.s32.totalorder %s40, %s41
      %p52 = scmp.eq.s32.totalorder %s32, 0
      %p53 = por %p51, %p52
      %p54 = scmp.ne.s32.totalorder %s40, %s41
      %p55 = scmp.eq.s32.totalorder %s33, 1
      %p56 = por %p54, %p55
      %p58 = scmp.ne.s32.totalorder %s41, %s57
      %p59 = scmp.eq.s32.totalorder %s33, 0
      %p60 = por %p58, %p59
      %s62 = sadd.s32 %s61, 1
      %p65 = scmp.eq.s32.totalorder %s27, 1
      %p66 = scmp.ne.s32.totalorder %s61, %s63
      %p67 = scmp.eq.s32.totalorder %s27, 0
      %p68 = por %p66, %p67
      %p69 = scmp.ne.s32.totalorder %s61, %s63
      %p70 = scmp.eq.s32.totalorder %s32, 1
      %p71 = por %p69, %p70
      %p72 = scmp.ne.s32.totalorder %s63, %s64
      %p73 = scmp.eq.s32.totalorder %s32, 0
      %p74 = por %p72, %p73
      %p75 = scmp.ne.s32.totalorder %s63, %s64
      %p76 = scmp.eq.s32.totalorder %s33, 1
      %p77 = por %p75, %p76
      %p79 = scmp.ne.s32.totalorder %s64, %s78
      %p80 = scmp.eq.s32.totalorder %s33, 0
      %p81 = por %p79, %p80
      %s83 = sadd.s32 %s82, 1
      %p86 = scmp.eq.s32.totalorder %s27, 1
      %p87 = scmp.ne.s32.totalorder %s82, %s84
      %p88 = scmp.eq.s32.totalorder %s27, 0
      %p89 = por %p87, %p88
      %p90 = scmp.ne.s32.totalorder %s82, %s84
      %p91 = scmp.eq.s32.totalorder %s32, 1
      %p92 = por %p90, %p91
      %p93 = scmp.ne.s32.totalorder %s84, %s85
      %p94 = scmp.eq.s32.totalorder %s32, 0
      %p95 = por %p93, %p94
      %p96 = scmp.ne.s32.totalorder %s84, %s85
      %p97 = scmp.eq.s32.totalorder %s33, 1
      %p98 = por %p96, %p97
      %p100 = scmp.ne.s32.totalorder %s85, %s99
      %p101 = scmp.eq.s32.totalorder %s33, 0
      %p102 = por %p100, %p101
      %s104 = sadd.s32 %s103, 1
      %p107 = scmp.eq.s32.totalorder %s27, 1
      %p108 = scmp.ne.s32.totalorder %s103, %s105
      %p109 = scmp.eq.s32.totalorder %s27, 0
      %p110 = por %p108, %p109
      %p111 = scmp.ne.s32.totalorder %s103, %s105
      %p112 = scmp.eq.s32.totalorder %s32, 1
      %p113 = por %p111, %p112
      %p114 = scmp.ne.s32.totalorder %s105, %s106
      %p115 = scmp.eq.s32.totalorder %s32, 0
      %p116 = por %p114, %p115
      %p117 = scmp.ne.s32.totalorder %s105, %s106
      %p118 = scmp.eq.s32.totalorder %s33, 1
      %p119 = por %p117, %p118
      %p121 = scmp.ne.s32.totalorder %s106, %s120
      %p122 = scmp.eq.s32.totalorder %s33, 0
      %p123 = por %p121, %p122
      %s125 = sadd.s32 %s124, 1
      %p128 = scmp.eq.s32.totalorder %s27, 1
      %p129 = scmp.ne.s32.totalorder %s124, %s126
      %p130 = scmp.eq.s32.totalorder %s27, 0
      %p131 = por %p129, %p130
      %p132 = scmp.ne.s32.totalorder %s124, %s126
      %p133 = scmp.eq.s32.totalorder %s32, 1
      %p134 = por %p132, %p133
      %p135 = scmp.ne.s32.totalorder %s126, %s127
      %p136 = scmp.eq.s32.totalorder %s32, 0
      %p137 = por %p135, %p136
      %p138 = scmp.ne.s32.totalorder %s126, %s127
      %p139 = scmp.eq.s32.totalorder %s33, 1
      %p140 = por %p138, %p139
      %p142 = scmp.ne.s32.totalorder %s127, %s141
      %p143 = scmp.eq.s32.totalorder %s33, 0
      %p144 = por %p142, %p143
      %s146 = sadd.s32 %s145, 1
      %p149 = scmp.eq.s32.totalorder %s27, 1
      %p150 = scmp.ne.s32.totalorder %s145, %s147
      %p151 = scmp.eq.s32.totalorder %s27, 0
      %p152 = por %p150, %p151
      %p153 = scmp.ne.s32.totalorder %s145, %s147
      %p154 = scmp.eq.s32.totalorder %s32, 1
      %p155 = por %p153, %p154
      %p156 = scmp.ne.s32.totalorder %s147, %s148
      %p157 = scmp.eq.s32.totalorder %s32, 0
      %p158 = por %p156, %p157
      %p159 = scmp.ne.s32.totalorder %s147, %s148
      %p160 = scmp.eq.s32.totalorder %s33, 1
      %p161 = por %p159, %p160
      %p163 = scmp.ne.s32.totalorder %s148, %s162
      %p164 = scmp.eq.s32.totalorder %s33, 0
      %p165 = por %p163, %p164
      %s167 = sadd.s32 %s166, 1
      %p170 = scmp.eq.s32.totalorder %s27, 1
      %p171 = scmp.ne.s32.totalorder %s166, %s168
      %p172 = scmp.eq.s32.totalorder %s27, 0
      %p173 = por %p171, %p172
      %p174 = scmp.ne.s32.totalorder %s166, %s168
      %p175 = scmp.eq.s32.totalorder %s32, 1
      %p176 = por %p174, %p175
      %p177 = scmp.ne.s32.totalorder %s168, %s169
      %p178 = scmp.eq.s32.totalorder %s32, 0
      %p179 = por %p177, %p178
      %p180 = scmp.ne.s32.totalorder %s168, %s169
      %p181 = scmp.eq.s32.totalorder %s33, 1
      %p182 = por %p180, %p181
      %p184 = scmp.ne.s32.totalorder %s169, %s183
      %p185 = scmp.eq.s32.totalorder %s33, 0
      %p186 = por %p184, %p185
      %s188 = sadd.s32 %s187, 1
      %p191 = scmp.eq.s32.totalorder %s27, 1
      %p192 = scmp.ne.s32.totalorder %s187, %s189
      %p193 = scmp.eq.s32.totalorder %s27, 0
      %p194 = por %p192, %p193
      %p195 = scmp.ne.s32.totalorder %s187, %s189
      %p196 = scmp.eq.s32.totalorder %s32, 1
      %p197 = por %p195, %p196
      %p198 = scmp.ne.s32.totalorder %s189, %s190
      %p199 = scmp.eq.s32.totalorder %s32, 0
      %p200 = por %p198, %p199
      %p201 = scmp.ne.s32.totalorder %s189, %s190
      %p202 = scmp.eq.s32.totalorder %s33, 1
      %p203 = por %p201, %p202
      %p205 = scmp.ne.s32.totalorder %s190, %s204
      %p206 = scmp.eq.s32.totalorder %s33, 0
      %p207 = por %p205, %p206
      %s209 = sadd.s32 %s208, 1
      %p212 = scmp.eq.s32.totalorder %s27, 1
      %p213 = scmp.ne.s32.totalorder %s208, %s210
      %p214 = scmp.eq.s32.totalorder %s27, 0
      %p215 = por %p213, %p214
      %p216 = scmp.ne.s32.totalorder %s208, %s210
      %p217 = scmp.eq.s32.totalorder %s32, 1
      %p218 = por %p216, %p217
      %p219 = scmp.ne.s32.totalorder %s210, %s211
      %p220 = scmp.eq.s32.totalorder %s32, 0
      %p221 = por %p219, %p220
      %p222 = scmp.ne.s32.totalorder %s210, %s211
      %p223 = scmp.eq.s32.totalorder %s33, 1
      %p224 = por %p222, %p223
      %p226 = scmp.ne.s32.totalorder %s211, %s225
      %p227 = scmp.eq.s32.totalorder %s33, 0
      %p228 = por %p226, %p227
      %s230 = sadd.s32 %s229, 1
      %p233 = scmp.eq.s32.totalorder %s27, 1
      %p234 = scmp.ne.s32.totalorder %s229, %s231
      %p235 = scmp.eq.s32.totalorder %s27, 0
      %p236 = por %p234, %p235
      %p237 = scmp.ne.s32.totalorder %s229, %s231
      %p238 = scmp.eq.s32.totalorder %s32, 1
      %p239 = por %p237, %p238
      %p240 = scmp.ne.s32.totalorder %s231, %s232
      %p241 = scmp.eq.s32.totalorder %s32, 0
      %p242 = por %p240, %p241
      %p243 = scmp.ne.s32.totalorder %s231, %s232
      %p244 = scmp.eq.s32.totalorder %s33, 1
      %p245 = por %p243, %p244
      %p247 = scmp.ne.s32.totalorder %s232, %s246
      %p248 = scmp.eq.s32.totalorder %s33, 0
      %p249 = por %p247, %p248
      %s251 = sadd.s32 %s250, 1
      %p254 = scmp.eq.s32.totalorder %s27, 1
      %p255 = scmp.ne.s32.totalorder %s250, %s252
      %p256 = scmp.eq.s32.totalorder %s27, 0
      %p257 = por %p255, %p256
      %p258 = scmp.ne.s32.totalorder %s250, %s252
      %p259 = scmp.eq.s32.totalorder %s32, 1
      %p260 = por %p258, %p259
      %p261 = scmp.ne.s32.totalorder %s252, %s253
      %p262 = scmp.eq.s32.totalorder %s32, 0
      %p263 = por %p261, %p262
      %p264 = scmp.ne.s32.totalorder %s252, %s253
      %p265 = scmp.eq.s32.totalorder %s33, 1
      %p266 = por %p264, %p265
      %p268 = scmp.ne.s32.totalorder %s253, %s267
      %p269 = scmp.eq.s32.totalorder %s33, 0
      %p270 = por %p268, %p269
      %s272 = sadd.s32 %s271, 1
      %p275 = scmp.eq.s32.totalorder %s27, 1
      %p276 = scmp.ne.s32.totalorder %s271, %s273
      %p277 = scmp.eq.s32.totalorder %s27, 0
      %p278 = por %p276, %p277
      %p279 = scmp.ne.s32.totalorder %s271, %s273
      %p280 = scmp.eq.s32.totalorder %s32, 1
      %p281 = por %p279, %p280
      %p282 = scmp.ne.s32.totalorder %s273, %s274
      %p283 = scmp.eq.s32.totalorder %s32, 0
      %p284 = por %p282, %p283
      %p285 = scmp.ne.s32.totalorder %s273, %s274
      %p286 = scmp.eq.s32.totalorder %s33, 1
      %p287 = por %p285, %p286
      %p289 = scmp.ne.s32.totalorder %s274, %s288
      %p290 = scmp.eq.s32.totalorder %s33, 0
      %p291 = por %p289, %p290
      %s293 = sadd.s32 %s292, 1
      %p296 = scmp.eq.s32.totalorder %s27, 1
      %p297 = scmp.ne.s32.totalorder %s292, %s294
      %p298 = scmp.eq.s32.totalorder %s27, 0
      %p299 = por %p297, %p298
      %p300 = scmp.ne.s32.totalorder %s292, %s294
      %p301 = scmp.eq.s32.totalorder %s32, 1
      %p302 = por %p300, %p301
      %p303 = scmp.ne.s32.totalorder %s294, %s295
      %p304 = scmp.eq.s32.totalorder %s32, 0
      %p305 = por %p303, %p304
      %p306 = scmp.ne.s32.totalorder %s294, %s295
      %p307 = scmp.eq.s32.totalorder %s33, 1
      %p308 = por %p306, %p307
      %p310 = scmp.ne.s32.totalorder %s295, %s309
      %p311 = scmp.eq.s32.totalorder %s33, 0
      %p312 = por %p310, %p311
      %s314 = sadd.s32 %s313, 1
      %p317 = scmp.eq.s32.totalorder %s27, 1
      %p318 = scmp.ne.s32.totalorder %s313, %s315
      %p319 = scmp.eq.s32.totalorder %s27, 0
      %p320 = por %p318, %p319
      %p321 = scmp.ne.s32.totalorder %s313, %s315
      %p322 = scmp.eq.s32.totalorder %s32, 1
      %p323 = por %p321, %p322
      %p324 = scmp.ne.s32.totalorder %s315, %s316
      %p325 = scmp.eq.s32.totalorder %s32, 0
      %p326 = por %p324, %p325
      %p327 = scmp.ne.s32.totalorder %s315, %s316
      %p328 = scmp.eq.s32.totalorder %s33, 1
      %p329 = por %p327, %p328
      %p331 = scmp.ne.s32.totalorder %s316, %s330
      %p332 = scmp.eq.s32.totalorder %s33, 0
      %p333 = por %p331, %p332
      %s335 = sadd.s32 %s334, 1
      %p338 = scmp.eq.s32.totalorder %s27, 1
      %p339 = scmp.ne.s32.totalorder %s334, %s336
      %p340 = scmp.eq.s32.totalorder %s27, 0
      %p341 = por %p339, %p340
      %p342 = scmp.ne.s32.totalorder %s334, %s336
      %p343 = scmp.eq.s32.totalorder %s32, 1
      %p344 = por %p342, %p343
      %p345 = scmp.ne.s32.totalorder %s336, %s337
      %p346 = scmp.eq.s32.totalorder %s32, 0
      %p347 = por %p345, %p346
      %p348 = scmp.ne.s32.totalorder %s336, %s337
      %p349 = scmp.eq.s32.totalorder %s33, 1
      %p350 = por %p348, %p349
      %p352 = scmp.ne.s32.totalorder %s337, %s351
      %p353 = scmp.eq.s32.totalorder %s33, 0
      %p354 = por %p352, %p353
      %s356 = sadd.s32 %s355, 1
      %p359 = scmp.eq.s32.totalorder %s27, 1
      %p360 = scmp.ne.s32.totalorder %s355, %s357
      %p361 = scmp.eq.s32.totalorder %s27, 0
      %p362 = por %p360, %p361
      %p363 = scmp.ne.s32.totalorder %s355, %s357
      %p364 = scmp.eq.s32.totalorder %s32, 1
      %p365 = por %p363, %p364
      %p366 = scmp.ne.s32.totalorder %s357, %s358
      %p367 = scmp.eq.s32.totalorder %s32, 0
      %p368 = por %p366, %p367
      %p369 = scmp.ne.s32.totalorder %s357, %s358
      %p370 = scmp.eq.s32.totalorder %s33, 1
      %p371 = por %p369, %p370
      %p373 = scmp.ne.s32.totalorder %s358, %s372
      %p374 = scmp.eq.s32.totalorder %s33, 0
      %p375 = por %p373, %p374
      %s377 = sadd.s32 %s376, 1
      %p380 = scmp.eq.s32.totalorder %s27, 1
      %p381 = scmp.ne.s32.totalorder %s376, %s378
      %p382 = scmp.eq.s32.totalorder %s27, 0
      %p383 = por %p381, %p382
      %p384 = scmp.ne.s32.totalorder %s376, %s378
      %p385 = scmp.eq.s32.totalorder %s32, 1
      %p386 = por %p384, %p385
      %p387 = scmp.ne.s32.totalorder %s378, %s379
      %p388 = scmp.eq.s32.totalorder %s32, 0
      %p389 = por %p387, %p388
      %p390 = scmp.ne.s32.totalorder %s378, %s379
      %p391 = scmp.eq.s32.totalorder %s33, 1
      %p392 = por %p390, %p391
      %p394 = scmp.ne.s32.totalorder %s379, %s393
      %p395 = scmp.eq.s32.totalorder %s33, 0
      %p396 = por %p394, %p395
      %s398 = sadd.s32 %s397, 1
      %p401 = scmp.eq.s32.totalorder %s27, 1
      %p402 = scmp.ne.s32.totalorder %s397, %s399
      %p403 = scmp.eq.s32.totalorder %s27, 0
      %p404 = por %p402, %p403
      %p405 = scmp.ne.s32.totalorder %s397, %s399
      %p406 = scmp.eq.s32.totalorder %s32, 1
      %p407 = por %p405, %p406
      %p408 = scmp.ne.s32.totalorder %s399, %s400
      %p409 = scmp.eq.s32.totalorder %s32, 0
      %p410 = por %p408, %p409
      %p411 = scmp.ne.s32.totalorder %s399, %s400
      %p412 = scmp.eq.s32.totalorder %s33, 1
      %p413 = por %p411, %p412
      %p415 = scmp.ne.s32.totalorder %s400, %s414
      %p416 = scmp.eq.s32.totalorder %s33, 0
      %p417 = por %p415, %p416
      %s418 = ssub.s32 %s27, %s34
      %p419 = scmp.eq.s32.totalorder %s418, 0
      %s421 = sadd.s32 %s420, 1
      %s422 = scalar_select %p419, %s420, %s421
      %p425 = pneg %p419
      %p426 = scmp.eq.s32.totalorder %s27, 1
      %p427 = por %p425, %p426
      %p428 = scmp.ne.s32.totalorder %s420, %s423
      %p429 = scmp.eq.s32.totalorder %s27, 0
      %p430 = por %p428, %p429
      %p431 = scmp.ne.s32.totalorder %s420, %s423
      %p432 = scmp.eq.s32.totalorder %s32, 1
      %p433 = por %p431, %p432
      %p434 = scmp.ne.s32.totalorder %s423, %s424
      %p435 = scmp.eq.s32.totalorder %s32, 0
      %p436 = por %p434, %p435
      %p437 = scmp.ne.s32.totalorder %s423, %s424
      %p438 = scmp.eq.s32.totalorder %s33, 1
      %p439 = por %p437, %p438
      %p441 = scmp.ne.s32.totalorder %s424, %s440
      %p442 = scmp.eq.s32.totalorder %s33, 0
      %p443 = por %p441, %p442
      %p444 = scmp.le.s32.totalorder 1, %s27
      %p445 = scmp.lt.s32.totalorder %s27, 3
      %p446 = pnand %p444, %p445
      %p447 = pneg %p446
      // Predicated region
      $region9: #{transformer_encoder.1} parent=5 // pred_check
        _
      $region10: #{transformer_encoder.1} parent=5 // pred_check_branch
        %449 = sbr.rel (%p446) target = $region12
      $region11: #{transformer_encoder.1} parent=5 // pred_region
        %s450 = ssub.s32 %s27, 1
        // Predicated region
        $region13: #{transformer_encoder.1} parent=11 // pred_check
          %p451 = pneg %p74
        $region14: #{transformer_encoder.1} parent=11 // pred_check_branch
          %453 = sbr.rel (%p451) target = $region16
        $region15: #{transformer_encoder.1} parent=11 // pred_region
          _
        $region16: #{transformer_encoder.1} parent=11 // pred_fallthru
          _
        // Predicated region
        $region17: #{transformer_encoder.1} parent=11 // pred_check
          %p454 = pneg %p95
        $region18: #{transformer_encoder.1} parent=11 // pred_check_branch
          %456 = sbr.rel (%p454) target = $region20
        $region19: #{transformer_encoder.1} parent=11 // pred_region
          _
        $region20: #{transformer_encoder.1} parent=11 // pred_fallthru
          _
        // Predicated region
        $region21: #{transformer_encoder.1} parent=11 // pred_check
          %p457 = pneg %p116
        $region22: #{transformer_encoder.1} parent=11 // pred_check_branch
          %459 = sbr.rel (%p457) target = $region24
        $region23: #{transformer_encoder.1} parent=11 // pred_region
          _
        $region24: #{transformer_encoder.1} parent=11 // pred_fallthru
          _
        // Predicated region
        $region25: #{transformer_encoder.1} parent=11 // pred_check
          %p460 = pneg %p137
        $region26: #{transformer_encoder.1} parent=11 // pred_check_branch
          %462 = sbr.rel (%p460) target = $region28
        $region27: #{transformer_encoder.1} parent=11 // pred_region
          _
        $region28: #{transformer_encoder.1} parent=11 // pred_fallthru
          _
        // Predicated region
        $region29: #{transformer_encoder.1} parent=11 // pred_check
          %p463 = pneg %p158
        $region30: #{transformer_encoder.1} parent=11 // pred_check_branch
          %465 = sbr.rel (%p463) target = $region32
        $region31: #{transformer_encoder.1} parent=11 // pred_region
          _
        $region32: #{transformer_encoder.1} parent=11 // pred_fallthru
          _
        // Predicated region
        $region33: #{transformer_encoder.1} parent=11 // pred_check
          %p466 = pneg %p179
        $region34: #{transformer_encoder.1} parent=11 // pred_check_branch
          %468 = sbr.rel (%p466) target = $region36
        $region35: #{transformer_encoder.1} parent=11 // pred_region
          _
        $region36: #{transformer_encoder.1} parent=11 // pred_fallthru
          _
        // Predicated region
        $region37: #{transformer_encoder.1} parent=11 // pred_check
          %p469 = pneg %p200
        $region38: #{transformer_encoder.1} parent=11 // pred_check_branch
          %471 = sbr.rel (%p469) target = $region40
        $region39: #{transformer_encoder.1} parent=11 // pred_region
          _
        $region40: #{transformer_encoder.1} parent=11 // pred_fallthru
          _
        // Predicated region
        $region41: #{transformer_encoder.1} parent=11 // pred_check
          %p472 = pneg %p221
        $region42: #{transformer_encoder.1} parent=11 // pred_check_branch
          %474 = sbr.rel (%p472) target = $region44
        $region43: #{transformer_encoder.1} parent=11 // pred_region
          _
        $region44: #{transformer_encoder.1} parent=11 // pred_fallthru
          _
        // Predicated region
        $region45: #{transformer_encoder.1} parent=11 // pred_check
          %p475 = pneg %p242
        $region46: #{transformer_encoder.1} parent=11 // pred_check_branch
          %477 = sbr.rel (%p475) target = $region48
        $region47: #{transformer_encoder.1} parent=11 // pred_region
          _
        $region48: #{transformer_encoder.1} parent=11 // pred_fallthru
          _
        // Predicated region
        $region49: #{transformer_encoder.1} parent=11 // pred_check
          %p478 = pneg %p263
        $region50: #{transformer_encoder.1} parent=11 // pred_check_branch
          %480 = sbr.rel (%p478) target = $region52
        $region51: #{transformer_encoder.1} parent=11 // pred_region
          _
        $region52: #{transformer_encoder.1} parent=11 // pred_fallthru
          _
        // Predicated region
        $region53: #{transformer_encoder.1} parent=11 // pred_check
          %p481 = pneg %p284
        $region54: #{transformer_encoder.1} parent=11 // pred_check_branch
          %483 = sbr.rel (%p481) target = $region56
        $region55: #{transformer_encoder.1} parent=11 // pred_region
          _
        $region56: #{transformer_encoder.1} parent=11 // pred_fallthru
          _
        // Predicated region
        $region57: #{transformer_encoder.1} parent=11 // pred_check
          %p484 = pneg %p305
        $region58: #{transformer_encoder.1} parent=11 // pred_check_branch
          %486 = sbr.rel (%p484) target = $region60
        $region59: #{transformer_encoder.1} parent=11 // pred_region
          _
        $region60: #{transformer_encoder.1} parent=11 // pred_fallthru
          _
        // Predicated region
        $region61: #{transformer_encoder.1} parent=11 // pred_check
          %p487 = pneg %p326
        $region62: #{transformer_encoder.1} parent=11 // pred_check_branch
          %489 = sbr.rel (%p487) target = $region64
        $region63: #{transformer_encoder.1} parent=11 // pred_region
          _
        $region64: #{transformer_encoder.1} parent=11 // pred_fallthru
          _
        // Predicated region
        $region65: #{transformer_encoder.1} parent=11 // pred_check
          %p490 = pneg %p347
        $region66: #{transformer_encoder.1} parent=11 // pred_check_branch
          %492 = sbr.rel (%p490) target = $region68
        $region67: #{transformer_encoder.1} parent=11 // pred_region
          _
        $region68: #{transformer_encoder.1} parent=11 // pred_fallthru
          _
        // Predicated region
        $region69: #{transformer_encoder.1} parent=11 // pred_check
          %p493 = pneg %p368
        $region70: #{transformer_encoder.1} parent=11 // pred_check_branch
          %495 = sbr.rel (%p493) target = $region72
        $region71: #{transformer_encoder.1} parent=11 // pred_region
          _
        $region72: #{transformer_encoder.1} parent=11 // pred_fallthru
          _
        // Predicated region
        $region73: #{transformer_encoder.1} parent=11 // pred_check
          %p496 = pneg %p389
        $region74: #{transformer_encoder.1} parent=11 // pred_check_branch
          %498 = sbr.rel (%p496) target = $region76
        $region75: #{transformer_encoder.1} parent=11 // pred_region
          _
        $region76: #{transformer_encoder.1} parent=11 // pred_fallthru
          _
        // Predicated region
        $region77: #{transformer_encoder.1} parent=11 // pred_check
          %p499 = pneg %p410
        $region78: #{transformer_encoder.1} parent=11 // pred_check_branch
          %501 = sbr.rel (%p499) target = $region80
        $region79: #{transformer_encoder.1} parent=11 // pred_region
          _
        $region80: #{transformer_encoder.1} parent=11 // pred_fallthru
          _
      $region12: #{transformer_encoder.1} parent=5 // pred_fallthru
        _
      %p502 = scmp.lt.s32.totalorder %s27, 2
      // Predicated region
      $region81: #{transformer_encoder.1} parent=5 // pred_check
        %p503 = pneg %p502
      $region82: #{transformer_encoder.1} parent=5 // pred_check_branch
        %505 = sbr.rel (%p503) target = $region84
      $region83: #{transformer_encoder.1} parent=5 // pred_region
        // Predicated region
        $region85: #{transformer_encoder.1} parent=83 // pred_check
          %p506 = pneg %p47
        $region86: #{transformer_encoder.1} parent=83 // pred_check_branch
          %508 = sbr.rel (%p506) target = $region88
        $region87: #{transformer_encoder.1} parent=83 // pred_region
          %p509 = scmp.lt.s32.totalorder %s27, 1
          %s510 = scalar_select %p509, %s27, 1
          %s511 = smul.addr %s510, 8
          %s512 = scalar_lea.vmem %s0, %s511
        $region88: #{transformer_encoder.1} parent=83 // pred_fallthru
          _
      $region84: #{transformer_encoder.1} parent=5 // pred_fallthru
        _
      %p513 = scmp.le.s32.totalorder 1, %s27
      %p514 = scmp.lt.s32.totalorder %s27, 3
      %p515 = pnand %p513, %p514
      %p516 = pneg %p515
      // Predicated region
      $region89: #{transformer_encoder.1} parent=5 // pred_check
        _
      $region90: #{transformer_encoder.1} parent=5 // pred_check_branch
        %518 = sbr.rel (%p515) target = $region92
      $region91: #{transformer_encoder.1} parent=5 // pred_region
        %s519 = ssub.s32 %s27, 1
        %p520 = scmp.lt.s32.totalorder %s32, 1
        %s521 = scalar_select %p520, %s32, 1
        %s522 = smul.addr %s521, 8
        %s523 = scalar_lea.vmem %s0, %s522
        %p524 = pneg %p53
        %p525 = pneg %p50
        %p526 = pneg %p74
        %p527 = pneg %p71
        %p528 = pneg %p95
        %p529 = pneg %p92
        %p530 = pneg %p116
        %p531 = pneg %p113
        %p532 = pneg %p137
        %p533 = pneg %p134
        %p534 = pneg %p158
        %p535 = pneg %p155
        %p536 = pneg %p179
        %p537 = pneg %p176
        %p538 = pneg %p200
        %p539 = pneg %p197
        %p540 = pneg %p221
        %p541 = pneg %p218
        %p542 = pneg %p242
        %p543 = pneg %p239
        %p544 = pneg %p263
        %p545 = pneg %p260
        %p546 = pneg %p284
        %p547 = pneg %p281
        %p548 = pneg %p305
        %p549 = pneg %p302
        %p550 = pneg %p326
        %p551 = pneg %p323
        %p552 = pneg %p347
        %p553 = pneg %p344
        %p554 = pneg %p368
        %p555 = pneg %p365
        %p556 = pneg %p389
        %p557 = pneg %p386
        %p558 = pneg %p410
        %p559 = pneg %p407
        %p560 = pneg %p436
        %p561 = pneg %p433
        %s562 = sand.u32 %s423, 1
        %s563 = scalar_lea.sflag [#allocation3], %s562
        %s564 = sand.u32 %s423, 1
        %s565 = smul.addr %s564, 8
        %s566 = scalar_lea.vmem [#allocation2], %s565
        %p567 = scmp.lt.s32.totalorder %s32, 1
        %s568 = scalar_select %p567, %s32, 1
        %s569 = smul.addr %s568, 8
        %s570 = scalar_lea.vmem %s0, %s569
        %v571 = vld [vmem:[%s570] sm:$0xff]
        %v572 = vld [vmem:[%s1] sm:$0xff]
        %v573 = vadd.f32 %v571, %v572
        %v574 = vld [vmem:[%s2] sm:$0xff]
        %v575 = vld [vmem:[%s2 + $0x8] sm:$0xff]
        %v576 = vld [vmem:[%s2 + $0x10] sm:$0xff]
        %v577 = vld [vmem:[%s2 + $0x18] sm:$0xff]
        %v578 = vld [vmem:[%s2 + $0x20] sm:$0xff]
        %v579 = vld [vmem:[%s2 + $0x28] sm:$0xff]
        %v580 = vld [vmem:[%s2 + $0x30] sm:$0xff]
        %v581 = vld [vmem:[%s2 + $0x38] sm:$0xff]
        %v582 = vld [vmem:[%s2 + $0x40] sm:$0xff]
        %v583 = vld [vmem:[%s2 + $0x48] sm:$0xff]
        %v584 = vld [vmem:[%s2 + $0x50] sm:$0xff]
        %v585 = vld [vmem:[%s2 + $0x58] sm:$0xff]
        %v586 = vld [vmem:[%s2 + $0x60] sm:$0xff]
        %v587 = vld [vmem:[%s2 + $0x68] sm:$0xff]
        %v588 = vld [vmem:[%s2 + $0x70] sm:$0xff]
        %v589 = vld [vmem:[%s2 + $0x78] sm:$0xff]
        %v590 = vld [vmem:[%s3] sm:$0x1]
        %v591 = vld [vmem:[%s3 + $0x1] sm:$0x1]
        %v592 = vld [vmem:[%s3 + $0x2] sm:$0x1]
        %v593 = vld [vmem:[%s3 + $0x3] sm:$0x1]
        %v598 = vlaneseq
        %v599 = vshrl.u32 %v598, 7
        %v600 = vsub.s32 0, %v599
        %v601 = vrot.slane %v590, %v600
        %v602 = vlaneseq
        %v603 = vshrl.u32 %v602, 7
        %v604 = vsub.s32 0, %v603
        %v605 = vrot.slane %v591, %v604
        %v606 = vlaneseq
        %v607 = vshrl.u32 %v606, 7
        %v608 = vsub.s32 0, %v607
        %v609 = vrot.slane %v592, %v608
        %v610 = vlaneseq
        %v611 = vshrl.u32 %v610, 7
        %v612 = vsub.s32 0, %v611
        %v613 = vrot.slane %v593, %v612
        %vm618 = vcmask 261120
        %v620 = vsel %vm618, %v573, 0
        %622 = vmatprep.subr.mxu0 0.0
        %623 = vmatpush1.msra.mxu0 %v574
        %624 = vmatprep.subr.mxu0 0.0
        %625 = vmatpush1.msra.mxu0 %v575
        %626 = vmatprep.subr.mxu0 0.0
        %627 = vmatpush1.msra.mxu0 %v576
        %628 = vmatprep.subr.mxu0 0.0
        %629 = vmatpush1.msra.mxu0 %v577
        %630 = vmatprep.subr.mxu0 0.0
        %631 = vmatpush1.msra.mxu0 0.0
        %632 = vmatprep.subr.mxu0 0.0
        %633 = vmatpush1.msra.mxu0 0.0
        %634 = vmatprep.subr.mxu0 0.0
        %635 = vmatpush1.msra.mxu0 0.0
        %636 = vmatprep.subr.mxu0 0.0
        %637 = vmatpush1.msra.mxu0 0.0
        %638 = vmatprep.subr.mxu0 0.0
        %639 = vmatpush1.msra.mxu0 0.0
        %640 = vmatprep.subr.mxu0 0.0
        %641 = vmatpush1.msra.mxu0 0.0
        %642 = vmatprep.subr.mxu0 0.0
        %643 = vmatpush1.msra.mxu0 0.0
        %644 = vmatprep.subr.mxu0 0.0
        %645 = vmatpush1.msra.mxu0 0.0
        %646 = vmatprep.subr.mxu0 0.0
        %647 = vmatpush1.msra.mxu0 0.0
        %648 = vmatprep.subr.mxu0 0.0
        %649 = vmatpush1.msra.mxu0 0.0
        %650 = vmatprep.subr.mxu0 0.0
        %651 = vmatpush1.msra.mxu0 0.0
        %652 = vmatprep.subr.mxu0 0.0
        %653 = vmatpush1.msra.mxu0 0.0
        %654 = vmatprep.subr.mxu0 0.0
        %655 = vmatpush1.msra.mxu0 0.0
        %656 = vmatprep.subr.mxu0 0.0
        %657 = vmatpush1.msra.mxu0 0.0
        %658 = vmatprep.subr.mxu0 0.0
        %659 = vmatpush1.msra.mxu0 0.0
        %660 = vmatprep.subr.mxu0 0.0
        %661 = vmatpush1.msra.mxu0 0.0
        %662 = vmatprep.subr.mxu0 0.0
        %663 = vmatpush1.msra.mxu0 0.0
        %664 = vmatprep.subr.mxu0 0.0
        %665 = vmatpush1.msra.mxu0 0.0
        %666 = vmatprep.subr.mxu0 0.0
        %667 = vmatpush1.msra.mxu0 0.0
        %668 = vmatprep.subr.mxu0 0.0
        %669 = vmatpush1.msra.mxu0 0.0
        %670 = vmatprep.subr.mxu0 0.0
        %671 = vmatpush1.msra.mxu0 0.0
        %672 = vmatprep.subr.mxu0 0.0
        %673 = vmatpush1.msra.mxu0 0.0
        %674 = vmatprep.subr.mxu0 0.0
        %675 = vmatpush1.msra.mxu0 0.0
        %676 = vmatprep.subr.mxu0 0.0
        %677 = vmatpush1.msra.mxu0 0.0
        %678 = vmatprep.subr.mxu0 0.0
        %679 = vmatpush1.msra.mxu0 0.0
        %680 = vmatprep.subr.mxu0 0.0
        %681 = vmatpush1.msra.mxu0 0.0
        %682 = vmatprep.subr.mxu0 0.0
        %683 = vmatpush1.msra.mxu0 0.0
        %684 = vmatprep.subr.mxu0 0.0
        %685 = vmatpush1.msra.mxu0 0.0
        %686 = vmatprep.mubr.f32.mxu0 0.0
        %687 = vmatmul.mubr.f32.gmra.mrb[0].mxu0 %v620
        %v688 = vpop.f32.mrb[0].mxu0
        %v689 = vadd.f32 %v601, %v688
        %v690 = vpop.f32.mrb[0].mxu0
        %691 = vdwg.mxu0
        %692 = vmatprep.subr.mxu0 0.0
        %693 = vmatpush1.msra.mxu0 %v578
        %694 = vmatprep.subr.mxu0 0.0
        %695 = vmatpush1.msra.mxu0 %v579
        %696 = vmatprep.subr.mxu0 0.0
        %697 = vmatpush1.msra.mxu0 %v580
        %698 = vmatprep.subr.mxu0 0.0
        %699 = vmatpush1.msra.mxu0 %v581
        %700 = vmatprep.subr.mxu0 0.0
        %701 = vmatpush1.msra.mxu0 0.0
        %702 = vmatprep.subr.mxu0 0.0
        %703 = vmatpush1.msra.mxu0 0.0
        %704 = vmatprep.subr.mxu0 0.0
        %705 = vmatpush1.msra.mxu0 0.0
        %706 = vmatprep.subr.mxu0 0.0
        %707 = vmatpush1.msra.mxu0 0.0
        %708 = vmatprep.subr.mxu0 0.0
        %709 = vmatpush1.msra.mxu0 0.0
        %710 = vmatprep.subr.mxu0 0.0
        %711 = vmatpush1.msra.mxu0 0.0
        %712 = vmatprep.subr.mxu0 0.0
        %713 = vmatpush1.msra.mxu0 0.0
        %714 = vmatprep.subr.mxu0 0.0
        %715 = vmatpush1.msra.mxu0 0.0
        %716 = vmatprep.subr.mxu0 0.0
        %717 = vmatpush1.msra.mxu0 0.0
        %718 = vmatprep.subr.mxu0 0.0
        %719 = vmatpush1.msra.mxu0 0.0
        %720 = vmatprep.subr.mxu0 0.0
        %721 = vmatpush1.msra.mxu0 0.0
        %722 = vmatprep.subr.mxu0 0.0
        %723 = vmatpush1.msra.mxu0 0.0
        %724 = vmatprep.subr.mxu0 0.0
        %725 = vmatpush1.msra.mxu0 0.0
        %726 = vmatprep.subr.mxu0 0.0
        %727 = vmatpush1.msra.mxu0 0.0
        %728 = vmatprep.subr.mxu0 0.0
        %729 = vmatpush1.msra.mxu0 0.0
        %730 = vmatprep.subr.mxu0 0.0
        %731 = vmatpush1.msra.mxu0 0.0
        %732 = vmatprep.subr.mxu0 0.0
        %733 = vmatpush1.msra.mxu0 0.0
        %734 = vmatprep.subr.mxu0 0.0
        %735 = vmatpush1.msra.mxu0 0.0
        %736 = vmatprep.subr.mxu0 0.0
        %737 = vmatpush1.msra.mxu0 0.0
        %738 = vmatprep.subr.mxu0 0.0
        %739 = vmatpush1.msra.mxu0 0.0
        %740 = vmatprep.subr.mxu0 0.0
        %741 = vmatpush1.msra.mxu0 0.0
        %742 = vmatprep.subr.mxu0 0.0
        %743 = vmatpush1.msra.mxu0 0.0
        %744 = vmatprep.subr.mxu0 0.0
        %745 = vmatpush1.msra.mxu0 0.0
        %746 = vmatprep.subr.mxu0 0.0
        %747 = vmatpush1.msra.mxu0 0.0
        %748 = vmatprep.subr.mxu0 0.0
        %749 = vmatpush1.msra.mxu0 0.0
        %750 = vmatprep.subr.mxu0 0.0
        %751 = vmatpush1.msra.mxu0 0.0
        %752 = vmatprep.subr.mxu0 0.0
        %753 = vmatpush1.msra.mxu0 0.0
        %754 = vmatprep.subr.mxu0 0.0
        %755 = vmatpush1.msra.mxu0 0.0
        %756 = vmatprep.mubr.f32.mxu0 0.0
        %757 = vmatmul.mubr.f32.gmra.mrb[0].mxu0 %v620
        %v758 = vpop.f32.mrb[0].mxu0
        %v759 = vadd.f32 %v605, %v758
        %v760 = vpop.f32.mrb[0].mxu0
        %761 = vdwg.mxu0
        %762 = vmatprep.subr.mxu0 0.0
        %763 = vmatpush1.msra.mxu0 %v582
        %764 = vmatprep.subr.mxu0 0.0
        %765 = vmatpush1.msra.mxu0 %v583
        %766 = vmatprep.subr.mxu0 0.0
        %767 = vmatpush1.msra.mxu0 %v584
        %768 = vmatprep.subr.mxu0 0.0
        %769 = vmatpush1.msra.mxu0 %v585
        %770 = vmatprep.subr.mxu0 0.0
        %771 = vmatpush1.msra.mxu0 0.0
        %772 = vmatprep.subr.mxu0 0.0
        %773 = vmatpush1.msra.mxu0 0.0
        %774 = vmatprep.subr.mxu0 0.0
        %775 = vmatpush1.msra.mxu0 0.0
        %776 = vmatprep.subr.mxu0 0.0
        %777 = vmatpush1.msra.mxu0 0.0
        %778 = vmatprep.subr.mxu0 0.0
        %779 = vmatpush1.msra.mxu0 0.0
        %780 = vmatprep.subr.mxu0 0.0
        %781 = vmatpush1.msra.mxu0 0.0
        %782 = vmatprep.subr.mxu0 0.0
        %783 = vmatpush1.msra.mxu0 0.0
        %784 = vmatprep.subr.mxu0 0.0
        %785 = vmatpush1.msra.mxu0 0.0
        %786 = vmatprep.subr.mxu0 0.0
        %787 = vmatpush1.msra.mxu0 0.0
        %788 = vmatprep.subr.mxu0 0.0
        %789 = vmatpush1.msra.mxu0 0.0
        %790 = vmatprep.subr.mxu0 0.0
        %791 = vmatpush1.msra.mxu0 0.0
        %792 = vmatprep.subr.mxu0 0.0
        %793 = vmatpush1.msra.mxu0 0.0
        %794 = vmatprep.subr.mxu0 0.0
        %795 = vmatpush1.msra.mxu0 0.0
        %796 = vmatprep.subr.mxu0 0.0
        %797 = vmatpush1.msra.mxu0 0.0
        %798 = vmatprep.subr.mxu0 0.0
        %799 = vmatpush1.msra.mxu0 0.0
        %800 = vmatprep.subr.mxu0 0.0
        %801 = vmatpush1.msra.mxu0 0.0
        %802 = vmatprep.subr.mxu0 0.0
        %803 = vmatpush1.msra.mxu0 0.0
        %804 = vmatprep.subr.mxu0 0.0
        %805 = vmatpush1.msra.mxu0 0.0
        %806 = vmatprep.subr.mxu0 0.0
        %807 = vmatpush1.msra.mxu0 0.0
        %808 = vmatprep.subr.mxu0 0.0
        %809 = vmatpush1.msra.mxu0 0.0
        %810 = vmatprep.subr.mxu0 0.0
        %811 = vmatpush1.msra.mxu0 0.0
        %812 = vmatprep.subr.mxu0 0.0
        %813 = vmatpush1.msra.mxu0 0.0
        %814 = vmatprep.subr.mxu0 0.0
        %815 = vmatpush1.msra.mxu0 0.0
        %816 = vmatprep.subr.mxu0 0.0
        %817 = vmatpush1.msra.mxu0 0.0
        %818 = vmatprep.subr.mxu0 0.0
        %819 = vmatpush1.msra.mxu0 0.0
        %820 = vmatprep.subr.mxu0 0.0
        %821 = vmatpush1.msra.mxu0 0.0
        %822 = vmatprep.subr.mxu0 0.0
        %823 = vmatpush1.msra.mxu0 0.0
        %824 = vmatprep.subr.mxu0 0.0
        %825 = vmatpush1.msra.mxu0 0.0
        %826 = vmatprep.mubr.f32.mxu0 0.0
        %827 = vmatmul.mubr.f32.gmra.mrb[0].mxu0 %v620
        %v828 = vpop.f32.mrb[0].mxu0
        %v829 = vadd.f32 %v609, %v828
        %v830 = vpop.f32.mrb[0].mxu0
        %831 = vdwg.mxu0
        %832 = vmatprep.subr.mxu0 0.0
        %833 = vmatpush1.msra.mxu0 %v586
        %834 = vmatprep.subr.mxu0 0.0
        %835 = vmatpush1.msra.mxu0 %v587
        %836 = vmatprep.subr.mxu0 0.0
        %837 = vmatpush1.msra.mxu0 %v588
        %838 = vmatprep.subr.mxu0 0.0
        %839 = vmatpush1.msra.mxu0 %v589
        %840 = vmatprep.subr.mxu0 0.0
        %841 = vmatpush1.msra.mxu0 0.0
        %842 = vmatprep.subr.mxu0 0.0
        %843 = vmatpush1.msra.mxu0 0.0
        %844 = vmatprep.subr.mxu0 0.0
        %845 = vmatpush1.msra.mxu0 0.0
        %846 = vmatprep.subr.mxu0 0.0
        %847 = vmatpush1.msra.mxu0 0.0
        %848 = vmatprep.subr.mxu0 0.0
        %849 = vmatpush1.msra.mxu0 0.0
        %850 = vmatprep.subr.mxu0 0.0
        %851 = vmatpush1.msra.mxu0 0.0
        %852 = vmatprep.subr.mxu0 0.0
        %853 = vmatpush1.msra.mxu0 0.0
        %854 = vmatprep.subr.mxu0 0.0
        %855 = vmatpush1.msra.mxu0 0.0
        %856 = vmatprep.subr.mxu0 0.0
        %857 = vmatpush1.msra.mxu0 0.0
        %858 = vmatprep.subr.mxu0 0.0
        %859 = vmatpush1.msra.mxu0 0.0
        %860 = vmatprep.subr.mxu0 0.0
        %861 = vmatpush1.msra.mxu0 0.0
        %862 = vmatprep.subr.mxu0 0.0
        %863 = vmatpush1.msra.mxu0 0.0
        %864 = vmatprep.subr.mxu0 0.0
        %865 = vmatpush1.msra.mxu0 0.0
        %866 = vmatprep.subr.mxu0 0.0
        %867 = vmatpush1.msra.mxu0 0.0
        %868 = vmatprep.subr.mxu0 0.0
        %869 = vmatpush1.msra.mxu0 0.0
        %870 = vmatprep.subr.mxu0 0.0
        %871 = vmatpush1.msra.mxu0 0.0
        %872 = vmatprep.subr.mxu0 0.0
        %873 = vmatpush1.msra.mxu0 0.0
        %874 = vmatprep.subr.mxu0 0.0
        %875 = vmatpush1.msra.mxu0 0.0
        %876 = vmatprep.subr.mxu0 0.0
        %877 = vmatpush1.msra.mxu0 0.0
        %878 = vmatprep.subr.mxu0 0.0
        %879 = vmatpush1.msra.mxu0 0.0
        %880 = vmatprep.subr.mxu0 0.0
        %881 = vmatpush1.msra.mxu0 0.0
        %882 = vmatprep.subr.mxu0 0.0
        %883 = vmatpush1.msra.mxu0 0.0
        %884 = vmatprep.subr.mxu0 0.0
        %885 = vmatpush1.msra.mxu0 0.0
        %886 = vmatprep.subr.mxu0 0.0
        %887 = vmatpush1.msra.mxu0 0.0
        %888 = vmatprep.subr.mxu0 0.0
        %889 = vmatpush1.msra.mxu0 0.0
        %890 = vmatprep.subr.mxu0 0.0
        %891 = vmatpush1.msra.mxu0 0.0
        %892 = vmatprep.subr.mxu0 0.0
        %893 = vmatpush1.msra.mxu0 0.0
        %894 = vmatprep.subr.mxu0 0.0
        %895 = vmatpush1.msra.mxu0 0.0
        %896 = vmatprep.mubr.f32.mxu0 0.0
        %897 = vmatmul.mubr.f32.gmra.mrb[0].mxu0 %v620
        %v898 = vpop.f32.mrb[0].mxu0
        %v899 = vadd.f32 %v613, %v898
        %v900 = vpop.f32.mrb[0].mxu0
        %901 = vdwg.mxu0
        %v902 = vld [vmem:[%s4] sm:$0xff]
        %v903 = vld [vmem:[%s4 + $0x8] sm:$0xff]
        %v904 = vld [vmem:[%s4 + $0x10] sm:$0xff]
        %v905 = vld [vmem:[%s4 + $0x18] sm:$0xff]
        %v906 = vld [vmem:[%s4 + $0x20] sm:$0xff]
        %v907 = vld [vmem:[%s4 + $0x28] sm:$0xff]
        %v908 = vld [vmem:[%s4 + $0x30] sm:$0xff]
        %v909 = vld [vmem:[%s4 + $0x38] sm:$0xff]
        %v910 = vld [vmem:[%s4 + $0x40] sm:$0xff]
        %v911 = vld [vmem:[%s4 + $0x48] sm:$0xff]
        %v912 = vld [vmem:[%s4 + $0x50] sm:$0xff]
        %v913 = vld [vmem:[%s4 + $0x58] sm:$0xff]
        %v914 = vld [vmem:[%s4 + $0x60] sm:$0xff]
        %v915 = vld [vmem:[%s4 + $0x68] sm:$0xff]
        %v916 = vld [vmem:[%s4 + $0x70] sm:$0xff]
        %v917 = vld [vmem:[%s4 + $0x78] sm:$0xff]
        %v918 = vld [vmem:[%s5] sm:$0x1]
        %v919 = vld [vmem:[%s5 + $0x1] sm:$0x1]
        %v920 = vld [vmem:[%s5 + $0x2] sm:$0x1]
        %v921 = vld [vmem:[%s5 + $0x3] sm:$0x1]
        %v926 = vlaneseq
        %v927 = vshrl.u32 %v926, 7
        %v928 = vsub.s32 0, %v927
        %v929 = vrot.slane %v918, %v928
        %v930 = vlaneseq
        %v931 = vshrl.u32 %v930, 7
        %v932 = vsub.s32 0, %v931
        %v933 = vrot.slane %v919, %v932
        %v934 = vlaneseq
        %v935 = vshrl.u32 %v934, 7
        %v936 = vsub.s32 0, %v935
        %v937 = vrot.slane %v920, %v936
        %v938 = vlaneseq
        %v939 = vshrl.u32 %v938, 7
        %v940 = vsub.s32 0, %v939
        %v941 = vrot.slane %v921, %v940
        %946 = vmatprep.subr.mxu0 0.0
        %947 = vmatpush1.msra.mxu0 %v902
        %948 = vmatprep.subr.mxu0 0.0
        %949 = vmatpush1.msra.mxu0 %v903
        %950 = vmatprep.subr.mxu0 0.0
        %951 = vmatpush1.msra.mxu0 %v904
        %952 = vmatprep.subr.mxu0 0.0
        %953 = vmatpush1.msra.mxu0 %v905
        %954 = vmatprep.subr.mxu0 0.0
        %955 = vmatpush1.msra.mxu0 0.0
        %956 = vmatprep.subr.mxu0 0.0
        %957 = vmatpush1.msra.mxu0 0.0
        %958 = vmatprep.subr.mxu0 0.0
        %959 = vmatpush1.msra.mxu0 0.0
        %960 = vmatprep.subr.mxu0 0.0
        %961 = vmatpush1.msra.mxu0 0.0
        %962 = vmatprep.subr.mxu0 0.0
        %963 = vmatpush1.msra.mxu0 0.0
        %964 = vmatprep.subr.mxu0 0.0
        %965 = vmatpush1.msra.mxu0 0.0
        %966 = vmatprep.subr.mxu0 0.0
        %967 = vmatpush1.msra.mxu0 0.0
        %968 = vmatprep.subr.mxu0 0.0
        %969 = vmatpush1.msra.mxu0 0.0
        %970 = vmatprep.subr.mxu0 0.0
        %971 = vmatpush1.msra.mxu0 0.0
        %972 = vmatprep.subr.mxu0 0.0
        %973 = vmatpush1.msra.mxu0 0.0
        %974 = vmatprep.subr.mxu0 0.0
        %975 = vmatpush1.msra.mxu0 0.0
        %976 = vmatprep.subr.mxu0 0.0
        %977 = vmatpush1.msra.mxu0 0.0
        %978 = vmatprep.subr.mxu0 0.0
        %979 = vmatpush1.msra.mxu0 0.0
        %980 = vmatprep.subr.mxu0 0.0
        %981 = vmatpush1.msra.mxu0 0.0
        %982 = vmatprep.subr.mxu0 0.0
        %983 = vmatpush1.msra.mxu0 0.0
        %984 = vmatprep.subr.mxu0 0.0
        %985 = vmatpush1.msra.mxu0 0.0
        %986 = vmatprep.subr.mxu0 0.0
        %987 = vmatpush1.msra.mxu0 0.0
        %988 = vmatprep.subr.mxu0 0.0
        %989 = vmatpush1.msra.mxu0 0.0
        %990 = vmatprep.subr.mxu0 0.0
        %991 = vmatpush1.msra.mxu0 0.0
        %992 = vmatprep.subr.mxu0 0.0
        %993 = vmatpush1.msra.mxu0 0.0
        %994 = vmatprep.subr.mxu0 0.0
        %995 = vmatpush1.msra.mxu0 0.0
        %996 = vmatprep.subr.mxu0 0.0
        %997 = vmatpush1.msra.mxu0 0.0
        %998 = vmatprep.subr.mxu0 0.0
        %999 = vmatpush1.msra.mxu0 0.0
        %1000 = vmatprep.subr.mxu0 0.0
        %1001 = vmatpush1.msra.mxu0 0.0
        %1002 = vmatprep.subr.mxu0 0.0
        %1003 = vmatpush1.msra.mxu0 0.0
        %1004 = vmatprep.subr.mxu0 0.0
        %1005 = vmatpush1.msra.mxu0 0.0
        %1006 = vmatprep.subr.mxu0 0.0
        %1007 = vmatpush1.msra.mxu0 0.0
        %1008 = vmatprep.subr.mxu0 0.0
        %1009 = vmatpush1.msra.mxu0 0.0
        %1010 = vmatprep.mubr.f32.mxu0 0.0
        %1011 = vmatmul.mubr.f32.gmra.mrb[0].mxu0 %v620
        %v1012 = vpop.f32.mrb[0].mxu0
        %v1013 = vadd.f32 %v929, %v1012
        %v1014 = vpop.f32.mrb[0].mxu0
        %1015 = vdwg.mxu0
        %1016 = vmatprep.subr.mxu0 0.0
        %1017 = vmatpush1.msra.mxu0 %v906
        %1018 = vmatprep.subr.mxu0 0.0
        %1019 = vmatpush1.msra.mxu0 %v907
        %1020 = vmatprep.subr.mxu0 0.0
        %1021 = vmatpush1.msra.mxu0 %v908
        %1022 = vmatprep.subr.mxu0 0.0
        %1023 = vmatpush1.msra.mxu0 %v909
        %1024 = vmatprep.subr.mxu0 0.0
        %1025 = vmatpush1.msra.mxu0 0.0
        %1026 = vmatprep.subr.mxu0 0.0
        %1027 = vmatpush1.msra.mxu0 0.0
        %1028 = vmatprep.subr.mxu0 0.0
        %1029 = vmatpush1.msra.mxu0 0.0
        %1030 = vmatprep.subr.mxu0 0.0
        %1031 = vmatpush1.msra.mxu0 0.0
        %1032 = vmatprep.subr.mxu0 0.0
        %1033 = vmatpush1.msra.mxu0 0.0
        %1034 = vmatprep.subr.mxu0 0.0
        %1035 = vmatpush1.msra.mxu0 0.0
        %1036 = vmatprep.subr.mxu0 0.0
        %1037 = vmatpush1.msra.mxu0 0.0
        %1038 = vmatprep.subr.mxu0 0.0
        %1039 = vmatpush1.msra.mxu0 0.0
        %1040 = vmatprep.subr.mxu0 0.0
        %1041 = vmatpush1.msra.mxu0 0.0
        %1042 = vmatprep.subr.mxu0 0.0
        %1043 = vmatpush1.msra.mxu0 0.0
        %1044 = vmatprep.subr.mxu0 0.0
        %1045 = vmatpush1.msra.mxu0 0.0
        %1046 = vmatprep.subr.mxu0 0.0
        %1047 = vmatpush1.msra.mxu0 0.0
        %1048 = vmatprep.subr.mxu0 0.0
        %1049 = vmatpush1.msra.mxu0 0.0
        %1050 = vmatprep.subr.mxu0 0.0
        %1051 = vmatpush1.msra.mxu0 0.0
        %1052 = vmatprep.subr.mxu0 0.0
        %1053 = vmatpush1.msra.mxu0 0.0
        %1054 = vmatprep.subr.mxu0 0.0
        %1055 = vmatpush1.msra.mxu0 0.0
        %1056 = vmatprep.subr.mxu0 0.0
        %1057 = vmatpush1.msra.mxu0 0.0
        %1058 = vmatprep.subr.mxu0 0.0
        %1059 = vmatpush1.msra.mxu0 0.0
        %1060 = vmatprep.subr.mxu0 0.0
        %1061 = vmatpush1.msra.mxu0 0.0
        %1062 = vmatprep.subr.mxu0 0.0
        %1063 = vmatpush1.msra.mxu0 0.0
        %1064 = vmatprep.subr.mxu0 0.0
        %1065 = vmatpush1.msra.mxu0 0.0
        %1066 = vmatprep.subr.mxu0 0.0
        %1067 = vmatpush1.msra.mxu0 0.0
        %1068 = vmatprep.subr.mxu0 0.0
        %1069 = vmatpush1.msra.mxu0 0.0
        %1070 = vmatprep.subr.mxu0 0.0
        %1071 = vmatpush1.msra.mxu0 0.0
        %1072 = vmatprep.subr.mxu0 0.0
        %1073 = vmatpush1.msra.mxu0 0.0
        %1074 = vmatprep.subr.mxu0 0.0
        %1075 = vmatpush1.msra.mxu0 0.0
        %1076 = vmatprep.subr.mxu0 0.0
        %1077 = vmatpush1.msra.mxu0 0.0
        %1078 = vmatprep.subr.mxu0 0.0
        %1079 = vmatpush1.msra.mxu0 0.0
        %1080 = vmatprep.mubr.f32.mxu0 0.0
        %1081 = vmatmul.mubr.f32.gmra.mrb[0].mxu0 %v620
        %v1082 = vpop.f32.mrb[0].mxu0
        %v1083 = vadd.f32 %v933, %v1082
        %v1084 = vpop.f32.mrb[0].mxu0
        %1085 = vdwg.mxu0
        %1086 = vmatprep.subr.mxu0 0.0
        %1087 = vmatpush1.msra.mxu0 %v910
        %1088 = vmatprep.subr.mxu0 0.0
        %1089 = vmatpush1.msra.mxu0 %v911
        %1090 = vmatprep.subr.mxu0 0.0
        %1091 = vmatpush1.msra.mxu0 %v912
        %1092 = vmatprep.subr.mxu0 0.0
        %1093 = vmatpush1.msra.mxu0 %v913
        %1094 = vmatprep.subr.mxu0 0.0
        %1095 = vmatpush1.msra.mxu0 0.0
        %1096 = vmatprep.subr.mxu0 0.0
        %1097 = vmatpush1.msra.mxu0 0.0
        %1098 = vmatprep.subr.mxu0 0.0
        %1099 = vmatpush1.msra.mxu0 0.0
        %1100 = vmatprep.subr.mxu0 0.0
        %1101 = vmatpush1.msra.mxu0 0.0
        %1102 = vmatprep.subr.mxu0 0.0
        %1103 = vmatpush1.msra.mxu0 0.0
        %1104 = vmatprep.subr.mxu0 0.0
        %1105 = vmatpush1.msra.mxu0 0.0
        %1106 = vmatprep.subr.mxu0 0.0
        %1107 = vmatpush1.msra.mxu0 0.0
        %1108 = vmatprep.subr.mxu0 0.0
        %1109 = vmatpush1.msra.mxu0 0.0
        %1110 = vmatprep.subr.mxu0 0.0
        %1111 = vmatpush1.msra.mxu0 0.0
        %1112 = vmatprep.subr.mxu0 0.0
        %1113 = vmatpush1.msra.mxu0 0.0
        %1114 = vmatprep.subr.mxu0 0.0
        %1115 = vmatpush1.msra.mxu0 0.0
        %1116 = vmatprep.subr.mxu0 0.0
        %1117 = vmatpush1.msra.mxu0 0.0
        %1118 = vmatprep.subr.mxu0 0.0
        %1119 = vmatpush1.msra.mxu0 0.0
        %1120 = vmatprep.subr.mxu0 0.0
        %1121 = vmatpush1.msra.mxu0 0.0
        %1122 = vmatprep.subr.mxu0 0.0
        %1123 = vmatpush1.msra.mxu0 0.0
        %1124 = vmatprep.subr.mxu0 0.0
        %1125 = vmatpush1.msra.mxu0 0.0
        %1126 = vmatprep.subr.mxu0 0.0
        %1127 = vmatpush1.msra.mxu0 0.0
        %1128 = vmatprep.subr.mxu0 0.0
        %1129 = vmatpush1.msra.mxu0 0.0
        %1130 = vmatprep.subr.mxu0 0.0
        %1131 = vmatpush1.msra.mxu0 0.0
        %1132 = vmatprep.subr.mxu0 0.0
        %1133 = vmatpush1.msra.mxu0 0.0
        %1134 = vmatprep.subr.mxu0 0.0
        %1135 = vmatpush1.msra.mxu0 0.0
        %1136 = vmatprep.subr.mxu0 0.0
        %1137 = vmatpush1.msra.mxu0 0.0
        %1138 = vmatprep.subr.mxu0 0.0
        %1139 = vmatpush1.msra.mxu0 0.0
        %1140 = vmatprep.subr.mxu0 0.0
        %1141 = vmatpush1.msra.mxu0 0.0
        %1142 = vmatprep.subr.mxu0 0.0
        %1143 = vmatpush1.msra.mxu0 0.0
        %1144 = vmatprep.subr.mxu0 0.0
        %1145 = vmatpush1.msra.mxu0 0.0
        %1146 = vmatprep.subr.mxu0 0.0
        %1147 = vmatpush1.msra.mxu0 0.0
        %1148 = vmatprep.subr.mxu0 0.0
        %1149 = vmatpush1.msra.mxu0 0.0
        %1150 = vmatprep.mubr.f32.mxu0 0.0
        %1151 = vmatmul.mubr.f32.gmra.mrb[0].mxu0 %v620
        %v1152 = vpop.f32.mrb[0].mxu0
        %v1153 = vadd.f32 %v937, %v1152
        %v1154 = vpop.f32.mrb[0].mxu0
        %1155 = vdwg.mxu0
        %1156 = vmatprep.subr.mxu0 0.0
        %1157 = vmatpush1.msra.mxu0 %v914
        %1158 = vmatprep.subr.mxu0 0.0
        %1159 = vmatpush1.msra.mxu0 %v915
        %1160 = vmatprep.subr.mxu0 0.0
        %1161 = vmatpush1.msra.mxu0 %v916
        %1162 = vmatprep.subr.mxu0 0.0
        %1163 = vmatpush1.msra.mxu0 %v917
        %1164 = vmatprep.subr.mxu0 0.0
        %1165 = vmatpush1.msra.mxu0 0.0
        %1166 = vmatprep.subr.mxu0 0.0
        %1167 = vmatpush1.msra.mxu0 0.0
        %1168 = vmatprep.subr.mxu0 0.0
        %1169 = vmatpush1.msra.mxu0 0.0
        %1170 = vmatprep.subr.mxu0 0.0
        %1171 = vmatpush1.msra.mxu0 0.0
        %1172 = vmatprep.subr.mxu0 0.0
        %1173 = vmatpush1.msra.mxu0 0.0
        %1174 = vmatprep.subr.mxu0 0.0
        %1175 = vmatpush1.msra.mxu0 0.0
        %1176 = vmatprep.subr.mxu0 0.0
        %1177 = vmatpush1.msra.mxu0 0.0
        %1178 = vmatprep.subr.mxu0 0.0
        %1179 = vmatpush1.msra.mxu0 0.0
        %1180 = vmatprep.subr.mxu0 0.0
        %1181 = vmatpush1.msra.mxu0 0.0
        %1182 = vmatprep.subr.mxu0 0.0
        %1183 = vmatpush1.msra.mxu0 0.0
        %1184 = vmatprep.subr.mxu0 0.0
        %1185 = vmatpush1.msra.mxu0 0.0
        %1186 = vmatprep.subr.mxu0 0.0
        %1187 = vmatpush1.msra.mxu0 0.0
        %1188 = vmatprep.subr.mxu0 0.0
        %1189 = vmatpush1.msra.mxu0 0.0
        %1190 = vmatprep.subr.mxu0 0.0
        %1191 = vmatpush1.msra.mxu0 0.0
        %1192 = vmatprep.subr.mxu0 0.0
        %1193 = vmatpush1.msra.mxu0 0.0
        %1194 = vmatprep.subr.mxu0 0.0
        %1195 = vmatpush1.msra.mxu0 0.0
        %1196 = vmatprep.subr.mxu0 0.0
        %1197 = vmatpush1.msra.mxu0 0.0
        %1198 = vmatprep.subr.mxu0 0.0
        %1199 = vmatpush1.msra.mxu0 0.0
        %1200 = vmatprep.subr.mxu0 0.0
        %1201 = vmatpush1.msra.mxu0 0.0
        %1202 = vmatprep.subr.mxu0 0.0
        %1203 = vmatpush1.msra.mxu0 0.0
        %1204 = vmatprep.subr.mxu0 0.0
        %1205 = vmatpush1.msra.mxu0 0.0
        %1206 = vmatprep.subr.mxu0 0.0
        %1207 = vmatpush1.msra.mxu0 0.0
        %1208 = vmatprep.subr.mxu0 0.0
        %1209 = vmatpush1.msra.mxu0 0.0
        %1210 = vmatprep.subr.mxu0 0.0
        %1211 = vmatpush1.msra.mxu0 0.0
        %1212 = vmatprep.subr.mxu0 0.0
        %1213 = vmatpush1.msra.mxu0 0.0
        %1214 = vmatprep.subr.mxu0 0.0
        %1215 = vmatpush1.msra.mxu0 0.0
        %1216 = vmatprep.subr.mxu0 0.0
        %1217 = vmatpush1.msra.mxu0 0.0
        %1218 = vmatprep.subr.mxu0 0.0
        %1219 = vmatpush1.msra.mxu0 0.0
        %1220 = vmatprep.mubr.f32.mxu0 0.0
        %1221 = vmatmul.mubr.f32.gmra.mrb[0].mxu0 %v620
        %v1222 = vpop.f32.mrb[0].mxu0
        %v1223 = vadd.f32 %v941, %v1222
        %v1224 = vpop.f32.mrb[0].mxu0
        %1225 = vdwg.mxu0
        %v1226 = vld [vmem:[%s6] sm:$0xff]
        %v1227 = vld [vmem:[%s6 + $0x8] sm:$0xff]
        %v1228 = vld [vmem:[%s6 + $0x10] sm:$0xff]
        %v1229 = vld [vmem:[%s6 + $0x18] sm:$0xff]
        %v1230 = vld [vmem:[%s6 + $0x20] sm:$0xff]
        %v1231 = vld [vmem:[%s6 + $0x28] sm:$0xff]
        %v1232 = vld [vmem:[%s6 + $0x30] sm:$0xff]
        %v1233 = vld [vmem:[%s6 + $0x38] sm:$0xff]
        %v1234 = vld [vmem:[%s6 + $0x40] sm:$0xff]
        %v1235 = vld [vmem:[%s6 + $0x48] sm:$0xff]
        %v1236 = vld [vmem:[%s6 + $0x50] sm:$0xff]
        %v1237 = vld [vmem:[%s6 + $0x58] sm:$0xff]
        %v1238 = vld [vmem:[%s6 + $0x60] sm:$0xff]
        %v1239 = vld [vmem:[%s6 + $0x68] sm:$0xff]
        %v1240 = vld [vmem:[%s6 + $0x70] sm:$0xff]
        %v1241 = vld [vmem:[%s6 + $0x78] sm:$0xff]
        %v1242 = vld [vmem:[%s7] sm:$0x1]
        %v1243 = vld [vmem:[%s7 + $0x1] sm:$0x1]
        %v1244 = vld [vmem:[%s7 + $0x2] sm:$0x1]
        %v1245 = vld [vmem:[%s7 + $0x3] sm:$0x1]
        %v1250 = vlaneseq
        %v1251 = vshrl.u32 %v1250, 7
        %v1252 = vsub.s32 0, %v1251
        %v1253 = vrot.slane %v1242, %v1252
        %v1254 = vlaneseq
        %v1255 = vshrl.u32 %v1254, 7
        %v1256 = vsub.s32 0, %v1255
        %v1257 = vrot.slane %v1243, %v1256
        %v1258 = vlaneseq
        %v1259 = vshrl.u32 %v1258, 7
        %v1260 = vsub.s32 0, %v1259
        %v1261 = vrot.slane %v1244, %v1260
        %v1262 = vlaneseq
        %v1263 = vshrl.u32 %v1262, 7
        %v1264 = vsub.s32 0, %v1263
        %v1265 = vrot.slane %v1245, %v1264
        %1270 = vmatprep.subr.mxu0 0.0
        %1271 = vmatpush1.msra.mxu0 %v1226
        %1272 = vmatprep.subr.mxu0 0.0
        %1273 = vmatpush1.msra.mxu0 %v1227
        %1274 = vmatprep.subr.mxu0 0.0
        %1275 = vmatpush1.msra.mxu0 %v1228
        %1276 = vmatprep.subr.mxu0 0.0
        %1277 = vmatpush1.msra.mxu0 %v1229
        %1278 = vmatprep.subr.mxu0 0.0
        %1279 = vmatpush1.msra.mxu0 0.0
        %1280 = vmatprep.subr.mxu0 0.0
        %1281 = vmatpush1.msra.mxu0 0.0
        %1282 = vmatprep.subr.mxu0 0.0
        %1283 = vmatpush1.msra.mxu0 0.0
        %1284 = vmatprep.subr.mxu0 0.0
        %1285 = vmatpush1.msra.mxu0 0.0
        %1286 = vmatprep.subr.mxu0 0.0
        %1287 = vmatpush1.msra.mxu0 0.0
        %1288 = vmatprep.subr.mxu0 0.0
        %1289 = vmatpush1.msra.mxu0 0.0
        %1290 = vmatprep.subr.mxu0 0.0
        %1291 = vmatpush1.msra.mxu0 0.0
        %1292 = vmatprep.subr.mxu0 0.0
        %1293 = vmatpush1.msra.mxu0 0.0
        %1294 = vmatprep.subr.mxu0 0.0
        %1295 = vmatpush1.msra.mxu0 0.0
        %1296 = vmatprep.subr.mxu0 0.0
        %1297 = vmatpush1.msra.mxu0 0.0
        %1298 = vmatprep.subr.mxu0 0.0
        %1299 = vmatpush1.msra.mxu0 0.0
        %1300 = vmatprep.subr.mxu0 0.0
        %1301 = vmatpush1.msra.mxu0 0.0
        %1302 = vmatprep.subr.mxu0 0.0
        %1303 = vmatpush1.msra.mxu0 0.0
        %1304 = vmatprep.subr.mxu0 0.0
        %1305 = vmatpush1.msra.mxu0 0.0
        %1306 = vmatprep.subr.mxu0 0.0
        %1307 = vmatpush1.msra.mxu0 0.0
        %1308 = vmatprep.subr.mxu0 0.0
        %1309 = vmatpush1.msra.mxu0 0.0
        %1310 = vmatprep.subr.mxu0 0.0
        %1311 = vmatpush1.msra.mxu0 0.0
        %1312 = vmatprep.subr.mxu0 0.0
        %1313 = vmatpush1.msra.mxu0 0.0
        %1314 = vmatprep.subr.mxu0 0.0
        %1315 = vmatpush1.msra.mxu0 0.0
        %1316 = vmatprep.subr.mxu0 0.0
        %1317 = vmatpush1.msra.mxu0 0.0
        %1318 = vmatprep.subr.mxu0 0.0
        %1319 = vmatpush1.msra.mxu0 0.0
        %1320 = vmatprep.subr.mxu0 0.0
        %1321 = vmatpush1.msra.mxu0 0.0
        %1322 = vmatprep.subr.mxu0 0.0
        %1323 = vmatpush1.msra.mxu0 0.0
        %1324 = vmatprep.subr.mxu0 0.0
        %1325 = vmatpush1.msra.mxu0 0.0
        %1326 = vmatprep.subr.mxu0 0.0
        %1327 = vmatpush1.msra.mxu0 0.0
        %1328 = vmatprep.subr.mxu0 0.0
        %1329 = vmatpush1.msra.mxu0 0.0
        %1330 = vmatprep.subr.mxu0 0.0
        %1331 = vmatpush1.msra.mxu0 0.0
        %1332 = vmatprep.subr.mxu0 0.0
        %1333 = vmatpush1.msra.mxu0 0.0
        %1334 = vmatprep.mubr.f32.mxu0 0.0
        %1335 = vmatmul.mubr.f32.gmra.mrb[0].mxu0 %v620
        %v1336 = vpop.f32.mrb[0].mxu0
        %v1337 = vadd.f32 %v1253, %v1336
        %v1338 = vpop.f32.mrb[0].mxu0
        %1339 = vdwg.mxu0
        %1340 = vmatprep.subr.mxu0 0.0
        %1341 = vmatpush1.msra.mxu0 %v1230
        %1342 = vmatprep.subr.mxu0 0.0
        %1343 = vmatpush1.msra.mxu0 %v1231
        %1344 = vmatprep.subr.mxu0 0.0
        %1345 = vmatpush1.msra.mxu0 %v1232
        %1346 = vmatprep.subr.mxu0 0.0
        %1347 = vmatpush1.msra.mxu0 %v1233
        %1348 = vmatprep.subr.mxu0 0.0
        %1349 = vmatpush1.msra.mxu0 0.0
        %1350 = vmatprep.subr.mxu0 0.0
        %1351 = vmatpush1.msra.mxu0 0.0
        %1352 = vmatprep.subr.mxu0 0.0
        %1353 = vmatpush1.msra.mxu0 0.0
        %1354 = vmatprep.subr.mxu0 0.0
        %1355 = vmatpush1.msra.mxu0 0.0
        %1356 = vmatprep.subr.mxu0 0.0
        %1357 = vmatpush1.msra.mxu0 0.0
        %1358 = vmatprep.subr.mxu0 0.0
        %1359 = vmatpush1.msra.mxu0 0.0
        %1360 = vmatprep.subr.mxu0 0.0
        %1361 = vmatpush1.msra.mxu0 0.0
        %1362 = vmatprep.subr.mxu0 0.0
        %1363 = vmatpush1.msra.mxu0 0.0
        %1364 = vmatprep.subr.mxu0 0.0
        %1365 = vmatpush1.msra.mxu0 0.0
        %1366 = vmatprep.subr.mxu0 0.0
        %1367 = vmatpush1.msra.mxu0 0.0
        %1368 = vmatprep.subr.mxu0 0.0
        %1369 = vmatpush1.msra.mxu0 0.0
        %1370 = vmatprep.subr.mxu0 0.0
        %1371 = vmatpush1.msra.mxu0 0.0
        %1372 = vmatprep.subr.mxu0 0.0
        %1373 = vmatpush1.msra.mxu0 0.0
        %1374 = vmatprep.subr.mxu0 0.0
        %1375 = vmatpush1.msra.mxu0 0.0
        %1376 = vmatprep.subr.mxu0 0.0
        %1377 = vmatpush1.msra.mxu0 0.0
        %1378 = vmatprep.subr.mxu0 0.0
        %1379 = vmatpush1.msra.mxu0 0.0
        %1380 = vmatprep.subr.mxu0 0.0
        %1381 = vmatpush1.msra.mxu0 0.0
        %1382 = vmatprep.subr.mxu0 0.0
        %1383 = vmatpush1.msra.mxu0 0.0
        %1384 = vmatprep.subr.mxu0 0.0
        %1385 = vmatpush1.msra.mxu0 0.0
        %1386 = vmatprep.subr.mxu0 0.0
        %1387 = vmatpush1.msra.mxu0 0.0
        %1388 = vmatprep.subr.mxu0 0.0
        %1389 = vmatpush1.msra.mxu0 0.0
        %1390 = vmatprep.subr.mxu0 0.0
        %1391 = vmatpush1.msra.mxu0 0.0
        %1392 = vmatprep.subr.mxu0 0.0
        %1393 = vmatpush1.msra.mxu0 0.0
        %1394 = vmatprep.subr.mxu0 0.0
        %1395 = vmatpush1.msra.mxu0 0.0
        %1396 = vmatprep.subr.mxu0 0.0
        %1397 = vmatpush1.msra.mxu0 0.0
        %1398 = vmatprep.subr.mxu0 0.0
        %1399 = vmatpush1.msra.mxu0 0.0
        %1400 = vmatprep.subr.mxu0 0.0
        %1401 = vmatpush1.msra.mxu0 0.0
        %1402 = vmatprep.subr.mxu0 0.0
        %1403 = vmatpush1.msra.mxu0 0.0
        %1404 = vmatprep.mubr.f32.mxu0 0.0
        %1405 = vmatmul.mubr.f32.gmra.mrb[0].mxu0 %v620
        %v1406 = vpop.f32.mrb[0].mxu0
        %v1407 = vadd.f32 %v1257, %v1406
        %v1408 = vpop.f32.mrb[0].mxu0
        %1409 = vdwg.mxu0
        %1410 = vmatprep.subr.mxu0 0.0
        %1411 = vmatpush1.msra.mxu0 %v1234
        %1412 = vmatprep.subr.mxu0 0.0
        %1413 = vmatpush1.msra.mxu0 %v1235
        %1414 = vmatprep.subr.mxu0 0.0
        %1415 = vmatpush1.msra.mxu0 %v1236
        %1416 = vmatprep.subr.mxu0 0.0
        %1417 = vmatpush1.msra.mxu0 %v1237
        %1418 = vmatprep.subr.mxu0 0.0
        %1419 = vmatpush1.msra.mxu0 0.0
        %1420 = vmatprep.subr.mxu0 0.0
        %1421 = vmatpush1.msra.mxu0 0.0
        %1422 = vmatprep.subr.mxu0 0.0
        %1423 = vmatpush1.msra.mxu0 0.0
        %1424 = vmatprep.subr.mxu0 0.0
        %1425 = vmatpush1.msra.mxu0 0.0
        %1426 = vmatprep.subr.mxu0 0.0
        %1427 = vmatpush1.msra.mxu0 0.0
        %1428 = vmatprep.subr.mxu0 0.0
        %1429 = vmatpush1.msra.mxu0 0.0
        %1430 = vmatprep.subr.mxu0 0.0
        %1431 = vmatpush1.msra.mxu0 0.0
        %1432 = vmatprep.subr.mxu0 0.0
        %1433 = vmatpush1.msra.mxu0 0.0
        %1434 = vmatprep.subr.mxu0 0.0
        %1435 = vmatpush1.msra.mxu0 0.0
        %1436 = vmatprep.subr.mxu0 0.0
        %1437 = vmatpush1.msra.mxu0 0.0
        %1438 = vmatprep.subr.mxu0 0.0
        %1439 = vmatpush1.msra.mxu0 0.0
        %1440 = vmatprep.subr.mxu0 0.0
        %1441 = vmatpush1.msra.mxu0 0.0
        %1442 = vmatprep.subr.mxu0 0.0
        %1443 = vmatpush1.msra.mxu0 0.0
        %1444 = vmatprep.subr.mxu0 0.0
        %1445 = vmatpush1.msra.mxu0 0.0
        %1446 = vmatprep.subr.mxu0 0.0
        %1447 = vmatpush1.msra.mxu0 0.0
        %1448 = vmatprep.subr.mxu0 0.0
        %1449 = vmatpush1.msra.mxu0 0.0
        %1450 = vmatprep.subr.mxu0 0.0
        %1451 = vmatpush1.msra.mxu0 0.0
        %1452 = vmatprep.subr.mxu0 0.0
        %1453 = vmatpush1.msra.mxu0 0.0
        %1454 = vmatprep.subr.mxu0 0.0
        %1455 = vmatpush1.msra.mxu0 0.0
        %1456 = vmatprep.subr.mxu0 0.0
        %1457 = vmatpush1.msra.mxu0 0.0
        %1458 = vmatprep.subr.mxu0 0.0
        %1459 = vmatpush1.msra.mxu0 0.0
        %1460 = vmatprep.subr.mxu0 0.0
        %1461 = vmatpush1.msra.mxu0 0.0
        %1462 = vmatprep.subr.mxu0 0.0
        %1463 = vmatpush1.msra.mxu0 0.0
        %1464 = vmatprep.subr.mxu0 0.0
        %1465 = vmatpush1.msra.mxu0 0.0
        %1466 = vmatprep.subr.mxu0 0.0
        %1467 = vmatpush1.msra.mxu0 0.0
        %1468 = vmatprep.subr.mxu0 0.0
        %1469 = vmatpush1.msra.mxu0 0.0
        %1470 = vmatprep.subr.mxu0 0.0
        %1471 = vmatpush1.msra.mxu0 0.0
        %1472 = vmatprep.subr.mxu0 0.0
        %1473 = vmatpush1.msra.mxu0 0.0
        %1474 = vmatprep.mubr.f32.mxu0 0.0
        %1475 = vmatmul.mubr.f32.gmra.mrb[0].mxu0 %v620
        %v1476 = vpop.f32.mrb[0].mxu0
        %v1477 = vadd.f32 %v1261, %v1476
        %v1478 = vpop.f32.mrb[0].mxu0
        %1479 = vdwg.mxu0
        %1480 = vmatprep.subr.mxu0 0.0
        %1481 = vmatpush1.msra.mxu0 %v1238
        %1482 = vmatprep.subr.mxu0 0.0
        %1483 = vmatpush1.msra.mxu0 %v1239
        %1484 = vmatprep.subr.mxu0 0.0
        %1485 = vmatpush1.msra.mxu0 %v1240
        %1486 = vmatprep.subr.mxu0 0.0
        %1487 = vmatpush1.msra.mxu0 %v1241
        %1488 = vmatprep.subr.mxu0 0.0
        %1489 = vmatpush1.msra.mxu0 0.0
        %1490 = vmatprep.subr.mxu0 0.0
        %1491 = vmatpush1.msra.mxu0 0.0
        %1492 = vmatprep.subr.mxu0 0.0
        %1493 = vmatpush1.msra.mxu0 0.0
        %1494 = vmatprep.subr.mxu0 0.0
        %1495 = vmatpush1.msra.mxu0 0.0
        %1496 = vmatprep.subr.mxu0 0.0
        %1497 = vmatpush1.msra.mxu0 0.0
        %1498 = vmatprep.subr.mxu0 0.0
        %1499 = vmatpush1.msra.mxu0 0.0
        %1500 = vmatprep.subr.mxu0 0.0
        %1501 = vmatpush1.msra.mxu0 0.0
        %1502 = vmatprep.subr.mxu0 0.0
        %1503 = vmatpush1.msra.mxu0 0.0
        %1504 = vmatprep.subr.mxu0 0.0
        %1505 = vmatpush1.msra.mxu0 0.0
        %1506 = vmatprep.subr.mxu0 0.0
        %1507 = vmatpush1.msra.mxu0 0.0
        %1508 = vmatprep.subr.mxu0 0.0
        %1509 = vmatpush1.msra.mxu0 0.0
        %1510 = vmatprep.subr.mxu0 0.0
        %1511 = vmatpush1.msra.mxu0 0.0
        %1512 = vmatprep.subr.mxu0 0.0
        %1513 = vmatpush1.msra.mxu0 0.0
        %1514 = vmatprep.subr.mxu0 0.0
        %1515 = vmatpush1.msra.mxu0 0.0
        %1516 = vmatprep.subr.mxu0 0.0
        %1517 = vmatpush1.msra.mxu0 0.0
        %1518 = vmatprep.subr.mxu0 0.0
        %1519 = vmatpush1.msra.mxu0 0.0
        %1520 = vmatprep.subr.mxu0 0.0
        %1521 = vmatpush1.msra.mxu0 0.0
        %1522 = vmatprep.subr.mxu0 0.0
        %1523 = vmatpush1.msra.mxu0 0.0
        %1524 = vmatprep.subr.mxu0 0.0
        %1525 = vmatpush1.msra.mxu0 0.0
        %1526 = vmatprep.subr.mxu0 0.0
        %1527 = vmatpush1.msra.mxu0 0.0
        %1528 = vmatprep.subr.mxu0 0.0
        %1529 = vmatpush1.msra.mxu0 0.0
        %1530 = vmatprep.subr.mxu0 0.0
        %1531 = vmatpush1.msra.mxu0 0.0
        %1532 = vmatprep.subr.mxu0 0.0
        %1533 = vmatpush1.msra.mxu0 0.0
        %1534 = vmatprep.subr.mxu0 0.0
        %1535 = vmatpush1.msra.mxu0 0.0
        %1536 = vmatprep.subr.mxu0 0.0
        %1537 = vmatpush1.msra.mxu0 0.0
        %1538 = vmatprep.subr.mxu0 0.0
        %1539 = vmatpush1.msra.mxu0 0.0
        %1540 = vmatprep.subr.mxu0 0.0
        %1541 = vmatpush1.msra.mxu0 0.0
        %1542 = vmatprep.subr.mxu0 0.0
        %1543 = vmatpush1.msra.mxu0 0.0
        %1544 = vmatprep.mubr.f32.mxu0 0.0
        %1545 = vmatmul.mubr.f32.gmra.mrb[0].mxu0 %v620
        %v1546 = vpop.f32.mrb[0].mxu0
        %v1547 = vadd.f32 %v1265, %v1546
        %v1548 = vpop.f32.mrb[0].mxu0
        %1549 = vdwg.mxu0
        %vm1550 = vcmask 64512
        %v1552 = vsel %vm1550, %v689, 0
        %v1555 = vsel %vm1550, %v1013, 0
        %1557 = vmatprep.subr.mxu0 0.0
        %1558 = vmatpush1.xpose.msra.mxu0 %v1555
        %1559 = vmatprep.subr.mxu0 0.0
        %1560 = vmatpush1.xpose.msra.mxu0 0.0
        %1561 = vmatprep.subr.mxu0 0.0
        %1562 = vmatpush1.xpose.msra.mxu0 0.0
        %1563 = vmatprep.subr.mxu0 0.0
        %1564 = vmatpush1.xpose.msra.mxu0 0.0
        %1565 = vmatprep.subr.mxu0 0.0
        %1566 = vmatpush1.xpose.msra.mxu0 0.0
        %1567 = vmatprep.subr.mxu0 0.0
        %1568 = vmatpush1.xpose.msra.mxu0 0.0
        %1569 = vmatprep.subr.mxu0 0.0
        %1570 = vmatpush1.xpose.msra.mxu0 0.0
        %1571 = vmatprep.subr.mxu0 0.0
        %1572 = vmatpush1.xpose.msra.mxu0 0.0
        %1573 = vmatprep.subr.mxu0 0.0
        %1574 = vmatpush1.xpose.msra.mxu0 0.0
        %1575 = vmatprep.subr.mxu0 0.0
        %1576 = vmatpush1.xpose.msra.mxu0 0.0
        %1577 = vmatprep.subr.mxu0 0.0
        %1578 = vmatpush1.xpose.msra.mxu0 0.0
        %1579 = vmatprep.subr.mxu0 0.0
        %1580 = vmatpush1.xpose.msra.mxu0 0.0
        %1581 = vmatprep.subr.mxu0 0.0
        %1582 = vmatpush1.xpose.msra.mxu0 0.0
        %1583 = vmatprep.subr.mxu0 0.0
        %1584 = vmatpush1.xpose.msra.mxu0 0.0
        %1585 = vmatprep.subr.mxu0 0.0
        %1586 = vmatpush1.xpose.msra.mxu0 0.0
        %1587 = vmatprep.subr.mxu0 0.0
        %1588 = vmatpush1.xpose.msra.mxu0 0.0
        %1589 = vmatprep.subr.mxu0 0.0
        %1590 = vmatpush1.xpose.msra.mxu0 0.0
        %1591 = vmatprep.subr.mxu0 0.0
        %1592 = vmatpush1.xpose.msra.mxu0 0.0
        %1593 = vmatprep.subr.mxu0 0.0
        %1594 = vmatpush1.xpose.msra.mxu0 0.0
        %1595 = vmatprep.subr.mxu0 0.0
        %1596 = vmatpush1.xpose.msra.mxu0 0.0
        %1597 = vmatprep.subr.mxu0 0.0
        %1598 = vmatpush1.xpose.msra.mxu0 0.0
        %1599 = vmatprep.subr.mxu0 0.0
        %1600 = vmatpush1.xpose.msra.mxu0 0.0
        %1601 = vmatprep.subr.mxu0 0.0
        %1602 = vmatpush1.xpose.msra.mxu0 0.0
        %1603 = vmatprep.subr.mxu0 0.0
        %1604 = vmatpush1.xpose.msra.mxu0 0.0
        %1605 = vmatprep.subr.mxu0 0.0
        %1606 = vmatpush1.xpose.msra.mxu0 0.0
        %1607 = vmatprep.subr.mxu0 0.0
        %1608 = vmatpush1.xpose.msra.mxu0 0.0
        %1609 = vmatprep.subr.mxu0 0.0
        %1610 = vmatpush1.xpose.msra.mxu0 0.0
        %1611 = vmatprep.subr.mxu0 0.0
        %1612 = vmatpush1.xpose.msra.mxu0 0.0
        %1613 = vmatprep.subr.mxu0 0.0
        %1614 = vmatpush1.xpose.msra.mxu0 0.0
        %1615 = vmatprep.subr.mxu0 0.0
        %1616 = vmatpush1.xpose.msra.mxu0 0.0
        %1617 = vmatprep.subr.mxu0 0.0
        %1618 = vmatpush1.xpose.msra.mxu0 0.0
        %1619 = vmatprep.subr.mxu0 0.0
        %1620 = vmatpush1.xpose.msra.mxu0 0.0
        %1621 = vmatprep.mubr.f32.mxu0 0.0
        %1622 = vmatmul.mubr.f32.gmra.mrb[0].mxu0 %v1552
        %v1623 = vpop.f32.mrb[0].mxu0
        %v1624 = vadd.f32 0.0, %v1623
        %v1625 = vpop.f32.mrb[0].mxu0
        %1626 = vdwg.mxu0
        %v1628 = vsel %vm1550, %v759, 0
        %v1631 = vsel %vm1550, %v1083, 0
        %1633 = vmatprep.subr.mxu0 0.0
        %1634 = vmatpush1.xpose.msra.mxu0 %v1631
        %1635 = vmatprep.subr.mxu0 0.0
        %1636 = vmatpush1.xpose.msra.mxu0 0.0
        %1637 = vmatprep.subr.mxu0 0.0
        %1638 = vmatpush1.xpose.msra.mxu0 0.0
        %1639 = vmatprep.subr.mxu0 0.0
        %1640 = vmatpush1.xpose.msra.mxu0 0.0
        %1641 = vmatprep.subr.mxu0 0.0
        %1642 = vmatpush1.xpose.msra.mxu0 0.0
        %1643 = vmatprep.subr.mxu0 0.0
        %1644 = vmatpush1.xpose.msra.mxu0 0.0
        %1645 = vmatprep.subr.mxu0 0.0
        %1646 = vmatpush1.xpose.msra.mxu0 0.0
        %1647 = vmatprep.subr.mxu0 0.0
        %1648 = vmatpush1.xpose.msra.mxu0 0.0
        %1649 = vmatprep.subr.mxu0 0.0
        %1650 = vmatpush1.xpose.msra.mxu0 0.0
        %1651 = vmatprep.subr.mxu0 0.0
        %1652 = vmatpush1.xpose.msra.mxu0 0.0
        %1653 = vmatprep.subr.mxu0 0.0
        %1654 = vmatpush1.xpose.msra.mxu0 0.0
        %1655 = vmatprep.subr.mxu0 0.0
        %1656 = vmatpush1.xpose.msra.mxu0 0.0
        %1657 = vmatprep.subr.mxu0 0.0
        %1658 = vmatpush1.xpose.msra.mxu0 0.0
        %1659 = vmatprep.subr.mxu0 0.0
        %1660 = vmatpush1.xpose.msra.mxu0 0.0
        %1661 = vmatprep.subr.mxu0 0.0
        %1662 = vmatpush1.xpose.msra.mxu0 0.0
        %1663 = vmatprep.subr.mxu0 0.0
        %1664 = vmatpush1.xpose.msra.mxu0 0.0
        %1665 = vmatprep.subr.mxu0 0.0
        %1666 = vmatpush1.xpose.msra.mxu0 0.0
        %1667 = vmatprep.subr.mxu0 0.0
        %1668 = vmatpush1.xpose.msra.mxu0 0.0
        %1669 = vmatprep.subr.mxu0 0.0
        %1670 = vmatpush1.xpose.msra.mxu0 0.0
        %1671 = vmatprep.subr.mxu0 0.0
        %1672 = vmatpush1.xpose.msra.mxu0 0.0
        %1673 = vmatprep.subr.mxu0 0.0
        %1674 = vmatpush1.xpose.msra.mxu0 0.0
        %1675 = vmatprep.subr.mxu0 0.0
        %1676 = vmatpush1.xpose.msra.mxu0 0.0
        %1677 = vmatprep.subr.mxu0 0.0
        %1678 = vmatpush1.xpose.msra.mxu0 0.0
        %1679 = vmatprep.subr.mxu0 0.0
        %1680 = vmatpush1.xpose.msra.mxu0 0.0
        %1681 = vmatprep.subr.mxu0 0.0
        %1682 = vmatpush1.xpose.msra.mxu0 0.0
        %1683 = vmatprep.subr.mxu0 0.0
        %1684 = vmatpush1.xpose.msra.mxu0 0.0
        %1685 = vmatprep.subr.mxu0 0.0
        %1686 = vmatpush1.xpose.msra.mxu0 0.0
        %1687 = vmatprep.subr.mxu0 0.0
        %1688 = vmatpush1.xpose.msra.mxu0 0.0
        %1689 = vmatprep.subr.mxu0 0.0
        %1690 = vmatpush1.xpose.msra.mxu0 0.0
        %1691 = vmatprep.subr.mxu0 0.0
        %1692 = vmatpush1.xpose.msra.mxu0 0.0
        %1693 = vmatprep.subr.mxu0 0.0
        %1694 = vmatpush1.xpose.msra.mxu0 0.0
        %1695 = vmatprep.subr.mxu0 0.0
        %1696 = vmatpush1.xpose.msra.mxu0 0.0
        %1697 = vmatprep.mubr.f32.mxu0 0.0
        %1698 = vmatmul.mubr.f32.gmra.mrb[0].mxu0 %v1628
        %v1699 = vpop.f32.mrb[0].mxu0
        %v1700 = vadd.f32 0.0, %v1699
        %v1701 = vpop.f32.mrb[0].mxu0
        %1702 = vdwg.mxu0
        %v1704 = vsel %vm1550, %v829, 0
        %v1707 = vsel %vm1550, %v1153, 0
        %1709 = vmatprep.subr.mxu0 0.0
        %1710 = vmatpush1.xpose.msra.mxu0 %v1707
        %1711 = vmatprep.subr.mxu0 0.0
        %1712 = vmatpush1.xpose.msra.mxu0 0.0
        %1713 = vmatprep.subr.mxu0 0.0
        %1714 = vmatpush1.xpose.msra.mxu0 0.0
        %1715 = vmatprep.subr.mxu0 0.0
        %1716 = vmatpush1.xpose.msra.mxu0 0.0
        %1717 = vmatprep.subr.mxu0 0.0
        %1718 = vmatpush1.xpose.msra.mxu0 0.0
        %1719 = vmatprep.subr.mxu0 0.0
        %1720 = vmatpush1.xpose.msra.mxu0 0.0
        %1721 = vmatprep.subr.mxu0 0.0
        %1722 = vmatpush1.xpose.msra.mxu0 0.0
        %1723 = vmatprep.subr.mxu0 0.0
        %1724 = vmatpush1.xpose.msra.mxu0 0.0
        %1725 = vmatprep.subr.mxu0 0.0
        %1726 = vmatpush1.xpose.msra.mxu0 0.0
        %1727 = vmatprep.subr.mxu0 0.0
        %1728 = vmatpush1.xpose.msra.mxu0 0.0
        %1729 = vmatprep.subr.mxu0 0.0
        %1730 = vmatpush1.xpose.msra.mxu0 0.0
        %1731 = vmatprep.subr.mxu0 0.0
        %1732 = vmatpush1.xpose.msra.mxu0 0.0
        %1733 = vmatprep.subr.mxu0 0.0
        %1734 = vmatpush1.xpose.msra.mxu0 0.0
        %1735 = vmatprep.subr.mxu0 0.0
        %1736 = vmatpush1.xpose.msra.mxu0 0.0
        %1737 = vmatprep.subr.mxu0 0.0
        %1738 = vmatpush1.xpose.msra.mxu0 0.0
        %1739 = vmatprep.subr.mxu0 0.0
        %1740 = vmatpush1.xpose.msra.mxu0 0.0
        %1741 = vmatprep.subr.mxu0 0.0
        %1742 = vmatpush1.xpose.msra.mxu0 0.0
        %1743 = vmatprep.subr.mxu0 0.0
        %1744 = vmatpush1.xpose.msra.mxu0 0.0
        %1745 = vmatprep.subr.mxu0 0.0
        %1746 = vmatpush1.xpose.msra.mxu0 0.0
        %1747 = vmatprep.subr.mxu0 0.0
        %1748 = vmatpush1.xpose.msra.mxu0 0.0
        %1749 = vmatprep.subr.mxu0 0.0
        %1750 = vmatpush1.xpose.msra.mxu0 0.0
        %1751 = vmatprep.subr.mxu0 0.0
        %1752 = vmatpush1.xpose.msra.mxu0 0.0
        %1753 = vmatprep.subr.mxu0 0.0
        %1754 = vmatpush1.xpose.msra.mxu0 0.0
        %1755 = vmatprep.subr.mxu0 0.0
        %1756 = vmatpush1.xpose.msra.mxu0 0.0
        %1757 = vmatprep.subr.mxu0 0.0
        %1758 = vmatpush1.xpose.msra.mxu0 0.0
        %1759 = vmatprep.subr.mxu0 0.0
        %1760 = vmatpush1.xpose.msra.mxu0 0.0
        %1761 = vmatprep.subr.mxu0 0.0
        %1762 = vmatpush1.xpose.msra.mxu0 0.0
        %1763 = vmatprep.subr.mxu0 0.0
        %1764 = vmatpush1.xpose.msra.mxu0 0.0
        %1765 = vmatprep.subr.mxu0 0.0
        %1766 = vmatpush1.xpose.msra.mxu0 0.0
        %1767 = vmatprep.subr.mxu0 0.0
        %1768 = vmatpush1.xpose.msra.mxu0 0.0
        %1769 = vmatprep.subr.mxu0 0.0
        %1770 = vmatpush1.xpose.msra.mxu0 0.0
        %1771 = vmatprep.subr.mxu0 0.0
        %1772 = vmatpush1.xpose.msra.mxu0 0.0
        %1773 = vmatprep.mubr.f32.mxu0 0.0
        %1774 = vmatmul.mubr.f32.gmra.mrb[0].mxu0 %v1704
        %v1775 = vpop.f32.mrb[0].mxu0
        %v1776 = vadd.f32 0.0, %v1775
        %v1777 = vpop.f32.mrb[0].mxu0
        %1778 = vdwg.mxu0
        %v1780 = vsel %vm1550, %v899, 0
        %v1783 = vsel %vm1550, %v1223, 0
        %1785 = vmatprep.subr.mxu0 0.0
        %1786 = vmatpush1.xpose.msra.mxu0 %v1783
        %1787 = vmatprep.subr.mxu0 0.0
        %1788 = vmatpush1.xpose.msra.mxu0 0.0
        %1789 = vmatprep.subr.mxu0 0.0
        %1790 = vmatpush1.xpose.msra.mxu0 0.0
        %1791 = vmatprep.subr.mxu0 0.0
        %1792 = vmatpush1.xpose.msra.mxu0 0.0
        %1793 = vmatprep.subr.mxu0 0.0
        %1794 = vmatpush1.xpose.msra.mxu0 0.0
        %1795 = vmatprep.subr.mxu0 0.0
        %1796 = vmatpush1.xpose.msra.mxu0 0.0
        %1797 = vmatprep.subr.mxu0 0.0
        %1798 = vmatpush1.xpose.msra.mxu0 0.0
        %1799 = vmatprep.subr.mxu0 0.0
        %1800 = vmatpush1.xpose.msra.mxu0 0.0
        %1801 = vmatprep.subr.mxu0 0.0
        %1802 = vmatpush1.xpose.msra.mxu0 0.0
        %1803 = vmatprep.subr.mxu0 0.0
        %1804 = vmatpush1.xpose.msra.mxu0 0.0
        %1805 = vmatprep.subr.mxu0 0.0
        %1806 = vmatpush1.xpose.msra.mxu0 0.0
        %1807 = vmatprep.subr.mxu0 0.0
        %1808 = vmatpush1.xpose.msra.mxu0 0.0
        %1809 = vmatprep.subr.mxu0 0.0
        %1810 = vmatpush1.xpose.msra.mxu0 0.0
        %1811 = vmatprep.subr.mxu0 0.0
        %1812 = vmatpush1.xpose.msra.mxu0 0.0
        %1813 = vmatprep.subr.mxu0 0.0
        %1814 = vmatpush1.xpose.msra.mxu0 0.0
        %1815 = vmatprep.subr.mxu0 0.0
        %1816 = vmatpush1.xpose.msra.mxu0 0.0
        %1817 = vmatprep.subr.mxu0 0.0
        %1818 = vmatpush1.xpose.msra.mxu0 0.0
        %1819 = vmatprep.subr.mxu0 0.0
        %1820 = vmatpush1.xpose.msra.mxu0 0.0
        %1821 = vmatprep.subr.mxu0 0.0
        %1822 = vmatpush1.xpose.msra.mxu0 0.0
        %1823 = vmatprep.subr.mxu0 0.0
        %1824 = vmatpush1.xpose.msra.mxu0 0.0
        %1825 = vmatprep.subr.mxu0 0.0
        %1826 = vmatpush1.xpose.msra.mxu0 0.0
        %1827 = vmatprep.subr.mxu0 0.0
        %1828 = vmatpush1.xpose.msra.mxu0 0.0
        %1829 = vmatprep.subr.mxu0 0.0
        %1830 = vmatpush1.xpose.msra.mxu0 0.0
        %1831 = vmatprep.subr.mxu0 0.0
        %1832 = vmatpush1.xpose.msra.mxu0 0.0
        %1833 = vmatprep.subr.mxu0 0.0
        %1834 = vmatpush1.xpose.msra.mxu0 0.0
        %1835 = vmatprep.subr.mxu0 0.0
        %1836 = vmatpush1.xpose.msra.mxu0 0.0
        %1837 = vmatprep.subr.mxu0 0.0
        %1838 = vmatpush1.xpose.msra.mxu0 0.0
        %1839 = vmatprep.subr.mxu0 0.0
        %1840 = vmatpush1.xpose.msra.mxu0 0.0
        %1841 = vmatprep.subr.mxu0 0.0
        %1842 = vmatpush1.xpose.msra.mxu0 0.0
        %1843 = vmatprep.subr.mxu0 0.0
        %1844 = vmatpush1.xpose.msra.mxu0 0.0
        %1845 = vmatprep.subr.mxu0 0.0
        %1846 = vmatpush1.xpose.msra.mxu0 0.0
        %1847 = vmatprep.subr.mxu0 0.0
        %1848 = vmatpush1.xpose.msra.mxu0 0.0
        %1849 = vmatprep.mubr.f32.mxu0 0.0
        %1850 = vmatmul.mubr.f32.gmra.mrb[0].mxu0 %v1780
        %v1851 = vpop.f32.mrb[0].mxu0
        %v1852 = vadd.f32 0.0, %v1851
        %v1853 = vpop.f32.mrb[0].mxu0
        %1854 = vdwg.mxu0
        %v1855 = vmul.f32 %v1624, 0.35355338
        %v1856 = vmul.f32 %v1700, 0.35355338
        %v1857 = vmul.f32 %v1776, 0.35355338
        %v1858 = vmul.f32 %v1852, 0.35355338
        %v1859 = vsel %vm1550, %v1855, -inf
        %1860 = vmax.xlane.f32.xlu0 %v1859
        %v1861 = vpop.xlane.xlu0 %1860
        %v1862 = vsel %vm1550, %v1856, -inf
        %1863 = vmax.xlane.f32.xlu0 %v1862
        %v1864 = vpop.xlane.xlu0 %1863
        %v1865 = vsel %vm1550, %v1857, -inf
        %1866 = vmax.xlane.f32.xlu0 %v1865
        %v1867 = vpop.xlane.xlu0 %1866
        %v1868 = vsel %vm1550, %v1858, -inf
        %1869 = vmax.xlane.f32.xlu0 %v1868
        %v1870 = vpop.xlane.xlu0 %1869
        %v1871 = vsub.f32 %v1855, %v1861
        %v1872 = vsub.f32 %v1856, %v1864
        %v1873 = vsub.f32 %v1857, %v1867
        %v1874 = vsub.f32 %v1858, %v1870
        %v1875 = vmul.f32 %v1871, 1.442695
        %v1876 = vpow.pop %v1875
        %v1877 = vmul.f32 %v1872, 1.442695
        %v1878 = vpow.pop %v1877
        %v1879 = vmul.f32 %v1873, 1.442695
        %v1880 = vpow.pop %v1879
        %v1881 = vmul.f32 %v1874, 1.442695
        %v1882 = vpow.pop %v1881
        %v1883 = vsel %vm1550, %v1876, 0.0
        %1884 = vadd.xlane.f32.xlu0 %v1883
        %v1885 = vpop.xlane.xlu0 %1884
        %v1886 = vsel %vm1550, %v1878, 0.0
        %1887 = vadd.xlane.f32.xlu0 %v1886
        %v1888 = vpop.xlane.xlu0 %1887
        %v1889 = vsel %vm1550, %v1880, 0.0
        %1890 = vadd.xlane.f32.xlu0 %v1889
        %v1891 = vpop.xlane.xlu0 %1890
        %v1892 = vsel %vm1550, %v1882, 0.0
        %1893 = vadd.xlane.f32.xlu0 %v1892
        %v1894 = vpop.xlane.xlu0 %1893
        %v1895 = vrcp.pop %v1885
        %v1896 = vrcp.pop %v1888
        %v1897 = vrcp.pop %v1891
        %v1898 = vrcp.pop %v1894
        %v1899 = vmul.f32 %v1876, %v1895
        %v1900 = vmul.f32 %v1878, %v1896
        %v1901 = vmul.f32 %v1880, %v1897
        %v1902 = vmul.f32 %v1882, %v1898
        %v1904 = vsel %vm1550, %v1899, 0
        %1906 = vmatprep.subr.mxu0 0.0
        %1907 = vmatpush1.msra.mxu0 %v1337
        %1908 = vmatprep.subr.mxu0 0.0
        %1909 = vmatpush1.msra.mxu0 0.0
        %1910 = vmatprep.subr.mxu0 0.0
        %1911 = vmatpush1.msra.mxu0 0.0
        %1912 = vmatprep.subr.mxu0 0.0
        %1913 = vmatpush1.msra.mxu0 0.0
        %1914 = vmatprep.subr.mxu0 0.0
        %1915 = vmatpush1.msra.mxu0 0.0
        %1916 = vmatprep.subr.mxu0 0.0
        %1917 = vmatpush1.msra.mxu0 0.0
        %1918 = vmatprep.subr.mxu0 0.0
        %1919 = vmatpush1.msra.mxu0 0.0
        %1920 = vmatprep.subr.mxu0 0.0
        %1921 = vmatpush1.msra.mxu0 0.0
        %1922 = vmatprep.subr.mxu0 0.0
        %1923 = vmatpush1.msra.mxu0 0.0
        %1924 = vmatprep.subr.mxu0 0.0
        %1925 = vmatpush1.msra.mxu0 0.0
        %1926 = vmatprep.subr.mxu0 0.0
        %1927 = vmatpush1.msra.mxu0 0.0
        %1928 = vmatprep.subr.mxu0 0.0
        %1929 = vmatpush1.msra.mxu0 0.0
        %1930 = vmatprep.subr.mxu0 0.0
        %1931 = vmatpush1.msra.mxu0 0.0
        %1932 = vmatprep.subr.mxu0 0.0
        %1933 = vmatpush1.msra.mxu0 0.0
        %1934 = vmatprep.subr.mxu0 0.0
        %1935 = vmatpush1.msra.mxu0 0.0
        %1936 = vmatprep.subr.mxu0 0.0
        %1937 = vmatpush1.msra.mxu0 0.0
        %1938 = vmatprep.subr.mxu0 0.0
        %1939 = vmatpush1.msra.mxu0 0.0
        %1940 = vmatprep.subr.mxu0 0.0
        %1941 = vmatpush1.msra.mxu0 0.0
        %1942 = vmatprep.subr.mxu0 0.0
        %1943 = vmatpush1.msra.mxu0 0.0
        %1944 = vmatprep.subr.mxu0 0.0
        %1945 = vmatpush1.msra.mxu0 0.0
        %1946 = vmatprep.subr.mxu0 0.0
        %1947 = vmatpush1.msra.mxu0 0.0
        %1948 = vmatprep.subr.mxu0 0.0
        %1949 = vmatpush1.msra.mxu0 0.0
        %1950 = vmatprep.subr.mxu0 0.0
        %1951 = vmatpush1.msra.mxu0 0.0
        %1952 = vmatprep.subr.mxu0 0.0
        %1953 = vmatpush1.msra.mxu0 0.0
        %1954 = vmatprep.subr.mxu0 0.0
        %1955 = vmatpush1.msra.mxu0 0.0
        %1956 = vmatprep.subr.mxu0 0.0
        %1957 = vmatpush1.msra.mxu0 0.0
        %1958 = vmatprep.subr.mxu0 0.0
        %1959 = vmatpush1.msra.mxu0 0.0
        %1960 = vmatprep.subr.mxu0 0.0
        %1961 = vmatpush1.msra.mxu0 0.0
        %1962 = vmatprep.subr.mxu0 0.0
        %1963 = vmatpush1.msra.mxu0 0.0
        %1964 = vmatprep.subr.mxu0 0.0
        %1965 = vmatpush1.msra.mxu0 0.0
        %1966 = vmatprep.subr.mxu0 0.0
        %1967 = vmatpush1.msra.mxu0 0.0
        %1968 = vmatprep.subr.mxu0 0.0
        %1969 = vmatpush1.msra.mxu0 0.0
        %1970 = vmatprep.mubr.f32.mxu0 0.0
        %1971 = vmatmul.mubr.f32.gmra.mrb[0].mxu0 %v1904
        %v1972 = vpop.f32.mrb[0].mxu0
        %v1973 = vadd.f32 0.0, %v1972
        %v1974 = vpop.f32.mrb[0].mxu0
        %1975 = vdwg.mxu0
        %v1977 = vsel %vm1550, %v1900, 0
        %1979 = vmatprep.subr.mxu0 0.0
        %1980 = vmatpush1.msra.mxu0 %v1407
        %1981 = vmatprep.subr.mxu0 0.0
        %1982 = vmatpush1.msra.mxu0 0.0
        %1983 = vmatprep.subr.mxu0 0.0
        %1984 = vmatpush1.msra.mxu0 0.0
        %1985 = vmatprep.subr.mxu0 0.0
        %1986 = vmatpush1.msra.mxu0 0.0
        %1987 = vmatprep.subr.mxu0 0.0
        %1988 = vmatpush1.msra.mxu0 0.0
        %1989 = vmatprep.subr.mxu0 0.0
        %1990 = vmatpush1.msra.mxu0 0.0
        %1991 = vmatprep.subr.mxu0 0.0
        %1992 = vmatpush1.msra.mxu0 0.0
        %1993 = vmatprep.subr.mxu0 0.0
        %1994 = vmatpush1.msra.mxu0 0.0
        %1995 = vmatprep.subr.mxu0 0.0
        %1996 = vmatpush1.msra.mxu0 0.0
        %1997 = vmatprep.subr.mxu0 0.0
        %1998 = vmatpush1.msra.mxu0 0.0
        %1999 = vmatprep.subr.mxu0 0.0
        %2000 = vmatpush1.msra.mxu0 0.0
        %2001 = vmatprep.subr.mxu0 0.0
        %2002 = vmatpush1.msra.mxu0 0.0
        %2003 = vmatprep.subr.mxu0 0.0
        %2004 = vmatpush1.msra.mxu0 0.0
        %2005 = vmatprep.subr.mxu0 0.0
        %2006 = vmatpush1.msra.mxu0 0.0
        %2007 = vmatprep.subr.mxu0 0.0
        %2008 = vmatpush1.msra.mxu0 0.0
        %2009 = vmatprep.subr.mxu0 0.0
        %2010 = vmatpush1.msra.mxu0 0.0
        %2011 = vmatprep.subr.mxu0 0.0
        %2012 = vmatpush1.msra.mxu0 0.0
        %2013 = vmatprep.subr.mxu0 0.0
        %2014 = vmatpush1.msra.mxu0 0.0
        %2015 = vmatprep.subr.mxu0 0.0
        %2016 = vmatpush1.msra.mxu0 0.0
        %2017 = vmatprep.subr.mxu0 0.0
        %2018 = vmatpush1.msra.mxu0 0.0
        %2019 = vmatprep.subr.mxu0 0.0
        %2020 = vmatpush1.msra.mxu0 0.0
        %2021 = vmatprep.subr.mxu0 0.0
        %2022 = vmatpush1.msra.mxu0 0.0
        %2023 = vmatprep.subr.mxu0 0.0
        %2024 = vmatpush1.msra.mxu0 0.0
        %2025 = vmatprep.subr.mxu0 0.0
        %2026 = vmatpush1.msra.mxu0 0.0
        %2027 = vmatprep.subr.mxu0 0.0
        %2028 = vmatpush1.msra.mxu0 0.0
        %2029 = vmatprep.subr.mxu0 0.0
        %2030 = vmatpush1.msra.mxu0 0.0
        %2031 = vmatprep.subr.mxu0 0.0
        %2032 = vmatpush1.msra.mxu0 0.0
        %2033 = vmatprep.subr.mxu0 0.0
        %2034 = vmatpush1.msra.mxu0 0.0
        %2035 = vmatprep.subr.mxu0 0.0
        %2036 = vmatpush1.msra.mxu0 0.0
        %2037 = vmatprep.subr.mxu0 0.0
        %2038 = vmatpush1.msra.mxu0 0.0
        %2039 = vmatprep.subr.mxu0 0.0
        %2040 = vmatpush1.msra.mxu0 0.0
        %2041 = vmatprep.subr.mxu0 0.0
        %2042 = vmatpush1.msra.mxu0 0.0
        %2043 = vmatprep.mubr.f32.mxu0 0.0
        %2044 = vmatmul.mubr.f32.gmra.mrb[0].mxu0 %v1977
        %v2045 = vpop.f32.mrb[0].mxu0
        %v2046 = vadd.f32 0.0, %v2045
        %v2047 = vpop.f32.mrb[0].mxu0
        %2048 = vdwg.mxu0
        %v2050 = vsel %vm1550, %v1901, 0
        %2052 = vmatprep.subr.mxu0 0.0
        %2053 = vmatpush1.msra.mxu0 %v1477
        %2054 = vmatprep.subr.mxu0 0.0
        %2055 = vmatpush1.msra.mxu0 0.0
        %2056 = vmatprep.subr.mxu0 0.0
        %2057 = vmatpush1.msra.mxu0 0.0
        %2058 = vmatprep.subr.mxu0 0.0
        %2059 = vmatpush1.msra.mxu0 0.0
        %2060 = vmatprep.subr.mxu0 0.0
        %2061 = vmatpush1.msra.mxu0 0.0
        %2062 = vmatprep.subr.mxu0 0.0
        %2063 = vmatpush1.msra.mxu0 0.0
        %2064 = vmatprep.subr.mxu0 0.0
        %2065 = vmatpush1.msra.mxu0 0.0
        %2066 = vmatprep.subr.mxu0 0.0
        %2067 = vmatpush1.msra.mxu0 0.0
        %2068 = vmatprep.subr.mxu0 0.0
        %2069 = vmatpush1.msra.mxu0 0.0
        %2070 = vmatprep.subr.mxu0 0.0
        %2071 = vmatpush1.msra.mxu0 0.0
        %2072 = vmatprep.subr.mxu0 0.0
        %2073 = vmatpush1.msra.mxu0 0.0
        %2074 = vmatprep.subr.mxu0 0.0
        %2075 = vmatpush1.msra.mxu0 0.0
        %2076 = vmatprep.subr.mxu0 0.0
        %2077 = vmatpush1.msra.mxu0 0.0
        %2078 = vmatprep.subr.mxu0 0.0
        %2079 = vmatpush1.msra.mxu0 0.0
        %2080 = vmatprep.subr.mxu0 0.0
        %2081 = vmatpush1.msra.mxu0 0.0
        %2082 = vmatprep.subr.mxu0 0.0
        %2083 = vmatpush1.msra.mxu0 0.0
        %2084 = vmatprep.subr.mxu0 0.0
        %2085 = vmatpush1.msra.mxu0 0.0
        %2086 = vmatprep.subr.mxu0 0.0
        %2087 = vmatpush1.msra.mxu0 0.0
        %2088 = vmatprep.subr.mxu0 0.0
        %2089 = vmatpush1.msra.mxu0 0.0
        %2090 = vmatprep.subr.mxu0 0.0
        %2091 = vmatpush1.msra.mxu0 0.0
        %2092 = vmatprep.subr.mxu0 0.0
        %2093 = vmatpush1.msra.mxu0 0.0
        %2094 = vmatprep.subr.mxu0 0.0
        %2095 = vmatpush1.msra.mxu0 0.0
        %2096 = vmatprep.subr.mxu0 0.0
        %2097 = vmatpush1.msra.mxu0 0.0
        %2098 = vmatprep.subr.mxu0 0.0
        %2099 = vmatpush1.msra.mxu0 0.0
        %2100 = vmatprep.subr.mxu0 0.0
        %2101 = vmatpush1.msra.mxu0 0.0
        %2102 = vmatprep.subr.mxu0 0.0
        %2103 = vmatpush1.msra.mxu0 0.0
        %2104 = vmatprep.subr.mxu0 0.0
        %2105 = vmatpush1.msra.mxu0 0.0
        %2106 = vmatprep.subr.mxu0 0.0
        %2107 = vmatpush1.msra.mxu0 0.0
        %2108 = vmatprep.subr.mxu0 0.0
        %2109 = vmatpush1.msra.mxu0 0.0
        %2110 = vmatprep.subr.mxu0 0.0
        %2111 = vmatpush1.msra.mxu0 0.0
        %2112 = vmatprep.subr.mxu0 0.0
        %2113 = vmatpush1.msra.mxu0 0.0
        %2114 = vmatprep.subr.mxu0 0.0
        %2115 = vmatpush1.msra.mxu0 0.0
        %2116 = vmatprep.mubr.f32.mxu0 0.0
        %2117 = vmatmul.mubr.f32.gmra.mrb[0].mxu0 %v2050
        %v2118 = vpop.f32.mrb[0].mxu0
        %v2119 = vadd.f32 0.0, %v2118
        %v2120 = vpop.f32.mrb[0].mxu0
        %2121 = vdwg.mxu0
        %v2123 = vsel %vm1550, %v1902, 0
        %2125 = vmatprep.subr.mxu0 0.0
        %2126 = vmatpush1.msra.mxu0 %v1547
        %2127 = vmatprep.subr.mxu0 0.0
        %2128 = vmatpush1.msra.mxu0 0.0
        %2129 = vmatprep.subr.mxu0 0.0
        %2130 = vmatpush1.msra.mxu0 0.0
        %2131 = vmatprep.subr.mxu0 0.0
        %2132 = vmatpush1.msra.mxu0 0.0
        %2133 = vmatprep.subr.mxu0 0.0
        %2134 = vmatpush1.msra.mxu0 0.0
        %2135 = vmatprep.subr.mxu0 0.0
        %2136 = vmatpush1.msra.mxu0 0.0
        %2137 = vmatprep.subr.mxu0 0.0
        %2138 = vmatpush1.msra.mxu0 0.0
        %2139 = vmatprep.subr.mxu0 0.0
        %2140 = vmatpush1.msra.mxu0 0.0
        %2141 = vmatprep.subr.mxu0 0.0
        %2142 = vmatpush1.msra.mxu0 0.0
        %2143 = vmatprep.subr.mxu0 0.0
        %2144 = vmatpush1.msra.mxu0 0.0
        %2145 = vmatprep.subr.mxu0 0.0
        %2146 = vmatpush1.msra.mxu0 0.0
        %2147 = vmatprep.subr.mxu0 0.0
        %2148 = vmatpush1.msra.mxu0 0.0
        %2149 = vmatprep.subr.mxu0 0.0
        %2150 = vmatpush1.msra.mxu0 0.0
        %2151 = vmatprep.subr.mxu0 0.0
        %2152 = vmatpush1.msra.mxu0 0.0
        %2153 = vmatprep.subr.mxu0 0.0
        %2154 = vmatpush1.msra.mxu0 0.0
        %2155 = vmatprep.subr.mxu0 0.0
        %2156 = vmatpush1.msra.mxu0 0.0
        %2157 = vmatprep.subr.mxu0 0.0
        %2158 = vmatpush1.msra.mxu0 0.0
        %2159 = vmatprep.subr.mxu0 0.0
        %2160 = vmatpush1.msra.mxu0 0.0
        %2161 = vmatprep.subr.mxu0 0.0
        %2162 = vmatpush1.msra.mxu0 0.0
        %2163 = vmatprep.subr.mxu0 0.0
        %2164 = vmatpush1.msra.mxu0 0.0
        %2165 = vmatprep.subr.mxu0 0.0
        %2166 = vmatpush1.msra.mxu0 0.0
        %2167 = vmatprep.subr.mxu0 0.0
        %2168 = vmatpush1.msra.mxu0 0.0
        %2169 = vmatprep.subr.mxu0 0.0
        %2170 = vmatpush1.msra.mxu0 0.0
        %2171 = vmatprep.subr.mxu0 0.0
        %2172 = vmatpush1.msra.mxu0 0.0
        %2173 = vmatprep.subr.mxu0 0.0
        %2174 = vmatpush1.msra.mxu0 0.0
        %2175 = vmatprep.subr.mxu0 0.0
        %2176 = vmatpush1.msra.mxu0 0.0
        %2177 = vmatprep.subr.mxu0 0.0
        %2178 = vmatpush1.msra.mxu0 0.0
        %2179 = vmatprep.subr.mxu0 0.0
        %2180 = vmatpush1.msra.mxu0 0.0
        %2181 = vmatprep.subr.mxu0 0.0
        %2182 = vmatpush1.msra.mxu0 0.0
        %2183 = vmatprep.subr.mxu0 0.0
        %2184 = vmatpush1.msra.mxu0 0.0
        %2185 = vmatprep.subr.mxu0 0.0
        %2186 = vmatpush1.msra.mxu0 0.0
        %2187 = vmatprep.subr.mxu0 0.0
        %2188 = vmatpush1.msra.mxu0 0.0
        %2189 = vmatprep.mubr.f32.mxu0 0.0
        %2190 = vmatmul.mubr.f32.gmra.mrb[0].mxu0 %v2123
        %v2191 = vpop.f32.mrb[0].mxu0
        %v2192 = vadd.f32 0.0, %v2191
        %v2193 = vpop.f32.mrb[0].mxu0
        %2194 = vdwg.mxu0
        %v2195 = vld [vmem:[%s8] sm:$0xff]
        %v2196 = vld [vmem:[%s8 + $0x8] sm:$0xff]
        %v2197 = vld [vmem:[%s8 + $0x10] sm:$0xff]
        %v2198 = vld [vmem:[%s8 + $0x18] sm:$0xff]
        %v2200 = vsel %vm1550, %v1973, 0
        %2202 = vmatprep.subr.mxu0 0.0
        %2203 = vmatpush1.msra.mxu0 %v2195
        %2204 = vmatprep.subr.mxu0 0.0
        %2205 = vmatpush1.msra.mxu0 0.0
        %2206 = vmatprep.subr.mxu0 0.0
        %2207 = vmatpush1.msra.mxu0 0.0
        %2208 = vmatprep.subr.mxu0 0.0
        %2209 = vmatpush1.msra.mxu0 0.0
        %2210 = vmatprep.subr.mxu0 0.0
        %2211 = vmatpush1.msra.mxu0 0.0
        %2212 = vmatprep.subr.mxu0 0.0
        %2213 = vmatpush1.msra.mxu0 0.0
        %2214 = vmatprep.subr.mxu0 0.0
        %2215 = vmatpush1.msra.mxu0 0.0
        %2216 = vmatprep.subr.mxu0 0.0
        %2217 = vmatpush1.msra.mxu0 0.0
        %2218 = vmatprep.subr.mxu0 0.0
        %2219 = vmatpush1.msra.mxu0 0.0
        %2220 = vmatprep.subr.mxu0 0.0
        %2221 = vmatpush1.msra.mxu0 0.0
        %2222 = vmatprep.subr.mxu0 0.0
        %2223 = vmatpush1.msra.mxu0 0.0
        %2224 = vmatprep.subr.mxu0 0.0
        %2225 = vmatpush1.msra.mxu0 0.0
        %2226 = vmatprep.subr.mxu0 0.0
        %2227 = vmatpush1.msra.mxu0 0.0
        %2228 = vmatprep.subr.mxu0 0.0
        %2229 = vmatpush1.msra.mxu0 0.0
        %2230 = vmatprep.subr.mxu0 0.0
        %2231 = vmatpush1.msra.mxu0 0.0
        %2232 = vmatprep.subr.mxu0 0.0
        %2233 = vmatpush1.msra.mxu0 0.0
        %2234 = vmatprep.subr.mxu0 0.0
        %2235 = vmatpush1.msra.mxu0 0.0
        %2236 = vmatprep.subr.mxu0 0.0
        %2237 = vmatpush1.msra.mxu0 0.0
        %2238 = vmatprep.subr.mxu0 0.0
        %2239 = vmatpush1.msra.mxu0 0.0
        %2240 = vmatprep.subr.mxu0 0.0
        %2241 = vmatpush1.msra.mxu0 0.0
        %2242 = vmatprep.subr.mxu0 0.0
        %2243 = vmatpush1.msra.mxu0 0.0
        %2244 = vmatprep.subr.mxu0 0.0
        %2245 = vmatpush1.msra.mxu0 0.0
        %2246 = vmatprep.subr.mxu0 0.0
        %2247 = vmatpush1.msra.mxu0 0.0
        %2248 = vmatprep.subr.mxu0 0.0
        %2249 = vmatpush1.msra.mxu0 0.0
        %2250 = vmatprep.subr.mxu0 0.0
        %2251 = vmatpush1.msra.mxu0 0.0
        %2252 = vmatprep.subr.mxu0 0.0
        %2253 = vmatpush1.msra.mxu0 0.0
        %2254 = vmatprep.subr.mxu0 0.0
        %2255 = vmatpush1.msra.mxu0 0.0
        %2256 = vmatprep.subr.mxu0 0.0
        %2257 = vmatpush1.msra.mxu0 0.0
        %2258 = vmatprep.subr.mxu0 0.0
        %2259 = vmatpush1.msra.mxu0 0.0
        %2260 = vmatprep.subr.mxu0 0.0
        %2261 = vmatpush1.msra.mxu0 0.0
        %2262 = vmatprep.subr.mxu0 0.0
        %2263 = vmatpush1.msra.mxu0 0.0
        %2264 = vmatprep.subr.mxu0 0.0
        %2265 = vmatpush1.msra.mxu0 0.0
        %2266 = vmatprep.mubr.f32.mxu0 0.0
        %2267 = vmatmul.mubr.f32.gmra.mrb[0].mxu0 %v2200
        %v2268 = vpop.f32.mrb[0].mxu0
        %v2269 = vadd.f32 0.0, %v2268
        %v2270 = vpop.f32.mrb[0].mxu0
        %2271 = vdwg.mxu0
        %v2273 = vsel %vm1550, %v2046, 0
        %2275 = vmatprep.subr.mxu0 0.0
        %2276 = vmatpush1.msra.mxu0 %v2196
        %2277 = vmatprep.subr.mxu0 0.0
        %2278 = vmatpush1.msra.mxu0 0.0
        %2279 = vmatprep.subr.mxu0 0.0
        %2280 = vmatpush1.msra.mxu0 0.0
        %2281 = vmatprep.subr.mxu0 0.0
        %2282 = vmatpush1.msra.mxu0 0.0
        %2283 = vmatprep.subr.mxu0 0.0
        %2284 = vmatpush1.msra.mxu0 0.0
        %2285 = vmatprep.subr.mxu0 0.0
        %2286 = vmatpush1.msra.mxu0 0.0
        %2287 = vmatprep.subr.mxu0 0.0
        %2288 = vmatpush1.msra.mxu0 0.0
        %2289 = vmatprep.subr.mxu0 0.0
        %2290 = vmatpush1.msra.mxu0 0.0
        %2291 = vmatprep.subr.mxu0 0.0
        %2292 = vmatpush1.msra.mxu0 0.0
        %2293 = vmatprep.subr.mxu0 0.0
        %2294 = vmatpush1.msra.mxu0 0.0
        %2295 = vmatprep.subr.mxu0 0.0
        %2296 = vmatpush1.msra.mxu0 0.0
        %2297 = vmatprep.subr.mxu0 0.0
        %2298 = vmatpush1.msra.mxu0 0.0
        %2299 = vmatprep.subr.mxu0 0.0
        %2300 = vmatpush1.msra.mxu0 0.0
        %2301 = vmatprep.subr.mxu0 0.0
        %2302 = vmatpush1.msra.mxu0 0.0
        %2303 = vmatprep.subr.mxu0 0.0
        %2304 = vmatpush1.msra.mxu0 0.0
        %2305 = vmatprep.subr.mxu0 0.0
        %2306 = vmatpush1.msra.mxu0 0.0
        %2307 = vmatprep.subr.mxu0 0.0
        %2308 = vmatpush1.msra.mxu0 0.0
        %2309 = vmatprep.subr.mxu0 0.0
        %2310 = vmatpush1.msra.mxu0 0.0
        %2311 = vmatprep.subr.mxu0 0.0
        %2312 = vmatpush1.msra.mxu0 0.0
        %2313 = vmatprep.subr.mxu0 0.0
        %2314 = vmatpush1.msra.mxu0 0.0
        %2315 = vmatprep.subr.mxu0 0.0
        %2316 = vmatpush1.msra.mxu0 0.0
        %2317 = vmatprep.subr.mxu0 0.0
        %2318 = vmatpush1.msra.mxu0 0.0
        %2319 = vmatprep.subr.mxu0 0.0
        %2320 = vmatpush1.msra.mxu0 0.0
        %2321 = vmatprep.subr.mxu0 0.0
        %2322 = vmatpush1.msra.mxu0 0.0
        %2323 = vmatprep.subr.mxu0 0.0
        %2324 = vmatpush1.msra.mxu0 0.0
        %2325 = vmatprep.subr.mxu0 0.0
        %2326 = vmatpush1.msra.mxu0 0.0
        %2327 = vmatprep.subr.mxu0 0.0
        %2328 = vmatpush1.msra.mxu0 0.0
        %2329 = vmatprep.subr.mxu0 0.0
        %2330 = vmatpush1.msra.mxu0 0.0
        %2331 = vmatprep.subr.mxu0 0.0
        %2332 = vmatpush1.msra.mxu0 0.0
        %2333 = vmatprep.subr.mxu0 0.0
        %2334 = vmatpush1.msra.mxu0 0.0
        %2335 = vmatprep.subr.mxu0 0.0
        %2336 = vmatpush1.msra.mxu0 0.0
        %2337 = vmatprep.subr.mxu0 0.0
        %2338 = vmatpush1.msra.mxu0 0.0
        %2339 = vmatprep.mubr.f32.mxu0 0.0
        %2340 = vmatmul.mubr.f32.gmra.mrb[0].mxu0 %v2273
        %v2341 = vpop.f32.mrb[0].mxu0
        %v2342 = vadd.f32 0.0, %v2341
        %v2343 = vpop.f32.mrb[0].mxu0
        %2344 = vdwg.mxu0
        %v2346 = vsel %vm1550, %v2119, 0
        %2348 = vmatprep.subr.mxu0 0.0
        %2349 = vmatpush1.msra.mxu0 %v2197
        %2350 = vmatprep.subr.mxu0 0.0
        %2351 = vmatpush1.msra.mxu0 0.0
        %2352 = vmatprep.subr.mxu0 0.0
        %2353 = vmatpush1.msra.mxu0 0.0
        %2354 = vmatprep.subr.mxu0 0.0
        %2355 = vmatpush1.msra.mxu0 0.0
        %2356 = vmatprep.subr.mxu0 0.0
        %2357 = vmatpush1.msra.mxu0 0.0
        %2358 = vmatprep.subr.mxu0 0.0
        %2359 = vmatpush1.msra.mxu0 0.0
        %2360 = vmatprep.subr.mxu0 0.0
        %2361 = vmatpush1.msra.mxu0 0.0
        %2362 = vmatprep.subr.mxu0 0.0
        %2363 = vmatpush1.msra.mxu0 0.0
        %2364 = vmatprep.subr.mxu0 0.0
        %2365 = vmatpush1.msra.mxu0 0.0
        %2366 = vmatprep.subr.mxu0 0.0
        %2367 = vmatpush1.msra.mxu0 0.0
        %2368 = vmatprep.subr.mxu0 0.0
        %2369 = vmatpush1.msra.mxu0 0.0
        %2370 = vmatprep.subr.mxu0 0.0
        %2371 = vmatpush1.msra.mxu0 0.0
        %2372 = vmatprep.subr.mxu0 0.0
        %2373 = vmatpush1.msra.mxu0 0.0
        %2374 = vmatprep.subr.mxu0 0.0
        %2375 = vmatpush1.msra.mxu0 0.0
        %2376 = vmatprep.subr.mxu0 0.0
        %2377 = vmatpush1.msra.mxu0 0.0
        %2378 = vmatprep.subr.mxu0 0.0
        %2379 = vmatpush1.msra.mxu0 0.0
        %2380 = vmatprep.subr.mxu0 0.0
        %2381 = vmatpush1.msra.mxu0 0.0
        %2382 = vmatprep.subr.mxu0 0.0
        %2383 = vmatpush1.msra.mxu0 0.0
        %2384 = vmatprep.subr.mxu0 0.0
        %2385 = vmatpush1.msra.mxu0 0.0
        %2386 = vmatprep.subr.mxu0 0.0
        %2387 = vmatpush1.msra.mxu0 0.0
        %2388 = vmatprep.subr.mxu0 0.0
        %2389 = vmatpush1.msra.mxu0 0.0
        %2390 = vmatprep.subr.mxu0 0.0
        %2391 = vmatpush1.msra.mxu0 0.0
        %2392 = vmatprep.subr.mxu0 0.0
        %2393 = vmatpush1.msra.mxu0 0.0
        %2394 = vmatprep.subr.mxu0 0.0
        %2395 = vmatpush1.msra.mxu0 0.0
        %2396 = vmatprep.subr.mxu0 0.0
        %2397 = vmatpush1.msra.mxu0 0.0
        %2398 = vmatprep.subr.mxu0 0.0
        %2399 = vmatpush1.msra.mxu0 0.0
        %2400 = vmatprep.subr.mxu0 0.0
        %2401 = vmatpush1.msra.mxu0 0.0
        %2402 = vmatprep.subr.mxu0 0.0
        %2403 = vmatpush1.msra.mxu0 0.0
        %2404 = vmatprep.subr.mxu0 0.0
        %2405 = vmatpush1.msra.mxu0 0.0
        %2406 = vmatprep.subr.mxu0 0.0
        %2407 = vmatpush1.msra.mxu0 0.0
        %2408 = vmatprep.subr.mxu0 0.0
        %2409 = vmatpush1.msra.mxu0 0.0
        %2410 = vmatprep.subr.mxu0 0.0
        %2411 = vmatpush1.msra.mxu0 0.0
        %2412 = vmatprep.mubr.f32.mxu0 0.0
        %2413 = vmatmul.mubr.f32.gmra.mrb[0].mxu0 %v2346
        %v2414 = vpop.f32.mrb[0].mxu0
        %v2415 = vadd.f32 0.0, %v2414
        %v2416 = vpop.f32.mrb[0].mxu0
        %2417 = vdwg.mxu0
        %v2419 = vsel %vm1550, %v2192, 0
        %2421 = vmatprep.subr.mxu0 0.0
        %2422 = vmatpush1.msra.mxu0 %v2198
        %2423 = vmatprep.subr.mxu0 0.0
        %2424 = vmatpush1.msra.mxu0 0.0
        %2425 = vmatprep.subr.mxu0 0.0
        %2426 = vmatpush1.msra.mxu0 0.0
        %2427 = vmatprep.subr.mxu0 0.0
        %2428 = vmatpush1.msra.mxu0 0.0
        %2429 = vmatprep.subr.mxu0 0.0
        %2430 = vmatpush1.msra.mxu0 0.0
        %2431 = vmatprep.subr.mxu0 0.0
        %2432 = vmatpush1.msra.mxu0 0.0
        %2433 = vmatprep.subr.mxu0 0.0
        %2434 = vmatpush1.msra.mxu0 0.0
        %2435 = vmatprep.subr.mxu0 0.0
        %2436 = vmatpush1.msra.mxu0 0.0
        %2437 = vmatprep.subr.mxu0 0.0
        %2438 = vmatpush1.msra.mxu0 0.0
        %2439 = vmatprep.subr.mxu0 0.0
        %2440 = vmatpush1.msra.mxu0 0.0
        %2441 = vmatprep.subr.mxu0 0.0
        %2442 = vmatpush1.msra.mxu0 0.0
        %2443 = vmatprep.subr.mxu0 0.0
        %2444 = vmatpush1.msra.mxu0 0.0
        %2445 = vmatprep.subr.mxu0 0.0
        %2446 = vmatpush1.msra.mxu0 0.0
        %2447 = vmatprep.subr.mxu0 0.0
        %2448 = vmatpush1.msra.mxu0 0.0
        %2449 = vmatprep.subr.mxu0 0.0
        %2450 = vmatpush1.msra.mxu0 0.0
        %2451 = vmatprep.subr.mxu0 0.0
        %2452 = vmatpush1.msra.mxu0 0.0
        %2453 = vmatprep.subr.mxu0 0.0
        %2454 = vmatpush1.msra.mxu0 0.0
        %2455 = vmatprep.subr.mxu0 0.0
        %2456 = vmatpush1.msra.mxu0 0.0
        %2457 = vmatprep.subr.mxu0 0.0
        %2458 = vmatpush1.msra.mxu0 0.0
        %2459 = vmatprep.subr.mxu0 0.0
        %2460 = vmatpush1.msra.mxu0 0.0
        %2461 = vmatprep.subr.mxu0 0.0
        %2462 = vmatpush1.msra.mxu0 0.0
        %2463 = vmatprep.subr.mxu0 0.0
        %2464 = vmatpush1.msra.mxu0 0.0
        %2465 = vmatprep.subr.mxu0 0.0
        %2466 = vmatpush1.msra.mxu0 0.0
        %2467 = vmatprep.subr.mxu0 0.0
        %2468 = vmatpush1.msra.mxu0 0.0
        %2469 = vmatprep.subr.mxu0 0.0
        %2470 = vmatpush1.msra.mxu0 0.0
        %2471 = vmatprep.subr.mxu0 0.0
        %2472 = vmatpush1.msra.mxu0 0.0
        %2473 = vmatprep.subr.mxu0 0.0
        %2474 = vmatpush1.msra.mxu0 0.0
        %2475 = vmatprep.subr.mxu0 0.0
        %2476 = vmatpush1.msra.mxu0 0.0
        %2477 = vmatprep.subr.mxu0 0.0
        %2478 = vmatpush1.msra.mxu0 0.0
        %2479 = vmatprep.subr.mxu0 0.0
        %2480 = vmatpush1.msra.mxu0 0.0
        %2481 = vmatprep.subr.mxu0 0.0
        %2482 = vmatpush1.msra.mxu0 0.0
        %2483 = vmatprep.subr.mxu0 0.0
        %2484 = vmatpush1.msra.mxu0 0.0
        %2485 = vmatprep.mubr.f32.mxu0 0.0
        %2486 = vmatmul.mubr.f32.gmra.mrb[0].mxu0 %v2419
        %v2487 = vpop.f32.mrb[0].mxu0
        %v2488 = vadd.f32 0.0, %v2487
        %v2489 = vpop.f32.mrb[0].mxu0
        %2490 = vdwg.mxu0
        %v2491 = vsel %vm618, %v2269, 0.0
        %v2492 = vsel %vm618, %v2342, 0.0
        %v2493 = vadd.f32 %v2491, %v2492
        %v2494 = vsel %vm618, %v2415, 0.0
        %v2495 = vadd.f32 %v2493, %v2494
        %v2496 = vsel %vm618, %v2488, 0.0
        %v2497 = vadd.f32 %v2495, %v2496
        %v2498 = vld [vmem:[%s9] sm:$0x1]
        %v2500 = vlaneseq
        %v2501 = vshrl.u32 %v2500, 7
        %v2502 = vsub.s32 0, %v2501
        %v2503 = vrot.slane %v2498, %v2502
        %v2505 = vadd.f32 %v2497, %v2503
        %v2506 = vadd.f32 %v573, %v2505
        %v2507 = vld [vmem:[%s10] sm:$0x1]
        %v2508 = vld [vmem:[%s11] sm:$0x1]
        %v2509 = vsel %vm618, %v2506, 0.0
        %2510 = vadd.xlane.f32.xlu0 %v2509
        %v2511 = vpop.xlane.xlu0 %2510
        %v2512 = vrcp.pop 32.0
        %v2513 = vmul.f32 %v2511, %v2512
        %v2514 = vsub.f32 %v2506, %v2513
        %v2515 = vmul.f32 %v2514, %v2514
        %v2516 = vsel %vm618, %v2515, 0.0
        %2517 = vadd.xlane.f32.xlu0 %v2516
        %v2518 = vpop.xlane.xlu0 %2517
        %v2519 = vmul.f32 %v2518, %v2512
        %v2520 = vadd.f32 %v2519, 1e-05
        %v2521 = vrsqrt.pop %v2520
        %v2522 = vmul.f32 %v2514, %v2521
        %v2524 = vlaneseq
        %v2525 = vshrl.u32 %v2524, 7
        %v2526 = vsub.s32 0, %v2525
        %v2527 = vrot.slane %v2507, %v2526
        %v2529 = vmul.f32 %v2522, %v2527
        %v2531 = vlaneseq
        %v2532 = vshrl.u32 %v2531, 7
        %v2533 = vsub.s32 0, %v2532
        %v2534 = vrot.slane %v2508, %v2533
        %v2536 = vadd.f32 %v2529, %v2534
        %v2537 = vld [vmem:[%s12] sm:$0xff]
        %v2538 = vld [vmem:[%s12 + $0x8] sm:$0xff]
        %v2539 = vld [vmem:[%s12 + $0x10] sm:$0xff]
        %v2540 = vld [vmem:[%s12 + $0x18] sm:$0xff]
        %v2541 = vld [vmem:[%s13] sm:$0x1]
        %v2543 = vlaneseq
        %v2544 = vshrl.u32 %v2543, 7
        %v2545 = vsub.s32 0, %v2544
        %v2546 = vrot.slane %v2541, %v2545
        %v2549 = vsel %vm618, %v2536, 0
        %2551 = vmatprep.subr.mxu0 0.0
        %2552 = vmatpush1.msra.mxu0 %v2537
        %2553 = vmatprep.subr.mxu0 0.0
        %2554 = vmatpush1.msra.mxu0 %v2538
        %2555 = vmatprep.subr.mxu0 0.0
        %2556 = vmatpush1.msra.mxu0 %v2539
        %2557 = vmatprep.subr.mxu0 0.0
        %2558 = vmatpush1.msra.mxu0 %v2540
        %2559 = vmatprep.subr.mxu0 0.0
        %2560 = vmatpush1.msra.mxu0 0.0
        %2561 = vmatprep.subr.mxu0 0.0
        %2562 = vmatpush1.msra.mxu0 0.0
        %2563 = vmatprep.subr.mxu0 0.0
        %2564 = vmatpush1.msra.mxu0 0.0
        %2565 = vmatprep.subr.mxu0 0.0
        %2566 = vmatpush1.msra.mxu0 0.0
        %2567 = vmatprep.subr.mxu0 0.0
        %2568 = vmatpush1.msra.mxu0 0.0
        %2569 = vmatprep.subr.mxu0 0.0
        %2570 = vmatpush1.msra.mxu0 0.0
        %2571 = vmatprep.subr.mxu0 0.0
        %2572 = vmatpush1.msra.mxu0 0.0
        %2573 = vmatprep.subr.mxu0 0.0
        %2574 = vmatpush1.msra.mxu0 0.0
        %2575 = vmatprep.subr.mxu0 0.0
        %2576 = vmatpush1.msra.mxu0 0.0
        %2577 = vmatprep.subr.mxu0 0.0
        %2578 = vmatpush1.msra.mxu0 0.0
        %2579 = vmatprep.subr.mxu0 0.0
        %2580 = vmatpush1.msra.mxu0 0.0
        %2581 = vmatprep.subr.mxu0 0.0
        %2582 = vmatpush1.msra.mxu0 0.0
        %2583 = vmatprep.subr.mxu0 0.0
        %2584 = vmatpush1.msra.mxu0 0.0
        %2585 = vmatprep.subr.mxu0 0.0
        %2586 = vmatpush1.msra.mxu0 0.0
        %2587 = vmatprep.subr.mxu0 0.0
        %2588 = vmatpush1.msra.mxu0 0.0
        %2589 = vmatprep.subr.mxu0 0.0
        %2590 = vmatpush1.msra.mxu0 0.0
        %2591 = vmatprep.subr.mxu0 0.0
        %2592 = vmatpush1.msra.mxu0 0.0
        %2593 = vmatprep.subr.mxu0 0.0
        %2594 = vmatpush1.msra.mxu0 0.0
        %2595 = vmatprep.subr.mxu0 0.0
        %2596 = vmatpush1.msra.mxu0 0.0
        %2597 = vmatprep.subr.mxu0 0.0
        %2598 = vmatpush1.msra.mxu0 0.0
        %2599 = vmatprep.subr.mxu0 0.0
        %2600 = vmatpush1.msra.mxu0 0.0
        %2601 = vmatprep.subr.mxu0 0.0
        %2602 = vmatpush1.msra.mxu0 0.0
        %2603 = vmatprep.subr.mxu0 0.0
        %2604 = vmatpush1.msra.mxu0 0.0
        %2605 = vmatprep.subr.mxu0 0.0
        %2606 = vmatpush1.msra.mxu0 0.0
        %2607 = vmatprep.subr.mxu0 0.0
        %2608 = vmatpush1.msra.mxu0 0.0
        %2609 = vmatprep.subr.mxu0 0.0
        %2610 = vmatpush1.msra.mxu0 0.0
        %2611 = vmatprep.subr.mxu0 0.0
        %2612 = vmatpush1.msra.mxu0 0.0
        %2613 = vmatprep.subr.mxu0 0.0
        %2614 = vmatpush1.msra.mxu0 0.0
        %2615 = vmatprep.mubr.f32.mxu0 0.0
        %2616 = vmatmul.mubr.f32.gmra.mrb[0].mxu0 %v2549
        %v2617 = vpop.f32.mrb[0].mxu0
        %v2618 = vadd.f32 %v2546, %v2617
        %v2619 = vpop.f32.mrb[0].mxu0
        %2620 = vdwg.mxu0
        %v2621 = vmax.f32 %v2618, 0.0
        %v2622 = vld [vmem:[%s14] sm:$0xff]
        %v2623 = vld [vmem:[%s14 + $0x8] sm:$0xff]
        %v2624 = vld [vmem:[%s14 + $0x10] sm:$0xff]
        %v2625 = vld [vmem:[%s14 + $0x18] sm:$0xff]
        %v2626 = vld [vmem:[%s14 + $0x20] sm:$0xff]
        %v2627 = vld [vmem:[%s14 + $0x28] sm:$0xff]
        %v2628 = vld [vmem:[%s14 + $0x30] sm:$0xff]
        %v2629 = vld [vmem:[%s14 + $0x38] sm:$0xff]
        %v2630 = vld [vmem:[%s15] sm:$0x1]
        %v2632 = vlaneseq
        %v2633 = vshrl.u32 %v2632, 7
        %v2634 = vsub.s32 0, %v2633
        %v2635 = vrot.slane %v2630, %v2634
        %vm2637 = vcmask 523264
        %v2639 = vsel %vm2637, %v2621, 0
        %2641 = vmatprep.subr.mxu0 0.0
        %2642 = vmatpush1.msra.mxu0 %v2622
        %2643 = vmatprep.subr.mxu0 0.0
        %2644 = vmatpush1.msra.mxu0 %v2623
        %2645 = vmatprep.subr.mxu0 0.0
        %2646 = vmatpush1.msra.mxu0 %v2624
        %2647 = vmatprep.subr.mxu0 0.0
        %2648 = vmatpush1.msra.mxu0 %v2625
        %2649 = vmatprep.subr.mxu0 0.0
        %2650 = vmatpush1.msra.mxu0 %v2626
        %2651 = vmatprep.subr.mxu0 0.0
        %2652 = vmatpush1.msra.mxu0 %v2627
        %2653 = vmatprep.subr.mxu0 0.0
        %2654 = vmatpush1.msra.mxu0 %v2628
        %2655 = vmatprep.subr.mxu0 0.0
        %2656 = vmatpush1.msra.mxu0 %v2629
        %2657 = vmatprep.subr.mxu0 0.0
        %2658 = vmatpush1.msra.mxu0 0.0
        %2659 = vmatprep.subr.mxu0 0.0
        %2660 = vmatpush1.msra.mxu0 0.0
        %2661 = vmatprep.subr.mxu0 0.0
        %2662 = vmatpush1.msra.mxu0 0.0
        %2663 = vmatprep.subr.mxu0 0.0
        %2664 = vmatpush1.msra.mxu0 0.0
        %2665 = vmatprep.subr.mxu0 0.0
        %2666 = vmatpush1.msra.mxu0 0.0
        %2667 = vmatprep.subr.mxu0 0.0
        %2668 = vmatpush1.msra.mxu0 0.0
        %2669 = vmatprep.subr.mxu0 0.0
        %2670 = vmatpush1.msra.mxu0 0.0
        %2671 = vmatprep.subr.mxu0 0.0
        %2672 = vmatpush1.msra.mxu0 0.0
        %2673 = vmatprep.subr.mxu0 0.0
        %2674 = vmatpush1.msra.mxu0 0.0
        %2675 = vmatprep.subr.mxu0 0.0
        %2676 = vmatpush1.msra.mxu0 0.0
        %2677 = vmatprep.subr.mxu0 0.0
        %2678 = vmatpush1.msra.mxu0 0.0
        %2679 = vmatprep.subr.mxu0 0.0
        %2680 = vmatpush1.msra.mxu0 0.0
        %2681 = vmatprep.subr.mxu0 0.0
        %2682 = vmatpush1.msra.mxu0 0.0
        %2683 = vmatprep.subr.mxu0 0.0
        %2684 = vmatpush1.msra.mxu0 0.0
        %2685 = vmatprep.subr.mxu0 0.0
        %2686 = vmatpush1.msra.mxu0 0.0
        %2687 = vmatprep.subr.mxu0 0.0
        %2688 = vmatpush1.msra.mxu0 0.0
        %2689 = vmatprep.subr.mxu0 0.0
        %2690 = vmatpush1.msra.mxu0 0.0
        %2691 = vmatprep.subr.mxu0 0.0
        %2692 = vmatpush1.msra.mxu0 0.0
        %2693 = vmatprep.subr.mxu0 0.0
        %2694 = vmatpush1.msra.mxu0 0.0
        %2695 = vmatprep.subr.mxu0 0.0
        %2696 = vmatpush1.msra.mxu0 0.0
        %2697 = vmatprep.subr.mxu0 0.0
        %2698 = vmatpush1.msra.mxu0 0.0
        %2699 = vmatprep.subr.mxu0 0.0
        %2700 = vmatpush1.msra.mxu0 0.0
        %2701 = vmatprep.subr.mxu0 0.0
        %2702 = vmatpush1.msra.mxu0 0.0
        %2703 = vmatprep.subr.mxu0 0.0
        %2704 = vmatpush1.msra.mxu0 0.0
        %2705 = vmatprep.mubr.f32.mxu0 0.0
        %2706 = vmatmul.mubr.f32.gmra.mrb[0].mxu0 %v2639
        %v2707 = vpop.f32.mrb[0].mxu0
        %v2708 = vadd.f32 %v2635, %v2707
        %v2709 = vpop.f32.mrb[0].mxu0
        %2710 = vdwg.mxu0
        %v2711 = vadd.f32 %v2536, %v2708
        %v2712 = vld [vmem:[%s16] sm:$0x1]
        %v2713 = vld [vmem:[%s17] sm:$0x1]
        %v2714 = vsel %vm618, %v2711, 0.0
        %2715 = vadd.xlane.f32.xlu0 %v2714
        %v2716 = vpop.xlane.xlu0 %2715
        %v2717 = vmul.f32 %v2716, %v2512
        %v2718 = vsub.f32 %v2711, %v2717
        %v2719 = vmul.f32 %v2718, %v2718
        %v2720 = vsel %vm618, %v2719, 0.0
        %2721 = vadd.xlane.f32.xlu0 %v2720
        %v2722 = vpop.xlane.xlu0 %2721
        %v2723 = vmul.f32 %v2722, %v2512
        %v2724 = vadd.f32 %v2723, 1e-05
        %v2725 = vrsqrt.pop %v2724
        %v2726 = vmul.f32 %v2718, %v2725
        %v2728 = vlaneseq
        %v2729 = vshrl.u32 %v2728, 7
        %v2730 = vsub.s32 0, %v2729
        %v2731 = vrot.slane %v2712, %v2730
        %v2733 = vmul.f32 %v2726, %v2731
        %v2735 = vlaneseq
        %v2736 = vshrl.u32 %v2735, 7
        %v2737 = vsub.s32 0, %v2736
        %v2738 = vrot.slane %v2713, %v2737
        %v2740 = vadd.f32 %v2733, %v2738
        %s2741 = scalar_lea.vmem %s2, 128
        %v2742 = vld [vmem:[%s2741] sm:$0xff]
        %v2743 = vld [vmem:[%s2741 + $0x8] sm:$0xff]
        %v2744 = vld [vmem:[%s2741 + $0x10] sm:$0xff]
        %v2745 = vld [vmem:[%s2741 + $0x18] sm:$0xff]
        %v2746 = vld [vmem:[%s2741 + $0x20] sm:$0xff]
        %v2747 = vld [vmem:[%s2741 + $0x28] sm:$0xff]
        %v2748 = vld [vmem:[%s2741 + $0x30] sm:$0xff]
        %v2749 = vld [vmem:[%s2741 + $0x38] sm:$0xff]
        %v2750 = vld [vmem:[%s2741 + $0x40] sm:$0xff]
        %v2751 = vld [vmem:[%s2741 + $0x48] sm:$0xff]
        %v2752 = vld [vmem:[%s2741 + $0x50] sm:$0xff]
        %v2753 = vld [vmem:[%s2741 + $0x58] sm:$0xff]
        %v2754 = vld [vmem:[%s2741 + $0x60] sm:$0xff]
        %v2755 = vld [vmem:[%s2741 + $0x68] sm:$0xff]
        %v2756 = vld [vmem:[%s2741 + $0x70] sm:$0xff]
        %v2757 = vld [vmem:[%s2741 + $0x78] sm:$0xff]
        %s2758 = scalar_lea.vmem %s3, 4
        %v2759 = vld [vmem:[%s2758] sm:$0x1]
        %v2760 = vld [vmem:[%s2758 + $0x1] sm:$0x1]
        %v2761 = vld [vmem:[%s2758 + $0x2] sm:$0x1]
        %v2762 = vld [vmem:[%s2758 + $0x3] sm:$0x1]
        %v2767 = vlaneseq
        %v2768 = vshrl.u32 %v2767, 7
        %v2769 = vsub.s32 0, %v2768
        %v2770 = vrot.slane %v2759, %v2769
        %v2771 = vlaneseq
        %v2772 = vshrl.u32 %v2771, 7
        %v2773 = vsub.s32 0, %v2772
        %v2774 = vrot.slane %v2760, %v2773
        %v2775 = vlaneseq
        %v2776 = vshrl.u32 %v2775, 7
        %v2777 = vsub.s32 0, %v2776
        %v2778 = vrot.slane %v2761, %v2777
        %v2779 = vlaneseq
        %v2780 = vshrl.u32 %v2779, 7
        %v2781 = vsub.s32 0, %v2780
        %v2782 = vrot.slane %v2762, %v2781
        %v2788 = vsel %vm618, %v2740, 0
        %2790 = vmatprep.subr.mxu0 0.0
        %2791 = vmatpush1.msra.mxu0 %v2742
        %2792 = vmatprep.subr.mxu0 0.0
        %2793 = vmatpush1.msra.mxu0 %v2743
        %2794 = vmatprep.subr.mxu0 0.0
        %2795 = vmatpush1.msra.mxu0 %v2744
        %2796 = vmatprep.subr.mxu0 0.0
        %2797 = vmatpush1.msra.mxu0 %v2745
        %2798 = vmatprep.subr.mxu0 0.0
        %2799 = vmatpush1.msra.mxu0 0.0
        %2800 = vmatprep.subr.mxu0 0.0
        %2801 = vmatpush1.msra.mxu0 0.0
        %2802 = vmatprep.subr.mxu0 0.0
        %2803 = vmatpush1.msra.mxu0 0.0
        %2804 = vmatprep.subr.mxu0 0.0
        %2805 = vmatpush1.msra.mxu0 0.0
        %2806 = vmatprep.subr.mxu0 0.0
        %2807 = vmatpush1.msra.mxu0 0.0
        %2808 = vmatprep.subr.mxu0 0.0
        %2809 = vmatpush1.msra.mxu0 0.0
        %2810 = vmatprep.subr.mxu0 0.0
        %2811 = vmatpush1.msra.mxu0 0.0
        %2812 = vmatprep.subr.mxu0 0.0
        %2813 = vmatpush1.msra.mxu0 0.0
        %2814 = vmatprep.subr.mxu0 0.0
        %2815 = vmatpush1.msra.mxu0 0.0
        %2816 = vmatprep.subr.mxu0 0.0
        %2817 = vmatpush1.msra.mxu0 0.0
        %2818 = vmatprep.subr.mxu0 0.0
        %2819 = vmatpush1.msra.mxu0 0.0
        %2820 = vmatprep.subr.mxu0 0.0
        %2821 = vmatpush1.msra.mxu0 0.0
        %2822 = vmatprep.subr.mxu0 0.0
        %2823 = vmatpush1.msra.mxu0 0.0
        %2824 = vmatprep.subr.mxu0 0.0
        %2825 = vmatpush1.msra.mxu0 0.0
        %2826 = vmatprep.subr.mxu0 0.0
        %2827 = vmatpush1.msra.mxu0 0.0
        %2828 = vmatprep.subr.mxu0 0.0
        %2829 = vmatpush1.msra.mxu0 0.0
        %2830 = vmatprep.subr.mxu0 0.0
        %2831 = vmatpush1.msra.mxu0 0.0
        %2832 = vmatprep.subr.mxu0 0.0
        %2833 = vmatpush1.msra.mxu0 0.0
        %2834 = vmatprep.subr.mxu0 0.0
        %2835 = vmatpush1.msra.mxu0 0.0
        %2836 = vmatprep.subr.mxu0 0.0
        %2837 = vmatpush1.msra.mxu0 0.0
        %2838 = vmatprep.subr.mxu0 0.0
        %2839 = vmatpush1.msra.mxu0 0.0
        %2840 = vmatprep.subr.mxu0 0.0
        %2841 = vmatpush1.msra.mxu0 0.0
        %2842 = vmatprep.subr.mxu0 0.0
        %2843 = vmatpush1.msra.mxu0 0.0
        %2844 = vmatprep.subr.mxu0 0.0
        %2845 = vmatpush1.msra.mxu0 0.0
        %2846 = vmatprep.subr.mxu0 0.0
        %2847 = vmatpush1.msra.mxu0 0.0
        %2848 = vmatprep.subr.mxu0 0.0
        %2849 = vmatpush1.msra.mxu0 0.0
        %2850 = vmatprep.subr.mxu0 0.0
        %2851 = vmatpush1.msra.mxu0 0.0
        %2852 = vmatprep.subr.mxu0 0.0
        %2853 = vmatpush1.msra.mxu0 0.0
        %2854 = vmatprep.mubr.f32.mxu0 0.0
        %2855 = vmatmul.mubr.f32.gmra.mrb[0].mxu0 %v2788
        %v2856 = vpop.f32.mrb[0].mxu0
        %v2857 = vadd.f32 %v2770, %v2856
        %v2858 = vpop.f32.mrb[0].mxu0
        %2859 = vdwg.mxu0
        %2860 = vmatprep.subr.mxu0 0.0
        %2861 = vmatpush1.msra.mxu0 %v2746
        %2862 = vmatprep.subr.mxu0 0.0
        %2863 = vmatpush1.msra.mxu0 %v2747
        %2864 = vmatprep.subr.mxu0 0.0
        %2865 = vmatpush1.msra.mxu0 %v2748
        %2866 = vmatprep.subr.mxu0 0.0
        %2867 = vmatpush1.msra.mxu0 %v2749
        %2868 = vmatprep.subr.mxu0 0.0
        %2869 = vmatpush1.msra.mxu0 0.0
        %2870 = vmatprep.subr.mxu0 0.0
        %2871 = vmatpush1.msra.mxu0 0.0
        %2872 = vmatprep.subr.mxu0 0.0
        %2873 = vmatpush1.msra.mxu0 0.0
        %2874 = vmatprep.subr.mxu0 0.0
        %2875 = vmatpush1.msra.mxu0 0.0
        %2876 = vmatprep.subr.mxu0 0.0
        %2877 = vmatpush1.msra.mxu0 0.0
        %2878 = vmatprep.subr.mxu0 0.0
        %2879 = vmatpush1.msra.mxu0 0.0
        %2880 = vmatprep.subr.mxu0 0.0
        %2881 = vmatpush1.msra.mxu0 0.0
        %2882 = vmatprep.subr.mxu0 0.0
        %2883 = vmatpush1.msra.mxu0 0.0
        %2884 = vmatprep.subr.mxu0 0.0
        %2885 = vmatpush1.msra.mxu0 0.0
        %2886 = vmatprep.subr.mxu0 0.0
        %2887 = vmatpush1.msra.mxu0 0.0
        %2888 = vmatprep.subr.mxu0 0.0
        %2889 = vmatpush1.msra.mxu0 0.0
        %2890 = vmatprep.subr.mxu0 0.0
        %2891 = vmatpush1.msra.mxu0 0.0
        %2892 = vmatprep.subr.mxu0 0.0
        %2893 = vmatpush1.msra.mxu0 0.0
        %2894 = vmatprep.subr.mxu0 0.0
        %2895 = vmatpush1.msra.mxu0 0.0
        %2896 = vmatprep.subr.mxu0 0.0
        %2897 = vmatpush1.msra.mxu0 0.0
        %2898 = vmatprep.subr.mxu0 0.0
        %2899 = vmatpush1.msra.mxu0 0.0
        %2900 = vmatprep.subr.mxu0 0.0
        %2901 = vmatpush1.msra.mxu0 0.0
        %2902 = vmatprep.subr.mxu0 0.0
        %2903 = vmatpush1.msra.mxu0 0.0
        %2904 = vmatprep.subr.mxu0 0.0
        %2905 = vmatpush1.msra.mxu0 0.0
        %2906 = vmatprep.subr.mxu0 0.0
        %2907 = vmatpush1.msra.mxu0 0.0
        %2908 = vmatprep.subr.mxu0 0.0
        %2909 = vmatpush1.msra.mxu0 0.0
        %2910 = vmatprep.subr.mxu0 0.0
        %2911 = vmatpush1.msra.mxu0 0.0
        %2912 = vmatprep.subr.mxu0 0.0
        %2913 = vmatpush1.msra.mxu0 0.0
        %2914 = vmatprep.subr.mxu0 0.0
        %2915 = vmatpush1.msra.mxu0 0.0
        %2916 = vmatprep.subr.mxu0 0.0
        %2917 = vmatpush1.msra.mxu0 0.0
        %2918 = vmatprep.subr.mxu0 0.0
        %2919 = vmatpush1.msra.mxu0 0.0
        %2920 = vmatprep.subr.mxu0 0.0
        %2921 = vmatpush1.msra.mxu0 0.0
        %2922 = vmatprep.subr.mxu0 0.0
        %2923 = vmatpush1.msra.mxu0 0.0
        %2924 = vmatprep.mubr.f32.mxu0 0.0
        %2925 = vmatmul.mubr.f32.gmra.mrb[0].mxu0 %v2788
        %v2926 = vpop.f32.mrb[0].mxu0
        %v2927 = vadd.f32 %v2774, %v2926
        %v2928 = vpop.f32.mrb[0].mxu0
        %2929 = vdwg.mxu0
        %2930 = vmatprep.subr.mxu0 0.0
        %2931 = vmatpush1.msra.mxu0 %v2750
        %2932 = vmatprep.subr.mxu0 0.0
        %2933 = vmatpush1.msra.mxu0 %v2751
        %2934 = vmatprep.subr.mxu0 0.0
        %2935 = vmatpush1.msra.mxu0 %v2752
        %2936 = vmatprep.subr.mxu0 0.0
        %2937 = vmatpush1.msra.mxu0 %v2753
        %2938 = vmatprep.subr.mxu0 0.0
        %2939 = vmatpush1.msra.mxu0 0.0
        %2940 = vmatprep.subr.mxu0 0.0
        %2941 = vmatpush1.msra.mxu0 0.0
        %2942 = vmatprep.subr.mxu0 0.0
        %2943 = vmatpush1.msra.mxu0 0.0
        %2944 = vmatprep.subr.mxu0 0.0
        %2945 = vmatpush1.msra.mxu0 0.0
        %2946 = vmatprep.subr.mxu0 0.0
        %2947 = vmatpush1.msra.mxu0 0.0
        %2948 = vmatprep.subr.mxu0 0.0
        %2949 = vmatpush1.msra.mxu0 0.0
        %2950 = vmatprep.subr.mxu0 0.0
        %2951 = vmatpush1.msra.mxu0 0.0
        %2952 = vmatprep.subr.mxu0 0.0
        %2953 = vmatpush1.msra.mxu0 0.0
        %2954 = vmatprep.subr.mxu0 0.0
        %2955 = vmatpush1.msra.mxu0 0.0
        %2956 = vmatprep.subr.mxu0 0.0
        %2957 = vmatpush1.msra.mxu0 0.0
        %2958 = vmatprep.subr.mxu0 0.0
        %2959 = vmatpush1.msra.mxu0 0.0
        %2960 = vmatprep.subr.mxu0 0.0
        %2961 = vmatpush1.msra.mxu0 0.0
        %2962 = vmatprep.subr.mxu0 0.0
        %2963 = vmatpush1.msra.mxu0 0.0
        %2964 = vmatprep.subr.mxu0 0.0
        %2965 = vmatpush1.msra.mxu0 0.0
        %2966 = vmatprep.subr.mxu0 0.0
        %2967 = vmatpush1.msra.mxu0 0.0
        %2968 = vmatprep.subr.mxu0 0.0
        %2969 = vmatpush1.msra.mxu0 0.0
        %2970 = vmatprep.subr.mxu0 0.0
        %2971 = vmatpush1.msra.mxu0 0.0
        %2972 = vmatprep.subr.mxu0 0.0
        %2973 = vmatpush1.msra.mxu0 0.0
        %2974 = vmatprep.subr.mxu0 0.0
        %2975 = vmatpush1.msra.mxu0 0.0
        %2976 = vmatprep.subr.mxu0 0.0
        %2977 = vmatpush1.msra.mxu0 0.0
        %2978 = vmatprep.subr.mxu0 0.0
        %2979 = vmatpush1.msra.mxu0 0.0
        %2980 = vmatprep.subr.mxu0 0.0
        %2981 = vmatpush1.msra.mxu0 0.0
        %2982 = vmatprep.subr.mxu0 0.0
        %2983 = vmatpush1.msra.mxu0 0.0
        %2984 = vmatprep.subr.mxu0 0.0
        %2985 = vmatpush1.msra.mxu0 0.0
        %2986 = vmatprep.subr.mxu0 0.0
        %2987 = vmatpush1.msra.mxu0 0.0
        %2988 = vmatprep.subr.mxu0 0.0
        %2989 = vmatpush1.msra.mxu0 0.0
        %2990 = vmatprep.subr.mxu0 0.0
        %2991 = vmatpush1.msra.mxu0 0.0
        %2992 = vmatprep.subr.mxu0 0.0
        %2993 = vmatpush1.msra.mxu0 0.0
        %2994 = vmatprep.mubr.f32.mxu0 0.0
        %2995 = vmatmul.mubr.f32.gmra.mrb[0].mxu0 %v2788
        %v2996 = vpop.f32.mrb[0].mxu0
        %v2997 = vadd.f32 %v2778, %v2996
        %v2998 = vpop.f32.mrb[0].mxu0
        %2999 = vdwg.mxu0
        %3000 = vmatprep.subr.mxu0 0.0
        %3001 = vmatpush1.msra.mxu0 %v2754
        %3002 = vmatprep.subr.mxu0 0.0
        %3003 = vmatpush1.msra.mxu0 %v2755
        %3004 = vmatprep.subr.mxu0 0.0
        %3005 = vmatpush1.msra.mxu0 %v2756
        %3006 = vmatprep.subr.mxu0 0.0
        %3007 = vmatpush1.msra.mxu0 %v2757
        %3008 = vmatprep.subr.mxu0 0.0
        %3009 = vmatpush1.msra.mxu0 0.0
        %3010 = vmatprep.subr.mxu0 0.0
        %3011 = vmatpush1.msra.mxu0 0.0
        %3012 = vmatprep.subr.mxu0 0.0
        %3013 = vmatpush1.msra.mxu0 0.0
        %3014 = vmatprep.subr.mxu0 0.0
        %3015 = vmatpush1.msra.mxu0 0.0
        %3016 = vmatprep.subr.mxu0 0.0
        %3017 = vmatpush1.msra.mxu0 0.0
        %3018 = vmatprep.subr.mxu0 0.0
        %3019 = vmatpush1.msra.mxu0 0.0
        %3020 = vmatprep.subr.mxu0 0.0
        %3021 = vmatpush1.msra.mxu0 0.0
        %3022 = vmatprep.subr.mxu0 0.0
        %3023 = vmatpush1.msra.mxu0 0.0
        %3024 = vmatprep.subr.mxu0 0.0
        %3025 = vmatpush1.msra.mxu0 0.0
        %3026 = vmatprep.subr.mxu0 0.0
        %3027 = vmatpush1.msra.mxu0 0.0
        %3028 = vmatprep.subr.mxu0 0.0
        %3029 = vmatpush1.msra.mxu0 0.0
        %3030 = vmatprep.subr.mxu0 0.0
        %3031 = vmatpush1.msra.mxu0 0.0
        %3032 = vmatprep.subr.mxu0 0.0
        %3033 = vmatpush1.msra.mxu0 0.0
        %3034 = vmatprep.subr.mxu0 0.0
        %3035 = vmatpush1.msra.mxu0 0.0
        %3036 = vmatprep.subr.mxu0 0.0
        %3037 = vmatpush1.msra.mxu0 0.0
        %3038 = vmatprep.subr.mxu0 0.0
        %3039 = vmatpush1.msra.mxu0 0.0
        %3040 = vmatprep.subr.mxu0 0.0
        %3041 = vmatpush1.msra.mxu0 0.0
        %3042 = vmatprep.subr.mxu0 0.0
        %3043 = vmatpush1.msra.mxu0 0.0
        %3044 = vmatprep.subr.mxu0 0.0
        %3045 = vmatpush1.msra.mxu0 0.0
        %3046 = vmatprep.subr.mxu0 0.0
        %3047 = vmatpush1.msra.mxu0 0.0
        %3048 = vmatprep.subr.mxu0 0.0
        %3049 = vmatpush1.msra.mxu0 0.0
        %3050 = vmatprep.subr.mxu0 0.0
        %3051 = vmatpush1.msra.mxu0 0.0
        %3052 = vmatprep.subr.mxu0 0.0
        %3053 = vmatpush1.msra.mxu0 0.0
        %3054 = vmatprep.subr.mxu0 0.0
        %3055 = vmatpush1.msra.mxu0 0.0
        %3056 = vmatprep.subr.mxu0 0.0
        %3057 = vmatpush1.msra.mxu0 0.0
        %3058 = vmatprep.subr.mxu0 0.0
        %3059 = vmatpush1.msra.mxu0 0.0
        %3060 = vmatprep.subr.mxu0 0.0
        %3061 = vmatpush1.msra.mxu0 0.0
        %3062 = vmatprep.subr.mxu0 0.0
        %3063 = vmatpush1.msra.mxu0 0.0
        %3064 = vmatprep.mubr.f32.mxu0 0.0
        %3065 = vmatmul.mubr.f32.gmra.mrb[0].mxu0 %v2788
        %v3066 = vpop.f32.mrb[0].mxu0
        %v3067 = vadd.f32 %v2782, %v3066
        %v3068 = vpop.f32.mrb[0].mxu0
        %3069 = vdwg.mxu0
        %s3070 = scalar_lea.vmem %s4, 128
        %v3071 = vld [vmem:[%s3070] sm:$0xff]
        %v3072 = vld [vmem:[%s3070 + $0x8] sm:$0xff]
        %v3073 = vld [vmem:[%s3070 + $0x10] sm:$0xff]
        %v3074 = vld [vmem:[%s3070 + $0x18] sm:$0xff]
        %v3075 = vld [vmem:[%s3070 + $0x20] sm:$0xff]
        %v3076 = vld [vmem:[%s3070 + $0x28] sm:$0xff]
        %v3077 = vld [vmem:[%s3070 + $0x30] sm:$0xff]
        %v3078 = vld [vmem:[%s3070 + $0x38] sm:$0xff]
        %v3079 = vld [vmem:[%s3070 + $0x40] sm:$0xff]
        %v3080 = vld [vmem:[%s3070 + $0x48] sm:$0xff]
        %v3081 = vld [vmem:[%s3070 + $0x50] sm:$0xff]
        %v3082 = vld [vmem:[%s3070 + $0x58] sm:$0xff]
        %v3083 = vld [vmem:[%s3070 + $0x60] sm:$0xff]
        %v3084 = vld [vmem:[%s3070 + $0x68] sm:$0xff]
        %v3085 = vld [vmem:[%s3070 + $0x70] sm:$0xff]
        %v3086 = vld [vmem:[%s3070 + $0x78] sm:$0xff]
        %s3087 = scalar_lea.vmem %s5, 4
        %v3088 = vld [vmem:[%s3087] sm:$0x1]
        %v3089 = vld [vmem:[%s3087 + $0x1] sm:$0x1]
        %v3090 = vld [vmem:[%s3087 + $0x2] sm:$0x1]
        %v3091 = vld [vmem:[%s3087 + $0x3] sm:$0x1]
        %v3096 = vlaneseq
        %v3097 = vshrl.u32 %v3096, 7
        %v3098 = vsub.s32 0, %v3097
        %v3099 = vrot.slane %v3088, %v3098
        %v3100 = vlaneseq
        %v3101 = vshrl.u32 %v3100, 7
        %v3102 = vsub.s32 0, %v3101
        %v3103 = vrot.slane %v3089, %v3102
        %v3104 = vlaneseq
        %v3105 = vshrl.u32 %v3104, 7
        %v3106 = vsub.s32 0, %v3105
        %v3107 = vrot.slane %v3090, %v3106
        %v3108 = vlaneseq
        %v3109 = vshrl.u32 %v3108, 7
        %v3110 = vsub.s32 0, %v3109
        %v3111 = vrot.slane %v3091, %v3110
        %3116 = vmatprep.subr.mxu0 0.0
        %3117 = vmatpush1.msra.mxu0 %v3071
        %3118 = vmatprep.subr.mxu0 0.0
        %3119 = vmatpush1.msra.mxu0 %v3072
        %3120 = vmatprep.subr.mxu0 0.0
        %3121 = vmatpush1.msra.mxu0 %v3073
        %3122 = vmatprep.subr.mxu0 0.0
        %3123 = vmatpush1.msra.mxu0 %v3074
        %3124 = vmatprep.subr.mxu0 0.0
        %3125 = vmatpush1.msra.mxu0 0.0
        %3126 = vmatprep.subr.mxu0 0.0
        %3127 = vmatpush1.msra.mxu0 0.0
        %3128 = vmatprep.subr.mxu0 0.0
        %3129 = vmatpush1.msra.mxu0 0.0
        %3130 = vmatprep.subr.mxu0 0.0
        %3131 = vmatpush1.msra.mxu0 0.0
        %3132 = vmatprep.subr.mxu0 0.0
        %3133 = vmatpush1.msra.mxu0 0.0
        %3134 = vmatprep.subr.mxu0 0.0
        %3135 = vmatpush1.msra.mxu0 0.0
        %3136 = vmatprep.subr.mxu0 0.0
        %3137 = vmatpush1.msra.mxu0 0.0
        %3138 = vmatprep.subr.mxu0 0.0
        %3139 = vmatpush1.msra.mxu0 0.0
        %3140 = vmatprep.subr.mxu0 0.0
        %3141 = vmatpush1.msra.mxu0 0.0
        %3142 = vmatprep.subr.mxu0 0.0
        %3143 = vmatpush1.msra.mxu0 0.0
        %3144 = vmatprep.subr.mxu0 0.0
        %3145 = vmatpush1.msra.mxu0 0.0
        %3146 = vmatprep.subr.mxu0 0.0
        %3147 = vmatpush1.msra.mxu0 0.0
        %3148 = vmatprep.subr.mxu0 0.0
        %3149 = vmatpush1.msra.mxu0 0.0
        %3150 = vmatprep.subr.mxu0 0.0
        %3151 = vmatpush1.msra.mxu0 0.0
        %3152 = vmatprep.subr.mxu0 0.0
        %3153 = vmatpush1.msra.mxu0 0.0
        %3154 = vmatprep.subr.mxu0 0.0
        %3155 = vmatpush1.msra.mxu0 0.0
        %3156 = vmatprep.subr.mxu0 0.0
        %3157 = vmatpush1.msra.mxu0 0.0
        %3158 = vmatprep.subr.mxu0 0.0
        %3159 = vmatpush1.msra.mxu0 0.0
        %3160 = vmatprep.subr.mxu0 0.0
        %3161 = vmatpush1.msra.mxu0 0.0
        %3162 = vmatprep.subr.mxu0 0.0
        %3163 = vmatpush1.msra.mxu0 0.0
        %3164 = vmatprep.subr.mxu0 0.0
        %3165 = vmatpush1.msra.mxu0 0.0
        %3166 = vmatprep.subr.mxu0 0.0
        %3167 = vmatpush1.msra.mxu0 0.0
        %3168 = vmatprep.subr.mxu0 0.0
        %3169 = vmatpush1.msra.mxu0 0.0
        %3170 = vmatprep.subr.mxu0 0.0
        %3171 = vmatpush1.msra.mxu0 0.0
        %3172 = vmatprep.subr.mxu0 0.0
        %3173 = vmatpush1.msra.mxu0 0.0
        %3174 = vmatprep.subr.mxu0 0.0
        %3175 = vmatpush1.msra.mxu0 0.0
        %3176 = vmatprep.subr.mxu0 0.0
        %3177 = vmatpush1.msra.mxu0 0.0
        %3178 = vmatprep.subr.mxu0 0.0
        %3179 = vmatpush1.msra.mxu0 0.0
        %3180 = vmatprep.mubr.f32.mxu0 0.0
        %3181 = vmatmul.mubr.f32.gmra.mrb[0].mxu0 %v2788
        %v3182 = vpop.f32.mrb[0].mxu0
        %v3183 = vadd.f32 %v3099, %v3182
        %v3184 = vpop.f32.mrb[0].mxu0
        %3185 = vdwg.mxu0
        %3186 = vmatprep.subr.mxu0 0.0
        %3187 = vmatpush1.msra.mxu0 %v3075
        %3188 = vmatprep.subr.mxu0 0.0
        %3189 = vmatpush1.msra.mxu0 %v3076
        %3190 = vmatprep.subr.mxu0 0.0
        %3191 = vmatpush1.msra.mxu0 %v3077
        %3192 = vmatprep.subr.mxu0 0.0
        %3193 = vmatpush1.msra.mxu0 %v3078
        %3194 = vmatprep.subr.mxu0 0.0
        %3195 = vmatpush1.msra.mxu0 0.0
        %3196 = vmatprep.subr.mxu0 0.0
        %3197 = vmatpush1.msra.mxu0 0.0
        %3198 = vmatprep.subr.mxu0 0.0
        %3199 = vmatpush1.msra.mxu0 0.0
        %3200 = vmatprep.subr.mxu0 0.0
        %3201 = vmatpush1.msra.mxu0 0.0
        %3202 = vmatprep.subr.mxu0 0.0
        %3203 = vmatpush1.msra.mxu0 0.0
        %3204 = vmatprep.subr.mxu0 0.0
        %3205 = vmatpush1.msra.mxu0 0.0
        %3206 = vmatprep.subr.mxu0 0.0
        %3207 = vmatpush1.msra.mxu0 0.0
        %3208 = vmatprep.subr.mxu0 0.0
        %3209 = vmatpush1.msra.mxu0 0.0
        %3210 = vmatprep.subr.mxu0 0.0
        %3211 = vmatpush1.msra.mxu0 0.0
        %3212 = vmatprep.subr.mxu0 0.0
        %3213 = vmatpush1.msra.mxu0 0.0
        %3214 = vmatprep.subr.mxu0 0.0
        %3215 = vmatpush1.msra.mxu0 0.0
        %3216 = vmatprep.subr.mxu0 0.0
        %3217 = vmatpush1.msra.mxu0 0.0
        %3218 = vmatprep.subr.mxu0 0.0
        %3219 = vmatpush1.msra.mxu0 0.0
        %3220 = vmatprep.subr.mxu0 0.0
        %3221 = vmatpush1.msra.mxu0 0.0
        %3222 = vmatprep.subr.mxu0 0.0
        %3223 = vmatpush1.msra.mxu0 0.0
        %3224 = vmatprep.subr.mxu0 0.0
        %3225 = vmatpush1.msra.mxu0 0.0
        %3226 = vmatprep.subr.mxu0 0.0
        %3227 = vmatpush1.msra.mxu0 0.0
        %3228 = vmatprep.subr.mxu0 0.0
        %3229 = vmatpush1.msra.mxu0 0.0
        %3230 = vmatprep.subr.mxu0 0.0
        %3231 = vmatpush1.msra.mxu0 0.0
        %3232 = vmatprep.subr.mxu0 0.0
        %3233 = vmatpush1.msra.mxu0 0.0
        %3234 = vmatprep.subr.mxu0 0.0
        %3235 = vmatpush1.msra.mxu0 0.0
        %3236 = vmatprep.subr.mxu0 0.0
        %3237 = vmatpush1.msra.mxu0 0.0
        %3238 = vmatprep.subr.mxu0 0.0
        %3239 = vmatpush1.msra.mxu0 0.0
        %3240 = vmatprep.subr.mxu0 0.0
        %3241 = vmatpush1.msra.mxu0 0.0
        %3242 = vmatprep.subr.mxu0 0.0
        %3243 = vmatpush1.msra.mxu0 0.0
        %3244 = vmatprep.subr.mxu0 0.0
        %3245 = vmatpush1.msra.mxu0 0.0
        %3246 = vmatprep.subr.mxu0 0.0
        %3247 = vmatpush1.msra.mxu0 0.0
        %3248 = vmatprep.subr.mxu0 0.0
        %3249 = vmatpush1.msra.mxu0 0.0
        %3250 = vmatprep.mubr.f32.mxu0 0.0
        %3251 = vmatmul.mubr.f32.gmra.mrb[0].mxu0 %v2788
        %v3252 = vpop.f32.mrb[0].mxu0
        %v3253 = vadd.f32 %v3103, %v3252
        %v3254 = vpop.f32.mrb[0].mxu0
        %3255 = vdwg.mxu0
        %3256 = vmatprep.subr.mxu0 0.0
        %3257 = vmatpush1.msra.mxu0 %v3079
        %3258 = vmatprep.subr.mxu0 0.0
        %3259 = vmatpush1.msra.mxu0 %v3080
        %3260 = vmatprep.subr.mxu0 0.0
        %3261 = vmatpush1.msra.mxu0 %v3081
        %3262 = vmatprep.subr.mxu0 0.0
        %3263 = vmatpush1.msra.mxu0 %v3082
        %3264 = vmatprep.subr.mxu0 0.0
        %3265 = vmatpush1.msra.mxu0 0.0
        %3266 = vmatprep.subr.mxu0 0.0
        %3267 = vmatpush1.msra.mxu0 0.0
        %3268 = vmatprep.subr.mxu0 0.0
        %3269 = vmatpush1.msra.mxu0 0.0
        %3270 = vmatprep.subr.mxu0 0.0
        %3271 = vmatpush1.msra.mxu0 0.0
        %3272 = vmatprep.subr.mxu0 0.0
        %3273 = vmatpush1.msra.mxu0 0.0
        %3274 = vmatprep.subr.mxu0 0.0
        %3275 = vmatpush1.msra.mxu0 0.0
        %3276 = vmatprep.subr.mxu0 0.0
        %3277 = vmatpush1.msra.mxu0 0.0
        %3278 = vmatprep.subr.mxu0 0.0
        %3279 = vmatpush1.msra.mxu0 0.0
        %3280 = vmatprep.subr.mxu0 0.0
        %3281 = vmatpush1.msra.mxu0 0.0
        %3282 = vmatprep.subr.mxu0 0.0
        %3283 = vmatpush1.msra.mxu0 0.0
        %3284 = vmatprep.subr.mxu0 0.0
        %3285 = vmatpush1.msra.mxu0 0.0
        %3286 = vmatprep.subr.mxu0 0.0
        %3287 = vmatpush1.msra.mxu0 0.0
        %3288 = vmatprep.subr.mxu0 0.0
        %3289 = vmatpush1.msra.mxu0 0.0
        %3290 = vmatprep.subr.mxu0 0.0
        %3291 = vmatpush1.msra.mxu0 0.0
        %3292 = vmatprep.subr.mxu0 0.0
        %3293 = vmatpush1.msra.mxu0 0.0
        %3294 = vmatprep.subr.mxu0 0.0
        %3295 = vmatpush1.msra.mxu0 0.0
        %3296 = vmatprep.subr.mxu0 0.0
        %3297 = vmatpush1.msra.mxu0 0.0
        %3298 = vmatprep.subr.mxu0 0.0
        %3299 = vmatpush1.msra.mxu0 0.0
        %3300 = vmatprep.subr.mxu0 0.0
        %3301 = vmatpush1.msra.mxu0 0.0
        %3302 = vmatprep.subr.mxu0 0.0
        %3303 = vmatpush1.msra.mxu0 0.0
        %3304 = vmatprep.subr.mxu0 0.0
        %3305 = vmatpush1.msra.mxu0 0.0
        %3306 = vmatprep.subr.mxu0 0.0
        %3307 = vmatpush1.msra.mxu0 0.0
        %3308 = vmatprep.subr.mxu0 0.0
        %3309 = vmatpush1.msra.mxu0 0.0
        %3310 = vmatprep.subr.mxu0 0.0
        %3311 = vmatpush1.msra.mxu0 0.0
        %3312 = vmatprep.subr.mxu0 0.0
        %3313 = vmatpush1.msra.mxu0 0.0
        %3314 = vmatprep.subr.mxu0 0.0
        %3315 = vmatpush1.msra.mxu0 0.0
        %3316 = vmatprep.subr.mxu0 0.0
        %3317 = vmatpush1.msra.mxu0 0.0
        %3318 = vmatprep.subr.mxu0 0.0
        %3319 = vmatpush1.msra.mxu0 0.0
        %3320 = vmatprep.mubr.f32.mxu0 0.0
        %3321 = vmatmul.mubr.f32.gmra.mrb[0].mxu0 %v2788
        %v3322 = vpop.f32.mrb[0].mxu0
        %v3323 = vadd.f32 %v3107, %v3322
        %v3324 = vpop.f32.mrb[0].mxu0
        %3325 = vdwg.mxu0
        %3326 = vmatprep.subr.mxu0 0.0
        %3327 = vmatpush1.msra.mxu0 %v3083
        %3328 = vmatprep.subr.mxu0 0.0
        %3329 = vmatpush1.msra.mxu0 %v3084
        %3330 = vmatprep.subr.mxu0 0.0
        %3331 = vmatpush1.msra.mxu0 %v3085
        %3332 = vmatprep.subr.mxu0 0.0
        %3333 = vmatpush1.msra.mxu0 %v3086
        %3334 = vmatprep.subr.mxu0 0.0
        %3335 = vmatpush1.msra.mxu0 0.0
        %3336 = vmatprep.subr.mxu0 0.0
        %3337 = vmatpush1.msra.mxu0 0.0
        %3338 = vmatprep.subr.mxu0 0.0
        %3339 = vmatpush1.msra.mxu0 0.0
        %3340 = vmatprep.subr.mxu0 0.0
        %3341 = vmatpush1.msra.mxu0 0.0
        %3342 = vmatprep.subr.mxu0 0.0
        %3343 = vmatpush1.msra.mxu0 0.0
        %3344 = vmatprep.subr.mxu0 0.0
        %3345 = vmatpush1.msra.mxu0 0.0
        %3346 = vmatprep.subr.mxu0 0.0
        %3347 = vmatpush1.msra.mxu0 0.0
        %3348 = vmatprep.subr.mxu0 0.0
        %3349 = vmatpush1.msra.mxu0 0.0
        %3350 = vmatprep.subr.mxu0 0.0
        %3351 = vmatpush1.msra.mxu0 0.0
        %3352 = vmatprep.subr.mxu0 0.0
        %3353 = vmatpush1.msra.mxu0 0.0
        %3354 = vmatprep.subr.mxu0 0.0
        %3355 = vmatpush1.msra.mxu0 0.0
        %3356 = vmatprep.subr.mxu0 0.0
        %3357 = vmatpush1.msra.mxu0 0.0
        %3358 = vmatprep.subr.mxu0 0.0
        %3359 = vmatpush1.msra.mxu0 0.0
        %3360 = vmatprep.subr.mxu0 0.0
        %3361 = vmatpush1.msra.mxu0 0.0
        %3362 = vmatprep.subr.mxu0 0.0
        %3363 = vmatpush1.msra.mxu0 0.0
        %3364 = vmatprep.subr.mxu0 0.0
        %3365 = vmatpush1.msra.mxu0 0.0
        %3366 = vmatprep.subr.mxu0 0.0
        %3367 = vmatpush1.msra.mxu0 0.0
        %3368 = vmatprep.subr.mxu0 0.0
        %3369 = vmatpush1.msra.mxu0 0.0
        %3370 = vmatprep.subr.mxu0 0.0
        %3371 = vmatpush1.msra.mxu0 0.0
        %3372 = vmatprep.subr.mxu0 0.0
        %3373 = vmatpush1.msra.mxu0 0.0
        %3374 = vmatprep.subr.mxu0 0.0
        %3375 = vmatpush1.msra.mxu0 0.0
        %3376 = vmatprep.subr.mxu0 0.0
        %3377 = vmatpush1.msra.mxu0 0.0
        %3378 = vmatprep.subr.mxu0 0.0
        %3379 = vmatpush1.msra.mxu0 0.0
        %3380 = vmatprep.subr.mxu0 0.0
        %3381 = vmatpush1.msra.mxu0 0.0
        %3382 = vmatprep.subr.mxu0 0.0
        %3383 = vmatpush1.msra.mxu0 0.0
        %3384 = vmatprep.subr.mxu0 0.0
        %3385 = vmatpush1.msra.mxu0 0.0
        %3386 = vmatprep.subr.mxu0 0.0
        %3387 = vmatpush1.msra.mxu0 0.0
        %3388 = vmatprep.subr.mxu0 0.0
        %3389 = vmatpush1.msra.mxu0 0.0
        %3390 = vmatprep.mubr.f32.mxu0 0.0
        %3391 = vmatmul.mubr.f32.gmra.mrb[0].mxu0 %v2788
        %v3392 = vpop.f32.mrb[0].mxu0
        %v3393 = vadd.f32 %v3111, %v3392
        %v3394 = vpop.f32.mrb[0].mxu0
        %3395 = vdwg.mxu0
        %s3396 = scalar_lea.vmem %s6, 128
        %v3397 = vld [vmem:[%s3396] sm:$0xff]
        %v3398 = vld [vmem:[%s3396 + $0x8] sm:$0xff]
        %v3399 = vld [vmem:[%s3396 + $0x10] sm:$0xff]
        %v3400 = vld [vmem:[%s3396 + $0x18] sm:$0xff]
        %v3401 = vld [vmem:[%s3396 + $0x20] sm:$0xff]
        %v3402 = vld [vmem:[%s3396 + $0x28] sm:$0xff]
        %v3403 = vld [vmem:[%s3396 + $0x30] sm:$0xff]
        %v3404 = vld [vmem:[%s3396 + $0x38] sm:$0xff]
        %v3405 = vld [vmem:[%s3396 + $0x40] sm:$0xff]
        %v3406 = vld [vmem:[%s3396 + $0x48] sm:$0xff]
        %v3407 = vld [vmem:[%s3396 + $0x50] sm:$0xff]
        %v3408 = vld [vmem:[%s3396 + $0x58] sm:$0xff]
        %v3409 = vld [vmem:[%s3396 + $0x60] sm:$0xff]
        %v3410 = vld [vmem:[%s3396 + $0x68] sm:$0xff]
        %v3411 = vld [vmem:[%s3396 + $0x70] sm:$0xff]
        %v3412 = vld [vmem:[%s3396 + $0x78] sm:$0xff]
        %s3413 = scalar_lea.vmem %s7, 4
        %v3414 = vld [vmem:[%s3413] sm:$0x1]
        %v3415 = vld [vmem:[%s3413 + $0x1] sm:$0x1]
        %v3416 = vld [vmem:[%s3413 + $0x2] sm:$0x1]
        %v3417 = vld [vmem:[%s3413 + $0x3] sm:$0x1]
        %v3422 = vlaneseq
        %v3423 = vshrl.u32 %v3422, 7
        %v3424 = vsub.s32 0, %v3423
        %v3425 = vrot.slane %v3414, %v3424
        %v3426 = vlaneseq
        %v3427 = vshrl.u32 %v3426, 7
        %v3428 = vsub.s32 0, %v3427
        %v3429 = vrot.slane %v3415, %v3428
        %v3430 = vlaneseq
        %v3431 = vshrl.u32 %v3430, 7
        %v3432 = vsub.s32 0, %v3431
        %v3433 = vrot.slane %v3416, %v3432
        %v3434 = vlaneseq
        %v3435 = vshrl.u32 %v3434, 7
        %v3436 = vsub.s32 0, %v3435
        %v3437 = vrot.slane %v3417, %v3436
        %3442 = vmatprep.subr.mxu0 0.0
        %3443 = vmatpush1.msra.mxu0 %v3397
        %3444 = vmatprep.subr.mxu0 0.0
        %3445 = vmatpush1.msra.mxu0 %v3398
        %3446 = vmatprep.subr.mxu0 0.0
        %3447 = vmatpush1.msra.mxu0 %v3399
        %3448 = vmatprep.subr.mxu0 0.0
        %3449 = vmatpush1.msra.mxu0 %v3400
        %3450 = vmatprep.subr.mxu0 0.0
        %3451 = vmatpush1.msra.mxu0 0.0
        %3452 = vmatprep.subr.mxu0 0.0
        %3453 = vmatpush1.msra.mxu0 0.0
        %3454 = vmatprep.subr.mxu0 0.0
        %3455 = vmatpush1.msra.mxu0 0.0
        %3456 = vmatprep.subr.mxu0 0.0
        %3457 = vmatpush1.msra.mxu0 0.0
        %3458 = vmatprep.subr.mxu0 0.0
        %3459 = vmatpush1.msra.mxu0 0.0
        %3460 = vmatprep.subr.mxu0 0.0
        %3461 = vmatpush1.msra.mxu0 0.0
        %3462 = vmatprep.subr.mxu0 0.0
        %3463 = vmatpush1.msra.mxu0 0.0
        %3464 = vmatprep.subr.mxu0 0.0
        %3465 = vmatpush1.msra.mxu0 0.0
        %3466 = vmatprep.subr.mxu0 0.0
        %3467 = vmatpush1.msra.mxu0 0.0
        %3468 = vmatprep.subr.mxu0 0.0
        %3469 = vmatpush1.msra.mxu0 0.0
        %3470 = vmatprep.subr.mxu0 0.0
        %3471 = vmatpush1.msra.mxu0 0.0
        %3472 = vmatprep.subr.mxu0 0.0
        %3473 = vmatpush1.msra.mxu0 0.0
        %3474 = vmatprep.subr.mxu0 0.0
        %3475 = vmatpush1.msra.mxu0 0.0
        %3476 = vmatprep.subr.mxu0 0.0
        %3477 = vmatpush1.msra.mxu0 0.0
        %3478 = vmatprep.subr.mxu0 0.0
        %3479 = vmatpush1.msra.mxu0 0.0
        %3480 = vmatprep.subr.mxu0 0.0
        %3481 = vmatpush1.msra.mxu0 0.0
        %3482 = vmatprep.subr.mxu0 0.0
        %3483 = vmatpush1.msra.mxu0 0.0
        %3484 = vmatprep.subr.mxu0 0.0
        %3485 = vmatpush1.msra.mxu0 0.0
        %3486 = vmatprep.subr.mxu0 0.0
        %3487 = vmatpush1.msra.mxu0 0.0
        %3488 = vmatprep.subr.mxu0 0.0
        %3489 = vmatpush1.msra.mxu0 0.0
        %3490 = vmatprep.subr.mxu0 0.0
        %3491 = vmatpush1.msra.mxu0 0.0
        %3492 = vmatprep.subr.mxu0 0.0
        %3493 = vmatpush1.msra.mxu0 0.0
        %3494 = vmatprep.subr.mxu0 0.0
        %3495 = vmatpush1.msra.mxu0 0.0
        %3496 = vmatprep.subr.mxu0 0.0
        %3497 = vmatpush1.msra.mxu0 0.0
        %3498 = vmatprep.subr.mxu0 0.0
        %3499 = vmatpush1.msra.mxu0 0.0
        %3500 = vmatprep.subr.mxu0 0.0
        %3501 = vmatpush1.msra.mxu0 0.0
        %3502 = vmatprep.subr.mxu0 0.0
        %3503 = vmatpush1.msra.mxu0 0.0
        %3504 = vmatprep.subr.mxu0 0.0
        %3505 = vmatpush1.msra.mxu0 0.0
        %3506 = vmatprep.mubr.f32.mxu0 0.0
        %3507 = vmatmul.mubr.f32.gmra.mrb[0].mxu0 %v2788
        %v3508 = vpop.f32.mrb[0].mxu0
        %v3509 = vadd.f32 %v3425, %v3508
        %v3510 = vpop.f32.mrb[0].mxu0
        %3511 = vdwg.mxu0
        %3512 = vmatprep.subr.mxu0 0.0
        %3513 = vmatpush1.msra.mxu0 %v3401
        %3514 = vmatprep.subr.mxu0 0.0
        %3515 = vmatpush1.msra.mxu0 %v3402
        %3516 = vmatprep.subr.mxu0 0.0
        %3517 = vmatpush1.msra.mxu0 %v3403
        %3518 = vmatprep.subr.mxu0 0.0
        %3519 = vmatpush1.msra.mxu0 %v3404
        %3520 = vmatprep.subr.mxu0 0.0
        %3521 = vmatpush1.msra.mxu0 0.0
        %3522 = vmatprep.subr.mxu0 0.0
        %3523 = vmatpush1.msra.mxu0 0.0
        %3524 = vmatprep.subr.mxu0 0.0
        %3525 = vmatpush1.msra.mxu0 0.0
        %3526 = vmatprep.subr.mxu0 0.0
        %3527 = vmatpush1.msra.mxu0 0.0
        %3528 = vmatprep.subr.mxu0 0.0
        %3529 = vmatpush1.msra.mxu0 0.0
        %3530 = vmatprep.subr.mxu0 0.0
        %3531 = vmatpush1.msra.mxu0 0.0
        %3532 = vmatprep.subr.mxu0 0.0
        %3533 = vmatpush1.msra.mxu0 0.0
        %3534 = vmatprep.subr.mxu0 0.0
        %3535 = vmatpush1.msra.mxu0 0.0
        %3536 = vmatprep.subr.mxu0 0.0
        %3537 = vmatpush1.msra.mxu0 0.0
        %3538 = vmatprep.subr.mxu0 0.0
        %3539 = vmatpush1.msra.mxu0 0.0
        %3540 = vmatprep.subr.mxu0 0.0
        %3541 = vmatpush1.msra.mxu0 0.0
        %3542 = vmatprep.subr.mxu0 0.0
        %3543 = vmatpush1.msra.mxu0 0.0
        %3544 = vmatprep.subr.mxu0 0.0
        %3545 = vmatpush1.msra.mxu0 0.0
        %3546 = vmatprep.subr.mxu0 0.0
        %3547 = vmatpush1.msra.mxu0 0.0
        %3548 = vmatprep.subr.mxu0 0.0
        %3549 = vmatpush1.msra.mxu0 0.0
        %3550 = vmatprep.subr.mxu0 0.0
        %3551 = vmatpush1.msra.mxu0 0.0
        %3552 = vmatprep.subr.mxu0 0.0
        %3553 = vmatpush1.msra.mxu0 0.0
        %3554 = vmatprep.subr.mxu0 0.0
        %3555 = vmatpush1.msra.mxu0 0.0
        %3556 = vmatprep.subr.mxu0 0.0
        %3557 = vmatpush1.msra.mxu0 0.0
        %3558 = vmatprep.subr.mxu0 0.0
        %3559 = vmatpush1.msra.mxu0 0.0
        %3560 = vmatprep.subr.mxu0 0.0
        %3561 = vmatpush1.msra.mxu0 0.0
        %3562 = vmatprep.subr.mxu0 0.0
        %3563 = vmatpush1.msra.mxu0 0.0
        %3564 = vmatprep.subr.mxu0 0.0
        %3565 = vmatpush1.msra.mxu0 0.0
        %3566 = vmatprep.subr.mxu0 0.0
        %3567 = vmatpush1.msra.mxu0 0.0
        %3568 = vmatprep.subr.mxu0 0.0
        %3569 = vmatpush1.msra.mxu0 0.0
        %3570 = vmatprep.subr.mxu0 0.0
        %3571 = vmatpush1.msra.mxu0 0.0
        %3572 = vmatprep.subr.mxu0 0.0
        %3573 = vmatpush1.msra.mxu0 0.0
        %3574 = vmatprep.subr.mxu0 0.0
        %3575 = vmatpush1.msra.mxu0 0.0
        %3576 = vmatprep.mubr.f32.mxu0 0.0
        %3577 = vmatmul.mubr.f32.gmra.mrb[0].mxu0 %v2788
        %v3578 = vpop.f32.mrb[0].mxu0
        %v3579 = vadd.f32 %v3429, %v3578
        %v3580 = vpop.f32.mrb[0].mxu0
        %3581 = vdwg.mxu0
        %3582 = vmatprep.subr.mxu0 0.0
        %3583 = vmatpush1.msra.mxu0 %v3405
        %3584 = vmatprep.subr.mxu0 0.0
        %3585 = vmatpush1.msra.mxu0 %v3406
        %3586 = vmatprep.subr.mxu0 0.0
        %3587 = vmatpush1.msra.mxu0 %v3407
        %3588 = vmatprep.subr.mxu0 0.0
        %3589 = vmatpush1.msra.mxu0 %v3408
        %3590 = vmatprep.subr.mxu0 0.0
        %3591 = vmatpush1.msra.mxu0 0.0
        %3592 = vmatprep.subr.mxu0 0.0
        %3593 = vmatpush1.msra.mxu0 0.0
        %3594 = vmatprep.subr.mxu0 0.0
        %3595 = vmatpush1.msra.mxu0 0.0
        %3596 = vmatprep.subr.mxu0 0.0
        %3597 = vmatpush1.msra.mxu0 0.0
        %3598 = vmatprep.subr.mxu0 0.0
        %3599 = vmatpush1.msra.mxu0 0.0
        %3600 = vmatprep.subr.mxu0 0.0
        %3601 = vmatpush1.msra.mxu0 0.0
        %3602 = vmatprep.subr.mxu0 0.0
        %3603 = vmatpush1.msra.mxu0 0.0
        %3604 = vmatprep.subr.mxu0 0.0
        %3605 = vmatpush1.msra.mxu0 0.0
        %3606 = vmatprep.subr.mxu0 0.0
        %3607 = vmatpush1.msra.mxu0 0.0
        %3608 = vmatprep.subr.mxu0 0.0
        %3609 = vmatpush1.msra.mxu0 0.0
        %3610 = vmatprep.subr.mxu0 0.0
        %3611 = vmatpush1.msra.mxu0 0.0
        %3612 = vmatprep.subr.mxu0 0.0
        %3613 = vmatpush1.msra.mxu0 0.0
        %3614 = vmatprep.subr.mxu0 0.0
        %3615 = vmatpush1.msra.mxu0 0.0
        %3616 = vmatprep.subr.mxu0 0.0
        %3617 = vmatpush1.msra.mxu0 0.0
        %3618 = vmatprep.subr.mxu0 0.0
        %3619 = vmatpush1.msra.mxu0 0.0
        %3620 = vmatprep.subr.mxu0 0.0
        %3621 = vmatpush1.msra.mxu0 0.0
        %3622 = vmatprep.subr.mxu0 0.0
        %3623 = vmatpush1.msra.mxu0 0.0
        %3624 = vmatprep.subr.mxu0 0.0
        %3625 = vmatpush1.msra.mxu0 0.0
        %3626 = vmatprep.subr.mxu0 0.0
        %3627 = vmatpush1.msra.mxu0 0.0
        %3628 = vmatprep.subr.mxu0 0.0
        %3629 = vmatpush1.msra.mxu0 0.0
        %3630 = vmatprep.subr.mxu0 0.0
        %3631 = vmatpush1.msra.mxu0 0.0
        %3632 = vmatprep.subr.mxu0 0.0
        %3633 = vmatpush1.msra.mxu0 0.0
        %3634 = vmatprep.subr.mxu0 0.0
        %3635 = vmatpush1.msra.mxu0 0.0
        %3636 = vmatprep.subr.mxu0 0.0
        %3637 = vmatpush1.msra.mxu0 0.0
        %3638 = vmatprep.subr.mxu0 0.0
        %3639 = vmatpush1.msra.mxu0 0.0
        %3640 = vmatprep.subr.mxu0 0.0
        %3641 = vmatpush1.msra.mxu0 0.0
        %3642 = vmatprep.subr.mxu0 0.0
        %3643 = vmatpush1.msra.mxu0 0.0
        %3644 = vmatprep.subr.mxu0 0.0
        %3645 = vmatpush1.msra.mxu0 0.0
        %3646 = vmatprep.mubr.f32.mxu0 0.0
        %3647 = vmatmul.mubr.f32.gmra.mrb[0].mxu0 %v2788
        %v3648 = vpop.f32.mrb[0].mxu0
        %v3649 = vadd.f32 %v3433, %v3648
        %v3650 = vpop.f32.mrb[0].mxu0
        %3651 = vdwg.mxu0
        %3652 = vmatprep.subr.mxu0 0.0
        %3653 = vmatpush1.msra.mxu0 %v3409
        %3654 = vmatprep.subr.mxu0 0.0
        %3655 = vmatpush1.msra.mxu0 %v3410
        %3656 = vmatprep.subr.mxu0 0.0
        %3657 = vmatpush1.msra.mxu0 %v3411
        %3658 = vmatprep.subr.mxu0 0.0
        %3659 = vmatpush1.msra.mxu0 %v3412
        %3660 = vmatprep.subr.mxu0 0.0
        %3661 = vmatpush1.msra.mxu0 0.0
        %3662 = vmatprep.subr.mxu0 0.0
        %3663 = vmatpush1.msra.mxu0 0.0
        %3664 = vmatprep.subr.mxu0 0.0
        %3665 = vmatpush1.msra.mxu0 0.0
        %3666 = vmatprep.subr.mxu0 0.0
        %3667 = vmatpush1.msra.mxu0 0.0
        %3668 = vmatprep.subr.mxu0 0.0
        %3669 = vmatpush1.msra.mxu0 0.0
        %3670 = vmatprep.subr.mxu0 0.0
        %3671 = vmatpush1.msra.mxu0 0.0
        %3672 = vmatprep.subr.mxu0 0.0
        %3673 = vmatpush1.msra.mxu0 0.0
        %3674 = vmatprep.subr.mxu0 0.0
        %3675 = vmatpush1.msra.mxu0 0.0
        %3676 = vmatprep.subr.mxu0 0.0
        %3677 = vmatpush1.msra.mxu0 0.0
        %3678 = vmatprep.subr.mxu0 0.0
        %3679 = vmatpush1.msra.mxu0 0.0
        %3680 = vmatprep.subr.mxu0 0.0
        %3681 = vmatpush1.msra.mxu0 0.0
        %3682 = vmatprep.subr.mxu0 0.0
        %3683 = vmatpush1.msra.mxu0 0.0
        %3684 = vmatprep.subr.mxu0 0.0
        %3685 = vmatpush1.msra.mxu0 0.0
        %3686 = vmatprep.subr.mxu0 0.0
        %3687 = vmatpush1.msra.mxu0 0.0
        %3688 = vmatprep.subr.mxu0 0.0
        %3689 = vmatpush1.msra.mxu0 0.0
        %3690 = vmatprep.subr.mxu0 0.0
        %3691 = vmatpush1.msra.mxu0 0.0
        %3692 = vmatprep.subr.mxu0 0.0
        %3693 = vmatpush1.msra.mxu0 0.0
        %3694 = vmatprep.subr.mxu0 0.0
        %3695 = vmatpush1.msra.mxu0 0.0
        %3696 = vmatprep.subr.mxu0 0.0
        %3697 = vmatpush1.msra.mxu0 0.0
        %3698 = vmatprep.subr.mxu0 0.0
        %3699 = vmatpush1.msra.mxu0 0.0
        %3700 = vmatprep.subr.mxu0 0.0
        %3701 = vmatpush1.msra.mxu0 0.0
        %3702 = vmatprep.subr.mxu0 0.0
        %3703 = vmatpush1.msra.mxu0 0.0
        %3704 = vmatprep.subr.mxu0 0.0
        %3705 = vmatpush1.msra.mxu0 0.0
        %3706 = vmatprep.subr.mxu0 0.0
        %3707 = vmatpush1.msra.mxu0 0.0
        %3708 = vmatprep.subr.mxu0 0.0
        %3709 = vmatpush1.msra.mxu0 0.0
        %3710 = vmatprep.subr.mxu0 0.0
        %3711 = vmatpush1.msra.mxu0 0.0
        %3712 = vmatprep.subr.mxu0 0.0
        %3713 = vmatpush1.msra.mxu0 0.0
        %3714 = vmatprep.subr.mxu0 0.0
        %3715 = vmatpush1.msra.mxu0 0.0
        %3716 = vmatprep.mubr.f32.mxu0 0.0
        %3717 = vmatmul.mubr.f32.gmra.mrb[0].mxu0 %v2788
        %v3718 = vpop.f32.mrb[0].mxu0
        %v3719 = vadd.f32 %v3437, %v3718
        %v3720 = vpop.f32.mrb[0].mxu0
        %3721 = vdwg.mxu0
        %v3723 = vsel %vm1550, %v2857, 0
        %v3726 = vsel %vm1550, %v3183, 0
        %3728 = vmatprep.subr.mxu0 0.0
        %3729 = vmatpush1.xpose.msra.mxu0 %v3726
        %3730 = vmatprep.subr.mxu0 0.0
        %3731 = vmatpush1.xpose.msra.mxu0 0.0
        %3732 = vmatprep.subr.mxu0 0.0
        %3733 = vmatpush1.xpose.msra.mxu0 0.0
        %3734 = vmatprep.subr.mxu0 0.0
        %3735 = vmatpush1.xpose.msra.mxu0 0.0
        %3736 = vmatprep.subr.mxu0 0.0
        %3737 = vmatpush1.xpose.msra.mxu0 0.0
        %3738 = vmatprep.subr.mxu0 0.0
        %3739 = vmatpush1.xpose.msra.mxu0 0.0
        %3740 = vmatprep.subr.mxu0 0.0
        %3741 = vmatpush1.xpose.msra.mxu0 0.0
        %3742 = vmatprep.subr.mxu0 0.0
        %3743 = vmatpush1.xpose.msra.mxu0 0.0
        %3744 = vmatprep.subr.mxu0 0.0
        %3745 = vmatpush1.xpose.msra.mxu0 0.0
        %3746 = vmatprep.subr.mxu0 0.0
        %3747 = vmatpush1.xpose.msra.mxu0 0.0
        %3748 = vmatprep.subr.mxu0 0.0
        %3749 = vmatpush1.xpose.msra.mxu0 0.0
        %3750 = vmatprep.subr.mxu0 0.0
        %3751 = vmatpush1.xpose.msra.mxu0 0.0
        %3752 = vmatprep.subr.mxu0 0.0
        %3753 = vmatpush1.xpose.msra.mxu0 0.0
        %3754 = vmatprep.subr.mxu0 0.0
        %3755 = vmatpush1.xpose.msra.mxu0 0.0
        %3756 = vmatprep.subr.mxu0 0.0
        %3757 = vmatpush1.xpose.msra.mxu0 0.0
        %3758 = vmatprep.subr.mxu0 0.0
        %3759 = vmatpush1.xpose.msra.mxu0 0.0
        %3760 = vmatprep.subr.mxu0 0.0
        %3761 = vmatpush1.xpose.msra.mxu0 0.0
        %3762 = vmatprep.subr.mxu0 0.0
        %3763 = vmatpush1.xpose.msra.mxu0 0.0
        %3764 = vmatprep.subr.mxu0 0.0
        %3765 = vmatpush1.xpose.msra.mxu0 0.0
        %3766 = vmatprep.subr.mxu0 0.0
        %3767 = vmatpush1.xpose.msra.mxu0 0.0
        %3768 = vmatprep.subr.mxu0 0.0
        %3769 = vmatpush1.xpose.msra.mxu0 0.0
        %3770 = vmatprep.subr.mxu0 0.0
        %3771 = vmatpush1.xpose.msra.mxu0 0.0
        %3772 = vmatprep.subr.mxu0 0.0
        %3773 = vmatpush1.xpose.msra.mxu0 0.0
        %3774 = vmatprep.subr.mxu0 0.0
        %3775 = vmatpush1.xpose.msra.mxu0 0.0
        %3776 = vmatprep.subr.mxu0 0.0
        %3777 = vmatpush1.xpose.msra.mxu0 0.0
        %3778 = vmatprep.subr.mxu0 0.0
        %3779 = vmatpush1.xpose.msra.mxu0 0.0
        %3780 = vmatprep.subr.mxu0 0.0
        %3781 = vmatpush1.xpose.msra.mxu0 0.0
        %3782 = vmatprep.subr.mxu0 0.0
        %3783 = vmatpush1.xpose.msra.mxu0 0.0
        %3784 = vmatprep.subr.mxu0 0.0
        %3785 = vmatpush1.xpose.msra.mxu0 0.0
        %3786 = vmatprep.subr.mxu0 0.0
        %3787 = vmatpush1.xpose.msra.mxu0 0.0
        %3788 = vmatprep.subr.mxu0 0.0
        %3789 = vmatpush1.xpose.msra.mxu0 0.0
        %3790 = vmatprep.subr.mxu0 0.0
        %3791 = vmatpush1.xpose.msra.mxu0 0.0
        %3792 = vmatprep.mubr.f32.mxu0 0.0
        %3793 = vmatmul.mubr.f32.gmra.mrb[0].mxu0 %v3723
        %v3794 = vpop.f32.mrb[0].mxu0
        %v3795 = vadd.f32 0.0, %v3794
        %v3796 = vpop.f32.mrb[0].mxu0
        %3797 = vdwg.mxu0
        %v3799 = vsel %vm1550, %v2927, 0
        %v3802 = vsel %vm1550, %v3253, 0
        %3804 = vmatprep.subr.mxu0 0.0
        %3805 = vmatpush1.xpose.msra.mxu0 %v3802
        %3806 = vmatprep.subr.mxu0 0.0
        %3807 = vmatpush1.xpose.msra.mxu0 0.0
        %3808 = vmatprep.subr.mxu0 0.0
        %3809 = vmatpush1.xpose.msra.mxu0 0.0
        %3810 = vmatprep.subr.mxu0 0.0
        %3811 = vmatpush1.xpose.msra.mxu0 0.0
        %3812 = vmatprep.subr.mxu0 0.0
        %3813 = vmatpush1.xpose.msra.mxu0 0.0
        %3814 = vmatprep.subr.mxu0 0.0
        %3815 = vmatpush1.xpose.msra.mxu0 0.0
        %3816 = vmatprep.subr.mxu0 0.0
        %3817 = vmatpush1.xpose.msra.mxu0 0.0
        %3818 = vmatprep.subr.mxu0 0.0
        %3819 = vmatpush1.xpose.msra.mxu0 0.0
        %3820 = vmatprep.subr.mxu0 0.0
        %3821 = vmatpush1.xpose.msra.mxu0 0.0
        %3822 = vmatprep.subr.mxu0 0.0
        %3823 = vmatpush1.xpose.msra.mxu0 0.0
        %3824 = vmatprep.subr.mxu0 0.0
        %3825 = vmatpush1.xpose.msra.mxu0 0.0
        %3826 = vmatprep.subr.mxu0 0.0
        %3827 = vmatpush1.xpose.msra.mxu0 0.0
        %3828 = vmatprep.subr.mxu0 0.0
        %3829 = vmatpush1.xpose.msra.mxu0 0.0
        %3830 = vmatprep.subr.mxu0 0.0
        %3831 = vmatpush1.xpose.msra.mxu0 0.0
        %3832 = vmatprep.subr.mxu0 0.0
        %3833 = vmatpush1.xpose.msra.mxu0 0.0
        %3834 = vmatprep.subr.mxu0 0.0
        %3835 = vmatpush1.xpose.msra.mxu0 0.0
        %3836 = vmatprep.subr.mxu0 0.0
        %3837 = vmatpush1.xpose.msra.mxu0 0.0
        %3838 = vmatprep.subr.mxu0 0.0
        %3839 = vmatpush1.xpose.msra.mxu0 0.0
        %3840 = vmatprep.subr.mxu0 0.0
        %3841 = vmatpush1.xpose.msra.mxu0 0.0
        %3842 = vmatprep.subr.mxu0 0.0
        %3843 = vmatpush1.xpose.msra.mxu0 0.0
        %3844 = vmatprep.subr.mxu0 0.0
        %3845 = vmatpush1.xpose.msra.mxu0 0.0
        %3846 = vmatprep.subr.mxu0 0.0
        %3847 = vmatpush1.xpose.msra.mxu0 0.0
        %3848 = vmatprep.subr.mxu0 0.0
        %3849 = vmatpush1.xpose.msra.mxu0 0.0
        %3850 = vmatprep.subr.mxu0 0.0
        %3851 = vmatpush1.xpose.msra.mxu0 0.0
        %3852 = vmatprep.subr.mxu0 0.0
        %3853 = vmatpush1.xpose.msra.mxu0 0.0
        %3854 = vmatprep.subr.mxu0 0.0
        %3855 = vmatpush1.xpose.msra.mxu0 0.0
        %3856 = vmatprep.subr.mxu0 0.0
        %3857 = vmatpush1.xpose.msra.mxu0 0.0
        %3858 = vmatprep.subr.mxu0 0.0
        %3859 = vmatpush1.xpose.msra.mxu0 0.0
        %3860 = vmatprep.subr.mxu0 0.0
        %3861 = vmatpush1.xpose.msra.mxu0 0.0
        %3862 = vmatprep.subr.mxu0 0.0
        %3863 = vmatpush1.xpose.msra.mxu0 0.0
        %3864 = vmatprep.subr.mxu0 0.0
        %3865 = vmatpush1.xpose.msra.mxu0 0.0
        %3866 = vmatprep.subr.mxu0 0.0
        %3867 = vmatpush1.xpose.msra.mxu0 0.0
        %3868 = vmatprep.mubr.f32.mxu0 0.0
        %3869 = vmatmul.mubr.f32.gmra.mrb[0].mxu0 %v3799
        %v3870 = vpop.f32.mrb[0].mxu0
        %v3871 = vadd.f32 0.0, %v3870
        %v3872 = vpop.f32.mrb[0].mxu0
        %3873 = vdwg.mxu0
        %v3875 = vsel %vm1550, %v2997, 0
        %v3878 = vsel %vm1550, %v3323, 0
        %3880 = vmatprep.subr.mxu0 0.0
        %3881 = vmatpush1.xpose.msra.mxu0 %v3878
        %3882 = vmatprep.subr.mxu0 0.0
        %3883 = vmatpush1.xpose.msra.mxu0 0.0
        %3884 = vmatprep.subr.mxu0 0.0
        %3885 = vmatpush1.xpose.msra.mxu0 0.0
        %3886 = vmatprep.subr.mxu0 0.0
        %3887 = vmatpush1.xpose.msra.mxu0 0.0
        %3888 = vmatprep.subr.mxu0 0.0
        %3889 = vmatpush1.xpose.msra.mxu0 0.0
        %3890 = vmatprep.subr.mxu0 0.0
        %3891 = vmatpush1.xpose.msra.mxu0 0.0
        %3892 = vmatprep.subr.mxu0 0.0
        %3893 = vmatpush1.xpose.msra.mxu0 0.0
        %3894 = vmatprep.subr.mxu0 0.0
        %3895 = vmatpush1.xpose.msra.mxu0 0.0
        %3896 = vmatprep.subr.mxu0 0.0
        %3897 = vmatpush1.xpose.msra.mxu0 0.0
        %3898 = vmatprep.subr.mxu0 0.0
        %3899 = vmatpush1.xpose.msra.mxu0 0.0
        %3900 = vmatprep.subr.mxu0 0.0
        %3901 = vmatpush1.xpose.msra.mxu0 0.0
        %3902 = vmatprep.subr.mxu0 0.0
        %3903 = vmatpush1.xpose.msra.mxu0 0.0
        %3904 = vmatprep.subr.mxu0 0.0
        %3905 = vmatpush1.xpose.msra.mxu0 0.0
        %3906 = vmatprep.subr.mxu0 0.0
        %3907 = vmatpush1.xpose.msra.mxu0 0.0
        %3908 = vmatprep.subr.mxu0 0.0
        %3909 = vmatpush1.xpose.msra.mxu0 0.0
        %3910 = vmatprep.subr.mxu0 0.0
        %3911 = vmatpush1.xpose.msra.mxu0 0.0
        %3912 = vmatprep.subr.mxu0 0.0
        %3913 = vmatpush1.xpose.msra.mxu0 0.0
        %3914 = vmatprep.subr.mxu0 0.0
        %3915 = vmatpush1.xpose.msra.mxu0 0.0
        %3916 = vmatprep.subr.mxu0 0.0
        %3917 = vmatpush1.xpose.msra.mxu0 0.0
        %3918 = vmatprep.subr.mxu0 0.0
        %3919 = vmatpush1.xpose.msra.mxu0 0.0
        %3920 = vmatprep.subr.mxu0 0.0
        %3921 = vmatpush1.xpose.msra.mxu0 0.0
        %3922 = vmatprep.subr.mxu0 0.0
        %3923 = vmatpush1.xpose.msra.mxu0 0.0
        %3924 = vmatprep.subr.mxu0 0.0
        %3925 = vmatpush1.xpose.msra.mxu0 0.0
        %3926 = vmatprep.subr.mxu0 0.0
        %3927 = vmatpush1.xpose.msra.mxu0 0.0
        %3928 = vmatprep.subr.mxu0 0.0
        %3929 = vmatpush1.xpose.msra.mxu0 0.0
        %3930 = vmatprep.subr.mxu0 0.0
        %3931 = vmatpush1.xpose.msra.mxu0 0.0
        %3932 = vmatprep.subr.mxu0 0.0
        %3933 = vmatpush1.xpose.msra.mxu0 0.0
        %3934 = vmatprep.subr.mxu0 0.0
        %3935 = vmatpush1.xpose.msra.mxu0 0.0
        %3936 = vmatprep.subr.mxu0 0.0
        %3937 = vmatpush1.xpose.msra.mxu0 0.0
        %3938 = vmatprep.subr.mxu0 0.0
        %3939 = vmatpush1.xpose.msra.mxu0 0.0
        %3940 = vmatprep.subr.mxu0 0.0
        %3941 = vmatpush1.xpose.msra.mxu0 0.0
        %3942 = vmatprep.subr.mxu0 0.0
        %3943 = vmatpush1.xpose.msra.mxu0 0.0
        %3944 = vmatprep.mubr.f32.mxu0 0.0
        %3945 = vmatmul.mubr.f32.gmra.mrb[0].mxu0 %v3875
        %v3946 = vpop.f32.mrb[0].mxu0
        %v3947 = vadd.f32 0.0, %v3946
        %v3948 = vpop.f32.mrb[0].mxu0
        %3949 = vdwg.mxu0
        %v3951 = vsel %vm1550, %v3067, 0
        %v3954 = vsel %vm1550, %v3393, 0
        %3956 = vmatprep.subr.mxu0 0.0
        %3957 = vmatpush1.xpose.msra.mxu0 %v3954
        %3958 = vmatprep.subr.mxu0 0.0
        %3959 = vmatpush1.xpose.msra.mxu0 0.0
        %3960 = vmatprep.subr.mxu0 0.0
        %3961 = vmatpush1.xpose.msra.mxu0 0.0
        %3962 = vmatprep.subr.mxu0 0.0
        %3963 = vmatpush1.xpose.msra.mxu0 0.0
        %3964 = vmatprep.subr.mxu0 0.0
        %3965 = vmatpush1.xpose.msra.mxu0 0.0
        %3966 = vmatprep.subr.mxu0 0.0
        %3967 = vmatpush1.xpose.msra.mxu0 0.0
        %3968 = vmatprep.subr.mxu0 0.0
        %3969 = vmatpush1.xpose.msra.mxu0 0.0
        %3970 = vmatprep.subr.mxu0 0.0
        %3971 = vmatpush1.xpose.msra.mxu0 0.0
        %3972 = vmatprep.subr.mxu0 0.0
        %3973 = vmatpush1.xpose.msra.mxu0 0.0
        %3974 = vmatprep.subr.mxu0 0.0
        %3975 = vmatpush1.xpose.msra.mxu0 0.0
        %3976 = vmatprep.subr.mxu0 0.0
        %3977 = vmatpush1.xpose.msra.mxu0 0.0
        %3978 = vmatprep.subr.mxu0 0.0
        %3979 = vmatpush1.xpose.msra.mxu0 0.0
        %3980 = vmatprep.subr.mxu0 0.0
        %3981 = vmatpush1.xpose.msra.mxu0 0.0
        %3982 = vmatprep.subr.mxu0 0.0
        %3983 = vmatpush1.xpose.msra.mxu0 0.0
        %3984 = vmatprep.subr.mxu0 0.0
        %3985 = vmatpush1.xpose.msra.mxu0 0.0
        %3986 = vmatprep.subr.mxu0 0.0
        %3987 = vmatpush1.xpose.msra.mxu0 0.0
        %3988 = vmatprep.subr.mxu0 0.0
        %3989 = vmatpush1.xpose.msra.mxu0 0.0
        %3990 = vmatprep.subr.mxu0 0.0
        %3991 = vmatpush1.xpose.msra.mxu0 0.0
        %3992 = vmatprep.subr.mxu0 0.0
        %3993 = vmatpush1.xpose.msra.mxu0 0.0
        %3994 = vmatprep.subr.mxu0 0.0
        %3995 = vmatpush1.xpose.msra.mxu0 0.0
        %3996 = vmatprep.subr.mxu0 0.0
        %3997 = vmatpush1.xpose.msra.mxu0 0.0
        %3998 = vmatprep.subr.mxu0 0.0
        %3999 = vmatpush1.xpose.msra.mxu0 0.0
        %4000 = vmatprep.subr.mxu0 0.0
        %4001 = vmatpush1.xpose.msra.mxu0 0.0
        %4002 = vmatprep.subr.mxu0 0.0
        %4003 = vmatpush1.xpose.msra.mxu0 0.0
        %4004 = vmatprep.subr.mxu0 0.0
        %4005 = vmatpush1.xpose.msra.mxu0 0.0
        %4006 = vmatprep.subr.mxu0 0.0
        %4007 = vmatpush1.xpose.msra.mxu0 0.0
        %4008 = vmatprep.subr.mxu0 0.0
        %4009 = vmatpush1.xpose.msra.mxu0 0.0
        %4010 = vmatprep.subr.mxu0 0.0
        %4011 = vmatpush1.xpose.msra.mxu0 0.0
        %4012 = vmatprep.subr.mxu0 0.0
        %4013 = vmatpush1.xpose.msra.mxu0 0.0
        %4014 = vmatprep.subr.mxu0 0.0
        %4015 = vmatpush1.xpose.msra.mxu0 0.0
        %4016 = vmatprep.subr.mxu0 0.0
        %4017 = vmatpush1.xpose.msra.mxu0 0.0
        %4018 = vmatprep.subr.mxu0 0.0
        %4019 = vmatpush1.xpose.msra.mxu0 0.0
        %4020 = vmatprep.mubr.f32.mxu0 0.0
        %4021 = vmatmul.mubr.f32.gmra.mrb[0].mxu0 %v3951
        %v4022 = vpop.f32.mrb[0].mxu0
        %v4023 = vadd.f32 0.0, %v4022
        %v4024 = vpop.f32.mrb[0].mxu0
        %4025 = vdwg.mxu0
        %v4026 = vmul.f32 %v3795, 0.35355338
        %v4027 = vmul.f32 %v3871, 0.35355338
        %v4028 = vmul.f32 %v3947, 0.35355338
        %v4029 = vmul.f32 %v4023, 0.35355338
        %v4030 = vsel %vm1550, %v4026, -inf
        %4031 = vmax.xlane.f32.xlu0 %v4030
        %v4032 = vpop.xlane.xlu0 %4031
        %v4033 = vsel %vm1550, %v4027, -inf
        %4034 = vmax.xlane.f32.xlu0 %v4033
        %v4035 = vpop.xlane.xlu0 %4034
        %v4036 = vsel %vm1550, %v4028, -inf
        %4037 = vmax.xlane.f32.xlu0 %v4036
        %v4038 = vpop.xlane.xlu0 %4037
        %v4039 = vsel %vm1550, %v4029, -inf
        %4040 = vmax.xlane.f32.xlu0 %v4039
        %v4041 = vpop.xlane.xlu0 %4040
        %v4042 = vsub.f32 %v4026, %v4032
        %v4043 = vsub.f32 %v4027, %v4035
        %v4044 = vsub.f32 %v4028, %v4038
        %v4045 = vsub.f32 %v4029, %v4041
        %v4046 = vmul.f32 %v4042, 1.442695
        %v4047 = vpow.pop %v4046
        %v4048 = vmul.f32 %v4043, 1.442695
        %v4049 = vpow.pop %v4048
        %v4050 = vmul.f32 %v4044, 1.442695
        %v4051 = vpow.pop %v4050
        %v4052 = vmul.f32 %v4045, 1.442695
        %v4053 = vpow.pop %v4052
        %v4054 = vsel %vm1550, %v4047, 0.0
        %4055 = vadd.xlane.f32.xlu0 %v4054
        %v4056 = vpop.xlane.xlu0 %4055
        %v4057 = vsel %vm1550, %v4049, 0.0
        %4058 = vadd.xlane.f32.xlu0 %v4057
        %v4059 = vpop.xlane.xlu0 %4058
        %v4060 = vsel %vm1550, %v4051, 0.0
        %4061 = vadd.xlane.f32.xlu0 %v4060
        %v4062 = vpop.xlane.xlu0 %4061
        %v4063 = vsel %vm1550, %v4053, 0.0
        %4064 = vadd.xlane.f32.xlu0 %v4063
        %v4065 = vpop.xlane.xlu0 %4064
        %v4066 = vrcp.pop %v4056
        %v4067 = vrcp.pop %v4059
        %v4068 = vrcp.pop %v4062
        %v4069 = vrcp.pop %v4065
        %v4070 = vmul.f32 %v4047, %v4066
        %v4071 = vmul.f32 %v4049, %v4067
        %v4072 = vmul.f32 %v4051, %v4068
        %v4073 = vmul.f32 %v4053, %v4069
        %v4075 = vsel %vm1550, %v4070, 0
        %4077 = vmatprep.subr.mxu0 0.0
        %4078 = vmatpush1.msra.mxu0 %v3509
        %4079 = vmatprep.subr.mxu0 0.0
        %4080 = vmatpush1.msra.mxu0 0.0
        %4081 = vmatprep.subr.mxu0 0.0
        %4082 = vmatpush1.msra.mxu0 0.0
        %4083 = vmatprep.subr.mxu0 0.0
        %4084 = vmatpush1.msra.mxu0 0.0
        %4085 = vmatprep.subr.mxu0 0.0
        %4086 = vmatpush1.msra.mxu0 0.0
        %4087 = vmatprep.subr.mxu0 0.0
        %4088 = vmatpush1.msra.mxu0 0.0
        %4089 = vmatprep.subr.mxu0 0.0
        %4090 = vmatpush1.msra.mxu0 0.0
        %4091 = vmatprep.subr.mxu0 0.0
        %4092 = vmatpush1.msra.mxu0 0.0
        %4093 = vmatprep.subr.mxu0 0.0
        %4094 = vmatpush1.msra.mxu0 0.0
        %4095 = vmatprep.subr.mxu0 0.0
        %4096 = vmatpush1.msra.mxu0 0.0
        %4097 = vmatprep.subr.mxu0 0.0
        %4098 = vmatpush1.msra.mxu0 0.0
        %4099 = vmatprep.subr.mxu0 0.0
        %4100 = vmatpush1.msra.mxu0 0.0
        %4101 = vmatprep.subr.mxu0 0.0
        %4102 = vmatpush1.msra.mxu0 0.0
        %4103 = vmatprep.subr.mxu0 0.0
        %4104 = vmatpush1.msra.mxu0 0.0
        %4105 = vmatprep.subr.mxu0 0.0
        %4106 = vmatpush1.msra.mxu0 0.0
        %4107 = vmatprep.subr.mxu0 0.0
        %4108 = vmatpush1.msra.mxu0 0.0
        %4109 = vmatprep.subr.mxu0 0.0
        %4110 = vmatpush1.msra.mxu0 0.0
        %4111 = vmatprep.subr.mxu0 0.0
        %4112 = vmatpush1.msra.mxu0 0.0
        %4113 = vmatprep.subr.mxu0 0.0
        %4114 = vmatpush1.msra.mxu0 0.0
        %4115 = vmatprep.subr.mxu0 0.0
        %4116 = vmatpush1.msra.mxu0 0.0
        %4117 = vmatprep.subr.mxu0 0.0
        %4118 = vmatpush1.msra.mxu0 0.0
        %4119 = vmatprep.subr.mxu0 0.0
        %4120 = vmatpush1.msra.mxu0 0.0
        %4121 = vmatprep.subr.mxu0 0.0
        %4122 = vmatpush1.msra.mxu0 0.0
        %4123 = vmatprep.subr.mxu0 0.0
        %4124 = vmatpush1.msra.mxu0 0.0
        %4125 = vmatprep.subr.mxu0 0.0
        %4126 = vmatpush1.msra.mxu0 0.0
        %4127 = vmatprep.subr.mxu0 0.0
        %4128 = vmatpush1.msra.mxu0 0.0
        %4129 = vmatprep.subr.mxu0 0.0
        %4130 = vmatpush1.msra.mxu0 0.0
        %4131 = vmatprep.subr.mxu0 0.0
        %4132 = vmatpush1.msra.mxu0 0.0
        %4133 = vmatprep.subr.mxu0 0.0
        %4134 = vmatpush1.msra.mxu0 0.0
        %4135 = vmatprep.subr.mxu0 0.0
        %4136 = vmatpush1.msra.mxu0 0.0
        %4137 = vmatprep.subr.mxu0 0.0
        %4138 = vmatpush1.msra.mxu0 0.0
        %4139 = vmatprep.subr.mxu0 0.0
        %4140 = vmatpush1.msra.mxu0 0.0
        %4141 = vmatprep.mubr.f32.mxu0 0.0
        %4142 = vmatmul.mubr.f32.gmra.mrb[0].mxu0 %v4075
        %v4143 = vpop.f32.mrb[0].mxu0
        %v4144 = vadd.f32 0.0, %v4143
        %v4145 = vpop.f32.mrb[0].mxu0
        %4146 = vdwg.mxu0
        %v4148 = vsel %vm1550, %v4071, 0
        %4150 = vmatprep.subr.mxu0 0.0
        %4151 = vmatpush1.msra.mxu0 %v3579
        %4152 = vmatprep.subr.mxu0 0.0
        %4153 = vmatpush1.msra.mxu0 0.0
        %4154 = vmatprep.subr.mxu0 0.0
        %4155 = vmatpush1.msra.mxu0 0.0
        %4156 = vmatprep.subr.mxu0 0.0
        %4157 = vmatpush1.msra.mxu0 0.0
        %4158 = vmatprep.subr.mxu0 0.0
        %4159 = vmatpush1.msra.mxu0 0.0
        %4160 = vmatprep.subr.mxu0 0.0
        %4161 = vmatpush1.msra.mxu0 0.0
        %4162 = vmatprep.subr.mxu0 0.0
        %4163 = vmatpush1.msra.mxu0 0.0
        %4164 = vmatprep.subr.mxu0 0.0
        %4165 = vmatpush1.msra.mxu0 0.0
        %4166 = vmatprep.subr.mxu0 0.0
        %4167 = vmatpush1.msra.mxu0 0.0
        %4168 = vmatprep.subr.mxu0 0.0
        %4169 = vmatpush1.msra.mxu0 0.0
        %4170 = vmatprep.subr.mxu0 0.0
        %4171 = vmatpush1.msra.mxu0 0.0
        %4172 = vmatprep.subr.mxu0 0.0
        %4173 = vmatpush1.msra.mxu0 0.0
        %4174 = vmatprep.subr.mxu0 0.0
        %4175 = vmatpush1.msra.mxu0 0.0
        %4176 = vmatprep.subr.mxu0 0.0
        %4177 = vmatpush1.msra.mxu0 0.0
        %4178 = vmatprep.subr.mxu0 0.0
        %4179 = vmatpush1.msra.mxu0 0.0
        %4180 = vmatprep.subr.mxu0 0.0
        %4181 = vmatpush1.msra.mxu0 0.0
        %4182 = vmatprep.subr.mxu0 0.0
        %4183 = vmatpush1.msra.mxu0 0.0
        %4184 = vmatprep.subr.mxu0 0.0
        %4185 = vmatpush1.msra.mxu0 0.0
        %4186 = vmatprep.subr.mxu0 0.0
        %4187 = vmatpush1.msra.mxu0 0.0
        %4188 = vmatprep.subr.mxu0 0.0
        %4189 = vmatpush1.msra.mxu0 0.0
        %4190 = vmatprep.subr.mxu0 0.0
        %4191 = vmatpush1.msra.mxu0 0.0
        %4192 = vmatprep.subr.mxu0 0.0
        %4193 = vmatpush1.msra.mxu0 0.0
        %4194 = vmatprep.subr.mxu0 0.0
        %4195 = vmatpush1.msra.mxu0 0.0
        %4196 = vmatprep.subr.mxu0 0.0
        %4197 = vmatpush1.msra.mxu0 0.0
        %4198 = vmatprep.subr.mxu0 0.0
        %4199 = vmatpush1.msra.mxu0 0.0
        %4200 = vmatprep.subr.mxu0 0.0
        %4201 = vmatpush1.msra.mxu0 0.0
        %4202 = vmatprep.subr.mxu0 0.0
        %4203 = vmatpush1.msra.mxu0 0.0
        %4204 = vmatprep.subr.mxu0 0.0
        %4205 = vmatpush1.msra.mxu0 0.0
        %4206 = vmatprep.subr.mxu0 0.0
        %4207 = vmatpush1.msra.mxu0 0.0
        %4208 = vmatprep.subr.mxu0 0.0
        %4209 = vmatpush1.msra.mxu0 0.0
        %4210 = vmatprep.subr.mxu0 0.0
        %4211 = vmatpush1.msra.mxu0 0.0
        %4212 = vmatprep.subr.mxu0 0.0
        %4213 = vmatpush1.msra.mxu0 0.0
        %4214 = vmatprep.mubr.f32.mxu0 0.0
        %4215 = vmatmul.mubr.f32.gmra.mrb[0].mxu0 %v4148
        %v4216 = vpop.f32.mrb[0].mxu0
        %v4217 = vadd.f32 0.0, %v4216
        %v4218 = vpop.f32.mrb[0].mxu0
        %4219 = vdwg.mxu0
        %v4221 = vsel %vm1550, %v4072, 0
        %4223 = vmatprep.subr.mxu0 0.0
        %4224 = vmatpush1.msra.mxu0 %v3649
        %4225 = vmatprep.subr.mxu0 0.0
        %4226 = vmatpush1.msra.mxu0 0.0
        %4227 = vmatprep.subr.mxu0 0.0
        %4228 = vmatpush1.msra.mxu0 0.0
        %4229 = vmatprep.subr.mxu0 0.0
        %4230 = vmatpush1.msra.mxu0 0.0
        %4231 = vmatprep.subr.mxu0 0.0
        %4232 = vmatpush1.msra.mxu0 0.0
        %4233 = vmatprep.subr.mxu0 0.0
        %4234 = vmatpush1.msra.mxu0 0.0
        %4235 = vmatprep.subr.mxu0 0.0
        %4236 = vmatpush1.msra.mxu0 0.0
        %4237 = vmatprep.subr.mxu0 0.0
        %4238 = vmatpush1.msra.mxu0 0.0
        %4239 = vmatprep.subr.mxu0 0.0
        %4240 = vmatpush1.msra.mxu0 0.0
        %4241 = vmatprep.subr.mxu0 0.0
        %4242 = vmatpush1.msra.mxu0 0.0
        %4243 = vmatprep.subr.mxu0 0.0
        %4244 = vmatpush1.msra.mxu0 0.0
        %4245 = vmatprep.subr.mxu0 0.0
        %4246 = vmatpush1.msra.mxu0 0.0
        %4247 = vmatprep.subr.mxu0 0.0
        %4248 = vmatpush1.msra.mxu0 0.0
        %4249 = vmatprep.subr.mxu0 0.0
        %4250 = vmatpush1.msra.mxu0 0.0
        %4251 = vmatprep.subr.mxu0 0.0
        %4252 = vmatpush1.msra.mxu0 0.0
        %4253 = vmatprep.subr.mxu0 0.0
        %4254 = vmatpush1.msra.mxu0 0.0
        %4255 = vmatprep.subr.mxu0 0.0
        %4256 = vmatpush1.msra.mxu0 0.0
        %4257 = vmatprep.subr.mxu0 0.0
        %4258 = vmatpush1.msra.mxu0 0.0
        %4259 = vmatprep.subr.mxu0 0.0
        %4260 = vmatpush1.msra.mxu0 0.0
        %4261 = vmatprep.subr.mxu0 0.0
        %4262 = vmatpush1.msra.mxu0 0.0
        %4263 = vmatprep.subr.mxu0 0.0
        %4264 = vmatpush1.msra.mxu0 0.0
        %4265 = vmatprep.subr.mxu0 0.0
        %4266 = vmatpush1.msra.mxu0 0.0
        %4267 = vmatprep.subr.mxu0 0.0
        %4268 = vmatpush1.msra.mxu0 0.0
        %4269 = vmatprep.subr.mxu0 0.0
        %4270 = vmatpush1.msra.mxu0 0.0
        %4271 = vmatprep.subr.mxu0 0.0
        %4272 = vmatpush1.msra.mxu0 0.0
        %4273 = vmatprep.subr.mxu0 0.0
        %4274 = vmatpush1.msra.mxu0 0.0
        %4275 = vmatprep.subr.mxu0 0.0
        %4276 = vmatpush1.msra.mxu0 0.0
        %4277 = vmatprep.subr.mxu0 0.0
        %4278 = vmatpush1.msra.mxu0 0.0
        %4279 = vmatprep.subr.mxu0 0.0
        %4280 = vmatpush1.msra.mxu0 0.0
        %4281 = vmatprep.subr.mxu0 0.0
        %4282 = vmatpush1.msra.mxu0 0.0
        %4283 = vmatprep.subr.mxu0 0.0
        %4284 = vmatpush1.msra.mxu0 0.0
        %4285 = vmatprep.subr.mxu0 0.0
        %4286 = vmatpush1.msra.mxu0 0.0
        %4287 = vmatprep.mubr.f32.mxu0 0.0
        %4288 = vmatmul.mubr.f32.gmra.mrb[0].mxu0 %v4221
        %v4289 = vpop.f32.mrb[0].mxu0
        %v4290 = vadd.f32 0.0, %v4289
        %v4291 = vpop.f32.mrb[0].mxu0
        %4292 = vdwg.mxu0
        %v4294 = vsel %vm1550, %v4073, 0
        %4296 = vmatprep.subr.mxu0 0.0
        %4297 = vmatpush1.msra.mxu0 %v3719
        %4298 = vmatprep.subr.mxu0 0.0
        %4299 = vmatpush1.msra.mxu0 0.0
        %4300 = vmatprep.subr.mxu0 0.0
        %4301 = vmatpush1.msra.mxu0 0.0
        %4302 = vmatprep.subr.mxu0 0.0
        %4303 = vmatpush1.msra.mxu0 0.0
        %4304 = vmatprep.subr.mxu0 0.0
        %4305 = vmatpush1.msra.mxu0 0.0
        %4306 = vmatprep.subr.mxu0 0.0
        %4307 = vmatpush1.msra.mxu0 0.0
        %4308 = vmatprep.subr.mxu0 0.0
        %4309 = vmatpush1.msra.mxu0 0.0
        %4310 = vmatprep.subr.mxu0 0.0
        %4311 = vmatpush1.msra.mxu0 0.0
        %4312 = vmatprep.subr.mxu0 0.0
        %4313 = vmatpush1.msra.mxu0 0.0
        %4314 = vmatprep.subr.mxu0 0.0
        %4315 = vmatpush1.msra.mxu0 0.0
        %4316 = vmatprep.subr.mxu0 0.0
        %4317 = vmatpush1.msra.mxu0 0.0
        %4318 = vmatprep.subr.mxu0 0.0
        %4319 = vmatpush1.msra.mxu0 0.0
        %4320 = vmatprep.subr.mxu0 0.0
        %4321 = vmatpush1.msra.mxu0 0.0
        %4322 = vmatprep.subr.mxu0 0.0
        %4323 = vmatpush1.msra.mxu0 0.0
        %4324 = vmatprep.subr.mxu0 0.0
        %4325 = vmatpush1.msra.mxu0 0.0
        %4326 = vmatprep.subr.mxu0 0.0
        %4327 = vmatpush1.msra.mxu0 0.0
        %4328 = vmatprep.subr.mxu0 0.0
        %4329 = vmatpush1.msra.mxu0 0.0
        %4330 = vmatprep.subr.mxu0 0.0
        %4331 = vmatpush1.msra.mxu0 0.0
        %4332 = vmatprep.subr.mxu0 0.0
        %4333 = vmatpush1.msra.mxu0 0.0
        %4334 = vmatprep.subr.mxu0 0.0
        %4335 = vmatpush1.msra.mxu0 0.0
        %4336 = vmatprep.subr.mxu0 0.0
        %4337 = vmatpush1.msra.mxu0 0.0
        %4338 = vmatprep.subr.mxu0 0.0
        %4339 = vmatpush1.msra.mxu0 0.0
        %4340 = vmatprep.subr.mxu0 0.0
        %4341 = vmatpush1.msra.mxu0 0.0
        %4342 = vmatprep.subr.mxu0 0.0
        %4343 = vmatpush1.msra.mxu0 0.0
        %4344 = vmatprep.subr.mxu0 0.0
        %4345 = vmatpush1.msra.mxu0 0.0
        %4346 = vmatprep.subr.mxu0 0.0
        %4347 = vmatpush1.msra.mxu0 0.0
        %4348 = vmatprep.subr.mxu0 0.0
        %4349 = vmatpush1.msra.mxu0 0.0
        %4350 = vmatprep.subr.mxu0 0.0
        %4351 = vmatpush1.msra.mxu0 0.0
        %4352 = vmatprep.subr.mxu0 0.0
        %4353 = vmatpush1.msra.mxu0 0.0
        %4354 = vmatprep.subr.mxu0 0.0
        %4355 = vmatpush1.msra.mxu0 0.0
        %4356 = vmatprep.subr.mxu0 0.0
        %4357 = vmatpush1.msra.mxu0 0.0
        %4358 = vmatprep.subr.mxu0 0.0
        %4359 = vmatpush1.msra.mxu0 0.0
        %4360 = vmatprep.mubr.f32.mxu0 0.0
        %4361 = vmatmul.mubr.f32.gmra.mrb[0].mxu0 %v4294
        %v4362 = vpop.f32.mrb[0].mxu0
        %v4363 = vadd.f32 0.0, %v4362
        %v4364 = vpop.f32.mrb[0].mxu0
        %4365 = vdwg.mxu0
        %s4366 = scalar_lea.vmem %s8, 32
        %v4367 = vld [vmem:[%s4366] sm:$0xff]
        %v4368 = vld [vmem:[%s4366 + $0x8] sm:$0xff]
        %v4369 = vld [vmem:[%s4366 + $0x10] sm:$0xff]
        %v4370 = vld [vmem:[%s4366 + $0x18] sm:$0xff]
        %v4372 = vsel %vm1550, %v4144, 0
        %4374 = vmatprep.subr.mxu0 0.0
        %4375 = vmatpush1.msra.mxu0 %v4367
        %4376 = vmatprep.subr.mxu0 0.0
        %4377 = vmatpush1.msra.mxu0 0.0
        %4378 = vmatprep.subr.mxu0 0.0
        %4379 = vmatpush1.msra.mxu0 0.0
        %4380 = vmatprep.subr.mxu0 0.0
        %4381 = vmatpush1.msra.mxu0 0.0
        %4382 = vmatprep.subr.mxu0 0.0
        %4383 = vmatpush1.msra.mxu0 0.0
        %4384 = vmatprep.subr.mxu0 0.0
        %4385 = vmatpush1.msra.mxu0 0.0
        %4386 = vmatprep.subr.mxu0 0.0
        %4387 = vmatpush1.msra.mxu0 0.0
        %4388 = vmatprep.subr.mxu0 0.0
        %4389 = vmatpush1.msra.mxu0 0.0
        %4390 = vmatprep.subr.mxu0 0.0
        %4391 = vmatpush1.msra.mxu0 0.0
        %4392 = vmatprep.subr.mxu0 0.0
        %4393 = vmatpush1.msra.mxu0 0.0
        %4394 = vmatprep.subr.mxu0 0.0
        %4395 = vmatpush1.msra.mxu0 0.0
        %4396 = vmatprep.subr.mxu0 0.0
        %4397 = vmatpush1.msra.mxu0 0.0
        %4398 = vmatprep.subr.mxu0 0.0
        %4399 = vmatpush1.msra.mxu0 0.0
        %4400 = vmatprep.subr.mxu0 0.0
        %4401 = vmatpush1.msra.mxu0 0.0
        %4402 = vmatprep.subr.mxu0 0.0
        %4403 = vmatpush1.msra.mxu0 0.0
        %4404 = vmatprep.subr.mxu0 0.0
        %4405 = vmatpush1.msra.mxu0 0.0
        %4406 = vmatprep.subr.mxu0 0.0
        %4407 = vmatpush1.msra.mxu0 0.0
        %4408 = vmatprep.subr.mxu0 0.0
        %4409 = vmatpush1.msra.mxu0 0.0
        %4410 = vmatprep.subr.mxu0 0.0
        %4411 = vmatpush1.msra.mxu0 0.0
        %4412 = vmatprep.subr.mxu0 0.0
        %4413 = vmatpush1.msra.mxu0 0.0
        %4414 = vmatprep.subr.mxu0 0.0
        %4415 = vmatpush1.msra.mxu0 0.0
        %4416 = vmatprep.subr.mxu0 0.0
        %4417 = vmatpush1.msra.mxu0 0.0
        %4418 = vmatprep.subr.mxu0 0.0
        %4419 = vmatpush1.msra.mxu0 0.0
        %4420 = vmatprep.subr.mxu0 0.0
        %4421 = vmatpush1.msra.mxu0 0.0
        %4422 = vmatprep.subr.mxu0 0.0
        %4423 = vmatpush1.msra.mxu0 0.0
        %4424 = vmatprep.subr.mxu0 0.0
        %4425 = vmatpush1.msra.mxu0 0.0
        %4426 = vmatprep.subr.mxu0 0.0
        %4427 = vmatpush1.msra.mxu0 0.0
        %4428 = vmatprep.subr.mxu0 0.0
        %4429 = vmatpush1.msra.mxu0 0.0
        %4430 = vmatprep.subr.mxu0 0.0
        %4431 = vmatpush1.msra.mxu0 0.0
        %4432 = vmatprep.subr.mxu0 0.0
        %4433 = vmatpush1.msra.mxu0 0.0
        %4434 = vmatprep.subr.mxu0 0.0
        %4435 = vmatpush1.msra.mxu0 0.0
        %4436 = vmatprep.subr.mxu0 0.0
        %4437 = vmatpush1.msra.mxu0 0.0
        %4438 = vmatprep.mubr.f32.mxu0 0.0
        %4439 = vmatmul.mubr.f32.gmra.mrb[0].mxu0 %v4372
        %v4440 = vpop.f32.mrb[0].mxu0
        %v4441 = vadd.f32 0.0, %v4440
        %v4442 = vpop.f32.mrb[0].mxu0
        %4443 = vdwg.mxu0
        %v4445 = vsel %vm1550, %v4217, 0
        %4447 = vmatprep.subr.mxu0 0.0
        %4448 = vmatpush1.msra.mxu0 %v4368
        %4449 = vmatprep.subr.mxu0 0.0
        %4450 = vmatpush1.msra.mxu0 0.0
        %4451 = vmatprep.subr.mxu0 0.0
        %4452 = vmatpush1.msra.mxu0 0.0
        %4453 = vmatprep.subr.mxu0 0.0
        %4454 = vmatpush1.msra.mxu0 0.0
        %4455 = vmatprep.subr.mxu0 0.0
        %4456 = vmatpush1.msra.mxu0 0.0
        %4457 = vmatprep.subr.mxu0 0.0
        %4458 = vmatpush1.msra.mxu0 0.0
        %4459 = vmatprep.subr.mxu0 0.0
        %4460 = vmatpush1.msra.mxu0 0.0
        %4461 = vmatprep.subr.mxu0 0.0
        %4462 = vmatpush1.msra.mxu0 0.0
        %4463 = vmatprep.subr.mxu0 0.0
        %4464 = vmatpush1.msra.mxu0 0.0
        %4465 = vmatprep.subr.mxu0 0.0
        %4466 = vmatpush1.msra.mxu0 0.0
        %4467 = vmatprep.subr.mxu0 0.0
        %4468 = vmatpush1.msra.mxu0 0.0
        %4469 = vmatprep.subr.mxu0 0.0
        %4470 = vmatpush1.msra.mxu0 0.0
        %4471 = vmatprep.subr.mxu0 0.0
        %4472 = vmatpush1.msra.mxu0 0.0
        %4473 = vmatprep.subr.mxu0 0.0
        %4474 = vmatpush1.msra.mxu0 0.0
        %4475 = vmatprep.subr.mxu0 0.0
        %4476 = vmatpush1.msra.mxu0 0.0
        %4477 = vmatprep.subr.mxu0 0.0
        %4478 = vmatpush1.msra.mxu0 0.0
        %4479 = vmatprep.subr.mxu0 0.0
        %4480 = vmatpush1.msra.mxu0 0.0
        %4481 = vmatprep.subr.mxu0 0.0
        %4482 = vmatpush1.msra.mxu0 0.0
        %4483 = vmatprep.subr.mxu0 0.0
        %4484 = vmatpush1.msra.mxu0 0.0
        %4485 = vmatprep.subr.mxu0 0.0
        %4486 = vmatpush1.msra.mxu0 0.0
        %4487 = vmatprep.subr.mxu0 0.0
        %4488 = vmatpush1.msra.mxu0 0.0
        %4489 = vmatprep.subr.mxu0 0.0
        %4490 = vmatpush1.msra.mxu0 0.0
        %4491 = vmatprep.subr.mxu0 0.0
        %4492 = vmatpush1.msra.mxu0 0.0
        %4493 = vmatprep.subr.mxu0 0.0
        %4494 = vmatpush1.msra.mxu0 0.0
        %4495 = vmatprep.subr.mxu0 0.0
        %4496 = vmatpush1.msra.mxu0 0.0
        %4497 = vmatprep.subr.mxu0 0.0
        %4498 = vmatpush1.msra.mxu0 0.0
        %4499 = vmatprep.subr.mxu0 0.0
        %4500 = vmatpush1.msra.mxu0 0.0
        %4501 = vmatprep.subr.mxu0 0.0
        %4502 = vmatpush1.msra.mxu0 0.0
        %4503 = vmatprep.subr.mxu0 0.0
        %4504 = vmatpush1.msra.mxu0 0.0
        %4505 = vmatprep.subr.mxu0 0.0
        %4506 = vmatpush1.msra.mxu0 0.0
        %4507 = vmatprep.subr.mxu0 0.0
        %4508 = vmatpush1.msra.mxu0 0.0
        %4509 = vmatprep.subr.mxu0 0.0
        %4510 = vmatpush1.msra.mxu0 0.0
        %4511 = vmatprep.mubr.f32.mxu0 0.0
        %4512 = vmatmul.mubr.f32.gmra.mrb[0].mxu0 %v4445
        %v4513 = vpop.f32.mrb[0].mxu0
        %v4514 = vadd.f32 0.0, %v4513
        %v4515 = vpop.f32.mrb[0].mxu0
        %4516 = vdwg.mxu0
        %v4518 = vsel %vm1550, %v4290, 0
        %4520 = vmatprep.subr.mxu0 0.0
        %4521 = vmatpush1.msra.mxu0 %v4369
        %4522 = vmatprep.subr.mxu0 0.0
        %4523 = vmatpush1.msra.mxu0 0.0
        %4524 = vmatprep.subr.mxu0 0.0
        %4525 = vmatpush1.msra.mxu0 0.0
        %4526 = vmatprep.subr.mxu0 0.0
        %4527 = vmatpush1.msra.mxu0 0.0
        %4528 = vmatprep.subr.mxu0 0.0
        %4529 = vmatpush1.msra.mxu0 0.0
        %4530 = vmatprep.subr.mxu0 0.0
        %4531 = vmatpush1.msra.mxu0 0.0
        %4532 = vmatprep.subr.mxu0 0.0
        %4533 = vmatpush1.msra.mxu0 0.0
        %4534 = vmatprep.subr.mxu0 0.0
        %4535 = vmatpush1.msra.mxu0 0.0
        %4536 = vmatprep.subr.mxu0 0.0
        %4537 = vmatpush1.msra.mxu0 0.0
        %4538 = vmatprep.subr.mxu0 0.0
        %4539 = vmatpush1.msra.mxu0 0.0
        %4540 = vmatprep.subr.mxu0 0.0
        %4541 = vmatpush1.msra.mxu0 0.0
        %4542 = vmatprep.subr.mxu0 0.0
        %4543 = vmatpush1.msra.mxu0 0.0
        %4544 = vmatprep.subr.mxu0 0.0
        %4545 = vmatpush1.msra.mxu0 0.0
        %4546 = vmatprep.subr.mxu0 0.0
        %4547 = vmatpush1.msra.mxu0 0.0
        %4548 = vmatprep.subr.mxu0 0.0
        %4549 = vmatpush1.msra.mxu0 0.0
        %4550 = vmatprep.subr.mxu0 0.0
        %4551 = vmatpush1.msra.mxu0 0.0
        %4552 = vmatprep.subr.mxu0 0.0
        %4553 = vmatpush1.msra.mxu0 0.0
        %4554 = vmatprep.subr.mxu0 0.0
        %4555 = vmatpush1.msra.mxu0 0.0
        %4556 = vmatprep.subr.mxu0 0.0
        %4557 = vmatpush1.msra.mxu0 0.0
        %4558 = vmatprep.subr.mxu0 0.0
        %4559 = vmatpush1.msra.mxu0 0.0
        %4560 = vmatprep.subr.mxu0 0.0
        %4561 = vmatpush1.msra.mxu0 0.0
        %4562 = vmatprep.subr.mxu0 0.0
        %4563 = vmatpush1.msra.mxu0 0.0
        %4564 = vmatprep.subr.mxu0 0.0
        %4565 = vmatpush1.msra.mxu0 0.0
        %4566 = vmatprep.subr.mxu0 0.0
        %4567 = vmatpush1.msra.mxu0 0.0
        %4568 = vmatprep.subr.mxu0 0.0
        %4569 = vmatpush1.msra.mxu0 0.0
        %4570 = vmatprep.subr.mxu0 0.0
        %4571 = vmatpush1.msra.mxu0 0.0
        %4572 = vmatprep.subr.mxu0 0.0
        %4573 = vmatpush1.msra.mxu0 0.0
        %4574 = vmatprep.subr.mxu0 0.0
        %4575 = vmatpush1.msra.mxu0 0.0
        %4576 = vmatprep.subr.mxu0 0.0
        %4577 = vmatpush1.msra.mxu0 0.0
        %4578 = vmatprep.subr.mxu0 0.0
        %4579 = vmatpush1.msra.mxu0 0.0
        %4580 = vmatprep.subr.mxu0 0.0
        %4581 = vmatpush1.msra.mxu0 0.0
        %4582 = vmatprep.subr.mxu0 0.0
        %4583 = vmatpush1.msra.mxu0 0.0
        %4584 = vmatprep.mubr.f32.mxu0 0.0
        %4585 = vmatmul.mubr.f32.gmra.mrb[0].mxu0 %v4518
        %v4586 = vpop.f32.mrb[0].mxu0
        %v4587 = vadd.f32 0.0, %v4586
        %v4588 = vpop.f32.mrb[0].mxu0
        %4589 = vdwg.mxu0
        %v4591 = vsel %vm1550, %v4363, 0
        %4593 = vmatprep.subr.mxu0 0.0
        %4594 = vmatpush1.msra.mxu0 %v4370
        %4595 = vmatprep.subr.mxu0 0.0
        %4596 = vmatpush1.msra.mxu0 0.0
        %4597 = vmatprep.subr.mxu0 0.0
        %4598 = vmatpush1.msra.mxu0 0.0
        %4599 = vmatprep.subr.mxu0 0.0
        %4600 = vmatpush1.msra.mxu0 0.0
        %4601 = vmatprep.subr.mxu0 0.0
        %4602 = vmatpush1.msra.mxu0 0.0
        %4603 = vmatprep.subr.mxu0 0.0
        %4604 = vmatpush1.msra.mxu0 0.0
        %4605 = vmatprep.subr.mxu0 0.0
        %4606 = vmatpush1.msra.mxu0 0.0
        %4607 = vmatprep.subr.mxu0 0.0
        %4608 = vmatpush1.msra.mxu0 0.0
        %4609 = vmatprep.subr.mxu0 0.0
        %4610 = vmatpush1.msra.mxu0 0.0
        %4611 = vmatprep.subr.mxu0 0.0
        %4612 = vmatpush1.msra.mxu0 0.0
        %4613 = vmatprep.subr.mxu0 0.0
        %4614 = vmatpush1.msra.mxu0 0.0
        %4615 = vmatprep.subr.mxu0 0.0
        %4616 = vmatpush1.msra.mxu0 0.0
        %4617 = vmatprep.subr.mxu0 0.0
        %4618 = vmatpush1.msra.mxu0 0.0
        %4619 = vmatprep.subr.mxu0 0.0
        %4620 = vmatpush1.msra.mxu0 0.0
        %4621 = vmatprep.subr.mxu0 0.0
        %4622 = vmatpush1.msra.mxu0 0.0
        %4623 = vmatprep.subr.mxu0 0.0
        %4624 = vmatpush1.msra.mxu0 0.0
        %4625 = vmatprep.subr.mxu0 0.0
        %4626 = vmatpush1.msra.mxu0 0.0
        %4627 = vmatprep.subr.mxu0 0.0
        %4628 = vmatpush1.msra.mxu0 0.0
        %4629 = vmatprep.subr.mxu0 0.0
        %4630 = vmatpush1.msra.mxu0 0.0
        %4631 = vmatprep.subr.mxu0 0.0
        %4632 = vmatpush1.msra.mxu0 0.0
        %4633 = vmatprep.subr.mxu0 0.0
        %4634 = vmatpush1.msra.mxu0 0.0
        %4635 = vmatprep.subr.mxu0 0.0
        %4636 = vmatpush1.msra.mxu0 0.0
        %4637 = vmatprep.subr.mxu0 0.0
        %4638 = vmatpush1.msra.mxu0 0.0
        %4639 = vmatprep.subr.mxu0 0.0
        %4640 = vmatpush1.msra.mxu0 0.0
        %4641 = vmatprep.subr.mxu0 0.0
        %4642 = vmatpush1.msra.mxu0 0.0
        %4643 = vmatprep.subr.mxu0 0.0
        %4644 = vmatpush1.msra.mxu0 0.0
        %4645 = vmatprep.subr.mxu0 0.0
        %4646 = vmatpush1.msra.mxu0 0.0
        %4647 = vmatprep.subr.mxu0 0.0
        %4648 = vmatpush1.msra.mxu0 0.0
        %4649 = vmatprep.subr.mxu0 0.0
        %4650 = vmatpush1.msra.mxu0 0.0
        %4651 = vmatprep.subr.mxu0 0.0
        %4652 = vmatpush1.msra.mxu0 0.0
        %4653 = vmatprep.subr.mxu0 0.0
        %4654 = vmatpush1.msra.mxu0 0.0
        %4655 = vmatprep.subr.mxu0 0.0
        %4656 = vmatpush1.msra.mxu0 0.0
        %4657 = vmatprep.mubr.f32.mxu0 0.0
        %4658 = vmatmul.mubr.f32.gmra.mrb[0].mxu0 %v4591
        %v4659 = vpop.f32.mrb[0].mxu0
        %v4660 = vadd.f32 0.0, %v4659
        %v4661 = vpop.f32.mrb[0].mxu0
        %4662 = vdwg.mxu0
        %v4663 = vsel %vm618, %v4441, 0.0
        %v4664 = vsel %vm618, %v4514, 0.0
        %v4665 = vadd.f32 %v4663, %v4664
        %v4666 = vsel %vm618, %v4587, 0.0
        %v4667 = vadd.f32 %v4665, %v4666
        %v4668 = vsel %vm618, %v4660, 0.0
        %v4669 = vadd.f32 %v4667, %v4668
        %s4670 = scalar_lea.vmem %s9, 1
        %v4671 = vld [vmem:[%s4670] sm:$0x1]
        %v4673 = vlaneseq
        %v4674 = vshrl.u32 %v4673, 7
        %v4675 = vsub.s32 0, %v4674
        %v4676 = vrot.slane %v4671, %v4675
        %v4678 = vadd.f32 %v4669, %v4676
        %v4679 = vadd.f32 %v2740, %v4678
        %s4680 = scalar_lea.vmem %s10, 1
        %v4681 = vld [vmem:[%s4680] sm:$0x1]
        %s4682 = scalar_lea.vmem %s11, 1
        %v4683 = vld [vmem:[%s4682] sm:$0x1]
        %v4684 = vsel %vm618, %v4679, 0.0
        %4685 = vadd.xlane.f32.xlu0 %v4684
        %v4686 = vpop.xlane.xlu0 %4685
        %v4687 = vmul.f32 %v4686, %v2512
        %v4688 = vsub.f32 %v4679, %v4687
        %v4689 = vmul.f32 %v4688, %v4688
        %v4690 = vsel %vm618, %v4689, 0.0
        %4691 = vadd.xlane.f32.xlu0 %v4690
        %v4692 = vpop.xlane.xlu0 %4691
        %v4693 = vmul.f32 %v4692, %v2512
        %v4694 = vadd.f32 %v4693, 1e-05
        %v4695 = vrsqrt.pop %v4694
        %v4696 = vmul.f32 %v4688, %v4695
        %v4698 = vlaneseq
        %v4699 = vshrl.u32 %v4698, 7
        %v4700 = vsub.s32 0, %v4699
        %v4701 = vrot.slane %v4681, %v4700
        %v4703 = vmul.f32 %v4696, %v4701
        %v4705 = vlaneseq
        %v4706 = vshrl.u32 %v4705, 7
        %v4707 = vsub.s32 0, %v4706
        %v4708 = vrot.slane %v4683, %v4707
        %v4710 = vadd.f32 %v4703, %v4708
        %s4711 = scalar_lea.vmem %s12, 32
        %v4712 = vld [vmem:[%s4711] sm:$0xff]
        %v4713 = vld [vmem:[%s4711 + $0x8] sm:$0xff]
        %v4714 = vld [vmem:[%s4711 + $0x10] sm:$0xff]
        %v4715 = vld [vmem:[%s4711 + $0x18] sm:$0xff]
        %s4716 = scalar_lea.vmem %s13, 1
        %v4717 = vld [vmem:[%s4716] sm:$0x1]
        %v4719 = vlaneseq
        %v4720 = vshrl.u32 %v4719, 7
        %v4721 = vsub.s32 0, %v4720
        %v4722 = vrot.slane %v4717, %v4721
        %v4725 = vsel %vm618, %v4710, 0
        %4727 = vmatprep.subr.mxu0 0.0
        %4728 = vmatpush1.msra.mxu0 %v4712
        %4729 = vmatprep.subr.mxu0 0.0
        %4730 = vmatpush1.msra.mxu0 %v4713
        %4731 = vmatprep.subr.mxu0 0.0
        %4732 = vmatpush1.msra.mxu0 %v4714
        %4733 = vmatprep.subr.mxu0 0.0
        %4734 = vmatpush1.msra.mxu0 %v4715
        %4735 = vmatprep.subr.mxu0 0.0
        %4736 = vmatpush1.msra.mxu0 0.0
        %4737 = vmatprep.subr.mxu0 0.0
        %4738 = vmatpush1.msra.mxu0 0.0
        %4739 = vmatprep.subr.mxu0 0.0
        %4740 = vmatpush1.msra.mxu0 0.0
        %4741 = vmatprep.subr.mxu0 0.0
        %4742 = vmatpush1.msra.mxu0 0.0
        %4743 = vmatprep.subr.mxu0 0.0
        %4744 = vmatpush1.msra.mxu0 0.0
        %4745 = vmatprep.subr.mxu0 0.0
        %4746 = vmatpush1.msra.mxu0 0.0
        %4747 = vmatprep.subr.mxu0 0.0
        %4748 = vmatpush1.msra.mxu0 0.0
        %4749 = vmatprep.subr.mxu0 0.0
        %4750 = vmatpush1.msra.mxu0 0.0
        %4751 = vmatprep.subr.mxu0 0.0
        %4752 = vmatpush1.msra.mxu0 0.0
        %4753 = vmatprep.subr.mxu0 0.0
        %4754 = vmatpush1.msra.mxu0 0.0
        %4755 = vmatprep.subr.mxu0 0.0
        %4756 = vmatpush1.msra.mxu0 0.0
        %4757 = vmatprep.subr.mxu0 0.0
        %4758 = vmatpush1.msra.mxu0 0.0
        %4759 = vmatprep.subr.mxu0 0.0
        %4760 = vmatpush1.msra.mxu0 0.0
        %4761 = vmatprep.subr.mxu0 0.0
        %4762 = vmatpush1.msra.mxu0 0.0
        %4763 = vmatprep.subr.mxu0 0.0
        %4764 = vmatpush1.msra.mxu0 0.0
        %4765 = vmatprep.subr.mxu0 0.0
        %4766 = vmatpush1.msra.mxu0 0.0
        %4767 = vmatprep.subr.mxu0 0.0
        %4768 = vmatpush1.msra.mxu0 0.0
        %4769 = vmatprep.subr.mxu0 0.0
        %4770 = vmatpush1.msra.mxu0 0.0
        %4771 = vmatprep.subr.mxu0 0.0
        %4772 = vmatpush1.msra.mxu0 0.0
        %4773 = vmatprep.subr.mxu0 0.0
        %4774 = vmatpush1.msra.mxu0 0.0
        %4775 = vmatprep.subr.mxu0 0.0
        %4776 = vmatpush1.msra.mxu0 0.0
        %4777 = vmatprep.subr.mxu0 0.0
        %4778 = vmatpush1.msra.mxu0 0.0
        %4779 = vmatprep.subr.mxu0 0.0
        %4780 = vmatpush1.msra.mxu0 0.0
        %4781 = vmatprep.subr.mxu0 0.0
        %4782 = vmatpush1.msra.mxu0 0.0
        %4783 = vmatprep.subr.mxu0 0.0
        %4784 = vmatpush1.msra.mxu0 0.0
        %4785 = vmatprep.subr.mxu0 0.0
        %4786 = vmatpush1.msra.mxu0 0.0
        %4787 = vmatprep.subr.mxu0 0.0
        %4788 = vmatpush1.msra.mxu0 0.0
        %4789 = vmatprep.subr.mxu0 0.0
        %4790 = vmatpush1.msra.mxu0 0.0
        %4791 = vmatprep.mubr.f32.mxu0 0.0
        %4792 = vmatmul.mubr.f32.gmra.mrb[0].mxu0 %v4725
        %v4793 = vpop.f32.mrb[0].mxu0
        %v4794 = vadd.f32 %v4722, %v4793
        %v4795 = vpop.f32.mrb[0].mxu0
        %4796 = vdwg.mxu0
        %v4797 = vmax.f32 %v4794, 0.0
        %s4798 = scalar_lea.vmem %s14, 64
        %v4799 = vld [vmem:[%s4798] sm:$0xff]
        %v4800 = vld [vmem:[%s4798 + $0x8] sm:$0xff]
        %v4801 = vld [vmem:[%s4798 + $0x10] sm:$0xff]
        %v4802 = vld [vmem:[%s4798 + $0x18] sm:$0xff]
        %v4803 = vld [vmem:[%s4798 + $0x20] sm:$0xff]
        %v4804 = vld [vmem:[%s4798 + $0x28] sm:$0xff]
        %v4805 = vld [vmem:[%s4798 + $0x30] sm:$0xff]
        %v4806 = vld [vmem:[%s4798 + $0x38] sm:$0xff]
        %s4807 = scalar_lea.vmem %s15, 1
        %v4808 = vld [vmem:[%s4807] sm:$0x1]
        %v4810 = vlaneseq
        %v4811 = vshrl.u32 %v4810, 7
        %v4812 = vsub.s32 0, %v4811
        %v4813 = vrot.slane %v4808, %v4812
        %v4816 = vsel %vm2637, %v4797, 0
        %4818 = vmatprep.subr.mxu0 0.0
        %4819 = vmatpush1.msra.mxu0 %v4799
        %4820 = vmatprep.subr.mxu0 0.0
        %4821 = vmatpush1.msra.mxu0 %v4800
        %4822 = vmatprep.subr.mxu0 0.0
        %4823 = vmatpush1.msra.mxu0 %v4801
        %4824 = vmatprep.subr.mxu0 0.0
        %4825 = vmatpush1.msra.mxu0 %v4802
        %4826 = vmatprep.subr.mxu0 0.0
        %4827 = vmatpush1.msra.mxu0 %v4803
        %4828 = vmatprep.subr.mxu0 0.0
        %4829 = vmatpush1.msra.mxu0 %v4804
        %4830 = vmatprep.subr.mxu0 0.0
        %4831 = vmatpush1.msra.mxu0 %v4805
        %4832 = vmatprep.subr.mxu0 0.0
        %4833 = vmatpush1.msra.mxu0 %v4806
        %4834 = vmatprep.subr.mxu0 0.0
        %4835 = vmatpush1.msra.mxu0 0.0
        %4836 = vmatprep.subr.mxu0 0.0
        %4837 = vmatpush1.msra.mxu0 0.0
        %4838 = vmatprep.subr.mxu0 0.0
        %4839 = vmatpush1.msra.mxu0 0.0
        %4840 = vmatprep.subr.mxu0 0.0
        %4841 = vmatpush1.msra.mxu0 0.0
        %4842 = vmatprep.subr.mxu0 0.0
        %4843 = vmatpush1.msra.mxu0 0.0
        %4844 = vmatprep.subr.mxu0 0.0
        %4845 = vmatpush1.msra.mxu0 0.0
        %4846 = vmatprep.subr.mxu0 0.0
        %4847 = vmatpush1.msra.mxu0 0.0
        %4848 = vmatprep.subr.mxu0 0.0
        %4849 = vmatpush1.msra.mxu0 0.0
        %4850 = vmatprep.subr.mxu0 0.0
        %4851 = vmatpush1.msra.mxu0 0.0
        %4852 = vmatprep.subr.mxu0 0.0
        %4853 = vmatpush1.msra.mxu0 0.0
        %4854 = vmatprep.subr.mxu0 0.0
        %4855 = vmatpush1.msra.mxu0 0.0
        %4856 = vmatprep.subr.mxu0 0.0
        %4857 = vmatpush1.msra.mxu0 0.0
        %4858 = vmatprep.subr.mxu0 0.0
        %4859 = vmatpush1.msra.mxu0 0.0
        %4860 = vmatprep.subr.mxu0 0.0
        %4861 = vmatpush1.msra.mxu0 0.0
        %4862 = vmatprep.subr.mxu0 0.0
        %4863 = vmatpush1.msra.mxu0 0.0
        %4864 = vmatprep.subr.mxu0 0.0
        %4865 = vmatpush1.msra.mxu0 0.0
        %4866 = vmatprep.subr.mxu0 0.0
        %4867 = vmatpush1.msra.mxu0 0.0
        %4868 = vmatprep.subr.mxu0 0.0
        %4869 = vmatpush1.msra.mxu0 0.0
        %4870 = vmatprep.subr.mxu0 0.0
        %4871 = vmatpush1.msra.mxu0 0.0
        %4872 = vmatprep.subr.mxu0 0.0
        %4873 = vmatpush1.msra.mxu0 0.0
        %4874 = vmatprep.subr.mxu0 0.0
        %4875 = vmatpush1.msra.mxu0 0.0
        %4876 = vmatprep.subr.mxu0 0.0
        %4877 = vmatpush1.msra.mxu0 0.0
        %4878 = vmatprep.subr.mxu0 0.0
        %4879 = vmatpush1.msra.mxu0 0.0
        %4880 = vmatprep.subr.mxu0 0.0
        %4881 = vmatpush1.msra.mxu0 0.0
        %4882 = vmatprep.mubr.f32.mxu0 0.0
        %4883 = vmatmul.mubr.f32.gmra.mrb[0].mxu0 %v4816
        %v4884 = vpop.f32.mrb[0].mxu0
        %v4885 = vadd.f32 %v4813, %v4884
        %v4886 = vpop.f32.mrb[0].mxu0
        %4887 = vdwg.mxu0
        %v4888 = vadd.f32 %v4710, %v4885
        %s4889 = scalar_lea.vmem %s16, 1
        %v4890 = vld [vmem:[%s4889] sm:$0x1]
        %s4891 = scalar_lea.vmem %s17, 1
        %v4892 = vld [vmem:[%s4891] sm:$0x1]
        %v4893 = vsel %vm618, %v4888, 0.0
        %4894 = vadd.xlane.f32.xlu0 %v4893
        %v4895 = vpop.xlane.xlu0 %4894
        %v4896 = vmul.f32 %v4895, %v2512
        %v4897 = vsub.f32 %v4888, %v4896
        %v4898 = vmul.f32 %v4897, %v4897
        %v4899 = vsel %vm618, %v4898, 0.0
        %4900 = vadd.xlane.f32.xlu0 %v4899
        %v4901 = vpop.xlane.xlu0 %4900
        %v4902 = vmul.f32 %v4901, %v2512
        %v4903 = vadd.f32 %v4902, 1e-05
        %v4904 = vrsqrt.pop %v4903
        %v4905 = vmul.f32 %v4897, %v4904
        %v4907 = vlaneseq
        %v4908 = vshrl.u32 %v4907, 7
        %v4909 = vsub.s32 0, %v4908
        %v4910 = vrot.slane %v4890, %v4909
        %v4912 = vmul.f32 %v4905, %v4910
        %v4914 = vlaneseq
        %v4915 = vshrl.u32 %v4914, 7
        %v4916 = vsub.s32 0, %v4915
        %v4917 = vrot.slane %v4892, %v4916
        %v4919 = vadd.f32 %v4912, %v4917
        %4920 = vst.msk [vmem:[%s566] sm:$0xff] %vm618, %v4919
        %s4921 = sand.u32 %s423, 1
        %s4922 = scalar_lea.sflag [#allocation3], %s4921
        %s4923 = sand.u32 %s423, 1
        %s4924 = smul.addr %s4923, 8
        %s4925 = scalar_lea.vmem [#allocation2], %s4924
        // Predicated region
        $region93: #{transformer_encoder.1} parent=91 // pred_check
          %p4926 = pneg %p433
        $region94: #{transformer_encoder.1} parent=91 // pred_check_branch
          %4928 = sbr.rel (%p4926) target = $region96
        $region95: #{transformer_encoder.1} parent=91 // pred_region
          %s4930 = ssub.s32 128, 128
          %4931 = vsyncadd %s4922, %s4930
          %s4932 = smul.addr %s32, 128
          %s4933 = scalar_lea.hbm %s18, %s4932
          %s4935 = sshll.u32 %s4925, 4
          %s4936 = int_to_ptr.vmem [resolvable:$true] %s4935
          %4938 = dma.vmem_to_hbm [thread:$0]  %s4936, 128, %s4933, %s4922
        $region96: #{transformer_encoder.1} parent=91 // pred_fallthru
          _
      $region92: #{transformer_encoder.1} parent=5 // pred_fallthru
        _
      %p4939 = scmp.le.s32.totalorder 2, %s27
      // Predicated region
      $region97: #{transformer_encoder.1} parent=5 // pred_check
        %p4940 = pneg %p4939
      $region98: #{transformer_encoder.1} parent=5 // pred_check_branch
        %4942 = sbr.rel (%p4940) target = $region100
      $region99: #{transformer_encoder.1} parent=5 // pred_region
        %s4943 = ssub.s32 %s27, 2
        // Predicated region
        $region101: #{transformer_encoder.1} parent=99 // pred_check
          %p4944 = pneg %p439
        $region102: #{transformer_encoder.1} parent=99 // pred_check_branch
          %4946 = sbr.rel (%p4944) target = $region104
        $region103: #{transformer_encoder.1} parent=99 // pred_region
          %s4947 = sand.u32 %s424, 1
          %s4948 = scalar_lea.sflag [#allocation3], %s4947
          %s4949 = sand.u32 %s424, 1
          %s4950 = smul.addr %s4949, 8
          %s4951 = scalar_lea.vmem [#allocation2], %s4950
          %4952 = dma.done %s4948, 128
        $region104: #{transformer_encoder.1} parent=99 // pred_fallthru
          _
      $region100: #{transformer_encoder.1} parent=5 // pred_fallthru
        _
    $region6: #{transformer_encoder.1} parent=1 // loop_footer
      %s31 = sadd.s32 1, %s27
    $region7: #{transformer_encoder.1} parent=1 // loop_footer_branch
      %26 = sbr.rel target = $region3
    $region8: #{transformer_encoder.1} parent=1 // loop_exit
      _
    %4953 = vsyncpa [#allocation3], 1
    %s4954 = scalar_lea.sflag [#allocation3], 1
    %4955 = vsyncpa %s4954, 1

</llo_original>
